<compile_context>
chip_gen: v7x
topology: tpu7x:2x2x1
jax: 0.10.0
libtpu: 0.0.40
codegen_flags: <defaults>
</compile_context>

<pallas_src>
import functools

import jax
import jax.numpy as jnp
from jax.experimental import pallas as pl
from jax.experimental.pallas import tpu as pltpu


# --------------------------------------------------------------------------
# Fused backbone + neck + transfer_conv (all 1x1 convs), channels-major layout.
#   xt : (Cin=3, M)  pixels on the lane axis
#   out: (Cf,    M)  lane-dense store
# --------------------------------------------------------------------------
def _fused_cam_conv_kernel(xt_ref, wb_ref, bb_ref, wn_ref, bn_ref,
                           wt_ref, bt_ref, o_ref):
    xt = xt_ref[...]                                   # (3, tm)
    wb = wb_ref[...]                                   # (Cf, 3)
    # backbone 1x1 conv (Cin=3): three broadcast FMAs on the VPU, then ReLU
    y = bb_ref[...] + wb[:, 0:1] * xt[0:1, :]
    y = y + wb[:, 1:2] * xt[1:2, :]
    y = y + wb[:, 2:3] * xt[2:3, :]
    y = jnp.maximum(y, 0.0)
    # neck 1x1 conv (Cf -> Cf): MXU matmul, activation stays resident in VMEM
    y = jnp.dot(wn_ref[...], y, preferred_element_type=jnp.float32) + bn_ref[...]
    # transfer_conv 1x1 (Cf -> Cf)
    y = jnp.dot(wt_ref[...], y, preferred_element_type=jnp.float32) + bt_ref[...]
    o_ref[...] = y


def fused_camera_convs(xt, wb, bb, wn, bn, wt, bt, *, tile_m=512):
    """xt: (Cin, M) channels-major pixels; returns (Cf, M)."""
    Cin, M = xt.shape
    Cf = wb.shape[0]
    tm = tile_m if (M % tile_m == 0) else M
    assert M % tm == 0, "pixel count must tile evenly (synthetic sizes chosen so)"

    return pl.pallas_call(
        _fused_cam_conv_kernel,
        out_shape=jax.ShapeDtypeStruct((Cf, M), jnp.float32),
        grid_spec=pltpu.PrefetchScalarGridSpec(
            num_scalar_prefetch=0,
            grid=(M // tm,),
            in_specs=[
                pl.BlockSpec((Cin, tm), lambda i: (0, i)),
                pl.BlockSpec((Cf, Cin), lambda i: (0, 0)),
                pl.BlockSpec((Cf, 1), lambda i: (0, 0)),
                pl.BlockSpec((Cf, Cf), lambda i: (0, 0)),
                pl.BlockSpec((Cf, 1), lambda i: (0, 0)),
                pl.BlockSpec((Cf, Cf), lambda i: (0, 0)),
                pl.BlockSpec((Cf, 1), lambda i: (0, 0)),
            ],
            out_specs=pl.BlockSpec((Cf, tm), lambda i: (0, i)),
        ),
        compiler_params=pltpu.CompilerParams(dimension_semantics=("parallel",)),
    )(xt, wb, bb, wn, bn, wt, bt)


# --------------------------------------------------------------------------
# Single 1x1 conv (down_sample), channels-major layout.
# --------------------------------------------------------------------------
def _pw_conv_t_kernel(x_ref, w_ref, b_ref, o_ref):
    o_ref[...] = (jnp.dot(w_ref[...], x_ref[...],
                          preferred_element_type=jnp.float32) + b_ref[...])


def pointwise_conv_t(xt, w, b):
    """xt: (Cin, M) channels-major; w: (Cout, Cin); b: (Cout, 1) -> (Cout, M)."""
    Cin, M = xt.shape
    Cout = w.shape[0]
    return pl.pallas_call(
        _pw_conv_t_kernel,
        out_shape=jax.ShapeDtypeStruct((Cout, M), jnp.float32),
        grid_spec=pltpu.PrefetchScalarGridSpec(
            num_scalar_prefetch=0,
            grid=(1,),
            in_specs=[
                pl.BlockSpec((Cin, M), lambda i: (0, 0)),
                pl.BlockSpec((Cout, Cin), lambda i: (0, 0)),
                pl.BlockSpec((Cout, 1), lambda i: (0, 0)),
            ],
            out_specs=pl.BlockSpec((Cout, M), lambda i: (0, 0)),
        ),
        compiler_params=pltpu.CompilerParams(dimension_semantics=("arbitrary",)),
    )(xt, w, b)


# --------------------------------------------------------------------------
# Trilinear grid sample (align_corners=True), transposed + S-tiled.
# Per batch, per S-chunk: build the (s_tile, P) one-hot corner-weight tile
# (P on the lane axis) and accumulate  acc(C,P) += im(C,s_tile) @ w(s_tile,P).
# No explicit zero-pad: out-of-range corners get weight 0 (zero-padding
# semantics, identical to the torch reference for padded-with-zeros borders).
# --------------------------------------------------------------------------
def _trilinear_kernel(coord_ref, im_ref, o_ref, acc_ref, *, D, H, W, s_tile):
    k = pl.program_id(1)

    @pl.when(k == 0)
    def _():
        acc_ref[...] = jnp.zeros_like(acc_ref)

    coords = coord_ref[0]                              # (3, P), P on lanes
    xg = coords[0:1, :]
    yg = coords[1:2, :]
    zg = coords[2:3, :]

    # align_corners=True mapping from [-1, 1] to voxel coordinates
    x = (xg + 1.0) * 0.5 * (W - 1)
    y = (yg + 1.0) * 0.5 * (H - 1)
    z = (zg + 1.0) * 0.5 * (D - 1)

    x0f = jnp.floor(x); y0f = jnp.floor(y); z0f = jnp.floor(z)
    xd = x - x0f; yd = y - y0f; zd = z - z0f
    x0 = x0f.astype(jnp.int32); y0 = y0f.astype(jnp.int32); z0 = z0f.astype(jnp.int32)
    x1 = x0 + 1; y1 = y0 + 1; z1 = z0 + 1

    P = coords.shape[1]
    s_off = k * s_tile
    # S-chunk linear indices: S on sublanes, P on lanes
    sidx = jax.lax.broadcasted_iota(jnp.int32, (s_tile, P), 0) + s_off

    def corner(wtile, xi, yi, zi, wgt):
        valid = ((xi >= 0) & (xi < W) & (yi >= 0) & (yi < H)
                 & (zi >= 0) & (zi < D))
        wgt = jnp.where(valid, wgt, 0.0)               # (1, P)
        lin = zi * (H * W) + yi * W + xi               # (1, P)
        return wtile + jnp.where(sidx == lin, wgt, 0.0)

    wtile = jnp.zeros((s_tile, P), jnp.float32)
    wtile = corner(wtile, x0, y0, z0, (1 - xd) * (1 - yd) * (1 - zd))  # w000
    wtile = corner(wtile, x0, y0, z1, (1 - xd) * (1 - yd) * zd)        # w001
    wtile = corner(wtile, x0, y1, z0, (1 - xd) * yd * (1 - zd))        # w010
    wtile = corner(wtile, x0, y1, z1, (1 - xd) * yd * zd)              # w011
    wtile = corner(wtile, x1, y0, z0, xd * (1 - yd) * (1 - zd))        # w100
    wtile = corner(wtile, x1, y0, z1, xd * (1 - yd) * zd)              # w101
    wtile = corner(wtile, x1, y1, z0, xd * yd * (1 - zd))              # w110
    wtile = corner(wtile, x1, y1, z1, xd * yd * zd)                    # w111

    acc_ref[...] = acc_ref[...] + jnp.dot(
        im_ref[0], wtile, preferred_element_type=jnp.float32)

    @pl.when(k == pl.num_programs(1) - 1)
    def _():
        o_ref[0] = acc_ref[...]


def trilinear_grid_sample_t(im_bcs, coords_b3p, *, D, H, W, s_tile=128):
    """im_bcs: (B, C, S=D*H*W); coords: (B, 3, P) in [-1,1]; returns (B, C, P)."""
    B, C, S = im_bcs.shape
    P = coords_b3p.shape[2]
    assert S == D * H * W
    st = s_tile if (S % s_tile == 0) else S
    assert S % st == 0

    return pl.pallas_call(
        functools.partial(_trilinear_kernel, D=D, H=H, W=W, s_tile=st),
        out_shape=jax.ShapeDtypeStruct((B, C, P), jnp.float32),
        grid_spec=pltpu.PrefetchScalarGridSpec(
            num_scalar_prefetch=0,
            grid=(B, S // st),
            in_specs=[
                pl.BlockSpec((1, 3, P), lambda b, k: (b, 0, 0)),
                pl.BlockSpec((1, C, st), lambda b, k: (b, 0, k)),
            ],
            out_specs=pl.BlockSpec((1, C, P), lambda b, k: (b, 0, 0)),
            scratch_shapes=[pltpu.VMEM((C, P), jnp.float32)],
        ),
        compiler_params=pltpu.CompilerParams(
            dimension_semantics=("parallel", "arbitrary")),
    )(coords_b3p, im_bcs)


# --------------------------------------------------------------------------
# Full SubclassCameraModule.forward
# --------------------------------------------------------------------------
def subclass_camera_forward(params, x, img_ref_points, *, volume_size):
    B, N, Cin, H, W = x.shape
    Cf = params["backbone_w"].shape[0]
    h_v, w_v, z_v = volume_size

    # Single NCHW -> channels-major flatten for the whole fused conv chain:
    # (B, N, Cin, H, W) -> (Cin, B*N*H*W)
    M = B * N * H * W
    xt = jnp.transpose(x.reshape(B * N, Cin, H * W), (1, 0, 2)).reshape(Cin, M)

    # backbone (+ReLU) + neck + transfer_conv fused in one pallas_call
    feat_t = fused_camera_convs(
        xt,
        params["backbone_w"], params["backbone_b"].reshape(Cf, 1),
        params["neck_w"], params["neck_b"].reshape(Cf, 1),
        params["transfer_w"], params["transfer_b"].reshape(Cf, 1),
    )                                                   # (Cf, B*N*H*W)

    # 'B C N H W' volume flattened per batch: (B, Cf, S) with S = N*H*W, D = N
    S = N * H * W
    vol = jnp.transpose(feat_t.reshape(Cf, B, S), (1, 0, 2))        # (B, Cf, S)

    # Lane-major sample coordinates: (B, P, 1, 1, 3) -> (B, 3, P)
    P = img_ref_points.shape[1]
    coords = jnp.transpose(img_ref_points.reshape(B, P, 3), (0, 2, 1))

    # trilinear sampling (align_corners=True) -> (B, Cf, P)
    sf = trilinear_grid_sample_t(vol, coords, D=N, H=H, W=W)

    # 'b c (z h w) -> (z c) (b w h)' for the channels-major down_sample conv
    feats5 = sf.reshape(B, Cf, z_v, h_v, w_v)
    ds_in = jnp.transpose(feats5, (2, 1, 0, 4, 3)).reshape(z_v * Cf, B * w_v * h_v)

    ds_out = pointwise_conv_t(ds_in, params["down_w"],
                              params["down_b"].reshape(z_v * Cf, 1))

    # back to 'bs (z c) w h'
    out = jnp.transpose(ds_out.reshape(z_v * Cf, B, w_v, h_v), (1, 0, 2, 3))
    return out


if __name__ == "__main__":
    # Small shapes consistent with the forward pass.
    B, N, Cin, Himg, Wimg = 2, 2, 3, 16, 16
    Cfeat = 32
    volume_size = (8, 8, 2)  # (h, w, z)
    P = volume_size[0] * volume_size[1] * volume_size[2]  # 128

    key = jax.random.PRNGKey(0)
    ks = jax.random.split(key, 10)

    x = jax.random.normal(ks[0], (B, N, Cin, Himg, Wimg), jnp.float32)
    img_ref_points = jax.random.uniform(
        ks[1], (B, P, 1, 1, 3), jnp.float32, minval=-1.0, maxval=1.0
    )

    params = {
        "backbone_w": 0.1 * jax.random.normal(ks[2], (Cfeat, Cin), jnp.float32),
        "backbone_b": 0.1 * jax.random.normal(ks[3], (Cfeat,), jnp.float32),
        "neck_w": 0.1 * jax.random.normal(ks[4], (Cfeat, Cfeat), jnp.float32),
        "neck_b": 0.1 * jax.random.normal(ks[5], (Cfeat,), jnp.float32),
        "transfer_w": 0.1 * jax.random.normal(ks[6], (Cfeat, Cfeat), jnp.float32),
        "transfer_b": 0.1 * jax.random.normal(ks[7], (Cfeat,), jnp.float32),
        "down_w": 0.1 * jax.random.normal(
            ks[8], (volume_size[2] * Cfeat, volume_size[2] * Cfeat), jnp.float32
        ),
        "down_b": 0.1 * jax.random.normal(
            ks[9], (volume_size[2] * Cfeat,), jnp.float32
        ),
    }

    fwd = jax.jit(functools.partial(subclass_camera_forward, volume_size=volume_size))
    out = fwd(params, x, img_ref_points)
    jax.block_until_ready(out)
    assert out.shape == (B, volume_size[2] * Cfeat, volume_size[1], volume_size[0])
    print("KERNEL_OK")
</pallas_src>

<mosaic_0001>
module attributes {stable_mosaic.version = 11 : i64} {
  func.func @_fused_cam_conv_kernel(%arg0: i32, %arg1: memref<3x512xf32, #tpu.memory_space<vmem>>, %arg2: memref<32x3xf32, #tpu.memory_space<vmem>>, %arg3: memref<32x1xf32, #tpu.memory_space<vmem>>, %arg4: memref<32x32xf32, #tpu.memory_space<vmem>>, %arg5: memref<32x1xf32, #tpu.memory_space<vmem>>, %arg6: memref<32x32xf32, #tpu.memory_space<vmem>>, %arg7: memref<32x1xf32, #tpu.memory_space<vmem>>, %arg8: memref<32x512xf32, #tpu.memory_space<vmem>>) attributes {dimension_semantics = [#tpu.dimension_semantics<parallel>], iteration_bounds = array<i64: 2>, scalar_prefetch = 0 : i64, scratch_operands = 0 : i64, tpu.core_type = #tpu.core_type<tc>, window_params = [{transform_indices = @transform_0, window_bounds = array<i64: 3, 512>}, {pipeline_mode = #tpu.pipeline_mode<synchronous>, transform_indices = @transform_1, window_bounds = array<i64: 32, 3>}, {pipeline_mode = #tpu.pipeline_mode<synchronous>, transform_indices = @transform_2, window_bounds = array<i64: 32, 1>}, {pipeline_mode = #tpu.pipeline_mode<synchronous>, transform_indices = @transform_3, window_bounds = array<i64: 32, 32>}, {pipeline_mode = #tpu.pipeline_mode<synchronous>, transform_indices = @transform_4, window_bounds = array<i64: 32, 1>}, {pipeline_mode = #tpu.pipeline_mode<synchronous>, transform_indices = @transform_5, window_bounds = array<i64: 32, 32>}, {pipeline_mode = #tpu.pipeline_mode<synchronous>, transform_indices = @transform_6, window_bounds = array<i64: 32, 1>}, {transform_indices = @transform_7, window_bounds = array<i64: 32, 512>}]} {
    %c0 = arith.constant 0 : index
    %c0_0 = arith.constant 0 : index
    %0 = vector.load %arg1[%c0, %c0_0] : memref<3x512xf32, #tpu.memory_space<vmem>>, vector<3x512xf32>
    %c0_1 = arith.constant 0 : index
    %c0_2 = arith.constant 0 : index
    %1 = vector.load %arg2[%c0_1, %c0_2] : memref<32x3xf32, #tpu.memory_space<vmem>>, vector<32x3xf32>
    %c0_3 = arith.constant 0 : index
    %c0_4 = arith.constant 0 : index
    %2 = vector.load %arg3[%c0_3, %c0_4] : memref<32x1xf32, #tpu.memory_space<vmem>>, vector<32x1xf32>
    %3 = vector.extract_strided_slice %1 {offsets = [0, 0], sizes = [32, 1], strides = [1, 1]} : vector<32x3xf32> to vector<32x1xf32>
    %4 = vector.extract_strided_slice %0 {offsets = [0, 0], sizes = [1, 512], strides = [1, 1]} : vector<3x512xf32> to vector<1x512xf32>
    %5 = vector.broadcast %3 : vector<32x1xf32> to vector<32x512xf32>
    %6 = vector.broadcast %4 : vector<1x512xf32> to vector<32x512xf32>
    %7 = arith.mulf %5, %6 : vector<32x512xf32>
    %8 = vector.broadcast %2 : vector<32x1xf32> to vector<32x512xf32>
    %9 = arith.addf %8, %7 : vector<32x512xf32>
    %10 = vector.extract_strided_slice %1 {offsets = [0, 1], sizes = [32, 1], strides = [1, 1]} : vector<32x3xf32> to vector<32x1xf32>
    %11 = vector.extract_strided_slice %0 {offsets = [1, 0], sizes = [1, 512], strides = [1, 1]} : vector<3x512xf32> to vector<1x512xf32>
    %12 = vector.broadcast %10 : vector<32x1xf32> to vector<32x512xf32>
    %13 = vector.broadcast %11 : vector<1x512xf32> to vector<32x512xf32>
    %14 = arith.mulf %12, %13 : vector<32x512xf32>
    %15 = arith.addf %9, %14 : vector<32x512xf32>
    %16 = vector.extract_strided_slice %1 {offsets = [0, 2], sizes = [32, 1], strides = [1, 1]} : vector<32x3xf32> to vector<32x1xf32>
    %17 = vector.extract_strided_slice %0 {offsets = [2, 0], sizes = [1, 512], strides = [1, 1]} : vector<3x512xf32> to vector<1x512xf32>
    %18 = vector.broadcast %16 : vector<32x1xf32> to vector<32x512xf32>
    %19 = vector.broadcast %17 : vector<1x512xf32> to vector<32x512xf32>
    %20 = arith.mulf %18, %19 : vector<32x512xf32>
    %21 = arith.addf %15, %20 : vector<32x512xf32>
    %cst = arith.constant 0.000000e+00 : f32
    %22 = vector.broadcast %cst : f32 to vector<32x512xf32>
    %23 = arith.maximumf %21, %22 : vector<32x512xf32>
    %c0_5 = arith.constant 0 : index
    %c0_6 = arith.constant 0 : index
    %24 = vector.load %arg4[%c0_5, %c0_6] : memref<32x32xf32, #tpu.memory_space<vmem>>, vector<32x32xf32>
    %cst_7 = arith.constant dense<0.000000e+00> : vector<32x512xf32>
    %25 = tpu.matmul %24, %23, %cst_7 {dimension_numbers = #tpu.dot_dimension_numbers<[1], [0], [0], [1], [0, 0, 1, 1], [], []>} : vector<32x32xf32>, vector<32x512xf32>, vector<32x512xf32> -> vector<32x512xf32>
    %c0_8 = arith.constant 0 : index
    %c0_9 = arith.constant 0 : index
    %26 = vector.load %arg5[%c0_8, %c0_9] : memref<32x1xf32, #tpu.memory_space<vmem>>, vector<32x1xf32>
    %27 = vector.broadcast %26 : vector<32x1xf32> to vector<32x512xf32>
    %28 = arith.addf %25, %27 : vector<32x512xf32>
    %c0_10 = arith.constant 0 : index
    %c0_11 = arith.constant 0 : index
    %29 = vector.load %arg6[%c0_10, %c0_11] : memref<32x32xf32, #tpu.memory_space<vmem>>, vector<32x32xf32>
    %cst_12 = arith.constant dense<0.000000e+00> : vector<32x512xf32>
    %30 = tpu.matmul %29, %28, %cst_12 {dimension_numbers = #tpu.dot_dimension_numbers<[1], [0], [0], [1], [0, 0, 1, 1], [], []>} : vector<32x32xf32>, vector<32x512xf32>, vector<32x512xf32> -> vector<32x512xf32>
    %c0_13 = arith.constant 0 : index
    %c0_14 = arith.constant 0 : index
    %31 = vector.load %arg7[%c0_13, %c0_14] : memref<32x1xf32, #tpu.memory_space<vmem>>, vector<32x1xf32>
    %32 = vector.broadcast %31 : vector<32x1xf32> to vector<32x512xf32>
    %33 = arith.addf %30, %32 : vector<32x512xf32>
    %c0_15 = arith.constant 0 : index
    %c0_16 = arith.constant 0 : index
    %34 = vector.load %arg8[%c0_15, %c0_16] : memref<32x512xf32, #tpu.memory_space<vmem>>, vector<32x512xf32>
    tpu.vector_store %arg8[%c0_15, %c0_16], %33 {strides = array<i32>} : memref<32x512xf32, #tpu.memory_space<vmem>>, vector<32x512xf32>,
    return
  }
  func.func @transform_0(%arg0: i32) -> (i32, i32) {
    %c0_i32 = arith.constant 0 : i32
    %c0_i32_0 = arith.constant 0 : i32
    return %c0_i32, %arg0 : i32, i32
  }
  func.func @transform_1(%arg0: i32) -> (i32, i32) {
    %c0_i32 = arith.constant 0 : i32
    %c0_i32_0 = arith.constant 0 : i32
    %c0_i32_1 = arith.constant 0 : i32
    return %c0_i32, %c0_i32_0 : i32, i32
  }
  func.func @transform_2(%arg0: i32) -> (i32, i32) {
    %c0_i32 = arith.constant 0 : i32
    %c0_i32_0 = arith.constant 0 : i32
    %c0_i32_1 = arith.constant 0 : i32
    return %c0_i32, %c0_i32_0 : i32, i32
  }
  func.func @transform_3(%arg0: i32) -> (i32, i32) {
    %c0_i32 = arith.constant 0 : i32
    %c0_i32_0 = arith.constant 0 : i32
    %c0_i32_1 = arith.constant 0 : i32
    return %c0_i32, %c0_i32_0 : i32, i32
  }
  func.func @transform_4(%arg0: i32) -> (i32, i32) {
    %c0_i32 = arith.constant 0 : i32
    %c0_i32_0 = arith.constant 0 : i32
    %c0_i32_1 = arith.constant 0 : i32
    return %c0_i32, %c0_i32_0 : i32, i32
  }
  func.func @transform_5(%arg0: i32) -> (i32, i32) {
    %c0_i32 = arith.constant 0 : i32
    %c0_i32_0 = arith.constant 0 : i32
    %c0_i32_1 = arith.constant 0 : i32
    return %c0_i32, %c0_i32_0 : i32, i32
  }
  func.func @transform_6(%arg0: i32) -> (i32, i32) {
    %c0_i32 = arith.constant 0 : i32
    %c0_i32_0 = arith.constant 0 : i32
    %c0_i32_1 = arith.constant 0 : i32
    return %c0_i32, %c0_i32_0 : i32, i32
  }
  func.func @transform_7(%arg0: i32) -> (i32, i32) {
    %c0_i32 = arith.constant 0 : i32
    %c0_i32_0 = arith.constant 0 : i32
    return %c0_i32, %arg0 : i32, i32
  }
}

module attributes {stable_mosaic.version = 11 : i64} {
  func.func @_trilinear_kernel(%arg0: i32, %arg1: i32, %arg2: memref<1x3x128xf32, #tpu.memory_space<vmem>>, %arg3: memref<1x32x128xf32, #tpu.memory_space<vmem>>, %arg4: memref<1x32x128xf32, #tpu.memory_space<vmem>>, %arg5: memref<32x128xf32, #tpu.memory_space<vmem>>) attributes {dimension_semantics = [#tpu.dimension_semantics<parallel>, #tpu.dimension_semantics<arbitrary>], iteration_bounds = array<i64: 2, 4>, scalar_prefetch = 0 : i64, scratch_operands = 1 : i64, tpu.core_type = #tpu.core_type<tc>, window_params = [{transform_indices = @transform_0, window_bounds = array<i64: 1, 3, 128>}, {transform_indices = @transform_1, window_bounds = array<i64: 1, 32, 128>}, {transform_indices = @transform_2, window_bounds = array<i64: 1, 32, 128>}]} {
    %c0_i32 = arith.constant 0 : i32
    %0 = arith.cmpi eq, %arg1, %c0_i32 : i32
    %1 = arith.extui %0 : i1 to i32
    %c0_i32_0 = arith.constant 0 : i32
    %2 = arith.cmpi ne, %1, %c0_i32_0 : i32
    scf.if %2 {
      %cst_112 = arith.constant 0.000000e+00 : f32
      %351 = vector.broadcast %cst_112 : f32 to vector<32x128xf32>
      %c0_113 = arith.constant 0 : index
      %c0_114 = arith.constant 0 : index
      %352 = vector.load %arg5[%c0_113, %c0_114] : memref<32x128xf32, #tpu.memory_space<vmem>>, vector<32x128xf32>
      tpu.vector_store %arg5[%c0_113, %c0_114], %351 {strides = array<i32>} : memref<32x128xf32, #tpu.memory_space<vmem>>, vector<32x128xf32>,
    } else {
    }
    %c0 = arith.constant 0 : index
    %c0_1 = arith.constant 0 : index
    %c0_2 = arith.constant 0 : index
    %3 = vector.load %arg2[%c0, %c0_1, %c0_2] : memref<1x3x128xf32, #tpu.memory_space<vmem>>, vector<1x3x128xf32>
    %4 = vector.shape_cast %3 : vector<1x3x128xf32> to vector<3x128xf32>
    %5 = vector.extract_strided_slice %4 {offsets = [0, 0], sizes = [1, 128], strides = [1, 1]} : vector<3x128xf32> to vector<1x128xf32>
    %6 = vector.extract_strided_slice %4 {offsets = [1, 0], sizes = [1, 128], strides = [1, 1]} : vector<3x128xf32> to vector<1x128xf32>
    %7 = vector.extract_strided_slice %4 {offsets = [2, 0], sizes = [1, 128], strides = [1, 1]} : vector<3x128xf32> to vector<1x128xf32>
    %cst = arith.constant 1.000000e+00 : f32
    %8 = vector.broadcast %cst : f32 to vector<1x128xf32>
    %9 = arith.addf %5, %8 : vector<1x128xf32>
    %cst_3 = arith.constant 5.000000e-01 : f32
    %10 = vector.broadcast %cst_3 : f32 to vector<1x128xf32>
    %11 = arith.mulf %9, %10 : vector<1x128xf32>
    %cst_4 = arith.constant 1.500000e+01 : f32
    %12 = vector.broadcast %cst_4 : f32 to vector<1x128xf32>
    %13 = arith.mulf %11, %12 : vector<1x128xf32>
    %cst_5 = arith.constant 1.000000e+00 : f32
    %14 = vector.broadcast %cst_5 : f32 to vector<1x128xf32>
    %15 = arith.addf %6, %14 : vector<1x128xf32>
    %cst_6 = arith.constant 5.000000e-01 : f32
    %16 = vector.broadcast %cst_6 : f32 to vector<1x128xf32>
    %17 = arith.mulf %15, %16 : vector<1x128xf32>
    %cst_7 = arith.constant 1.500000e+01 : f32
    %18 = vector.broadcast %cst_7 : f32 to vector<1x128xf32>
    %19 = arith.mulf %17, %18 : vector<1x128xf32>
    %cst_8 = arith.constant 1.000000e+00 : f32
    %20 = vector.broadcast %cst_8 : f32 to vector<1x128xf32>
    %21 = arith.addf %7, %20 : vector<1x128xf32>
    %cst_9 = arith.constant 5.000000e-01 : f32
    %22 = vector.broadcast %cst_9 : f32 to vector<1x128xf32>
    %23 = arith.mulf %21, %22 : vector<1x128xf32>
    %cst_10 = arith.constant 1.000000e+00 : f32
    %24 = vector.broadcast %cst_10 : f32 to vector<1x128xf32>
    %25 = arith.mulf %23, %24 : vector<1x128xf32>
    %26 = math.floor %13 : vector<1x128xf32>
    %27 = math.floor %19 : vector<1x128xf32>
    %28 = math.floor %25 : vector<1x128xf32>
    %29 = arith.subf %13, %26 : vector<1x128xf32>
    %30 = arith.subf %19, %27 : vector<1x128xf32>
    %31 = arith.subf %25, %28 : vector<1x128xf32>
    %32 = arith.fptosi %26 : vector<1x128xf32> to vector<1x128xi32>
    %33 = arith.fptosi %27 : vector<1x128xf32> to vector<1x128xi32>
    %34 = arith.fptosi %28 : vector<1x128xf32> to vector<1x128xi32>
    %c1_i32 = arith.constant 1 : i32
    %35 = vector.broadcast %c1_i32 : i32 to vector<1x128xi32>
    %36 = arith.addi %32, %35 : vector<1x128xi32>
    %c1_i32_11 = arith.constant 1 : i32
    %37 = vector.broadcast %c1_i32_11 : i32 to vector<1x128xi32>
    %38 = arith.addi %33, %37 : vector<1x128xi32>
    %c1_i32_12 = arith.constant 1 : i32
    %39 = vector.broadcast %c1_i32_12 : i32 to vector<1x128xi32>
    %40 = arith.addi %34, %39 : vector<1x128xi32>
    %c128_i32 = arith.constant 128 : i32
    %41 = arith.muli %arg1, %c128_i32 : i32
    %42 = tpu.iota {dimensions = array<i32: 0>} : vector<128x128xi32>
    %43 = vector.broadcast %41 : i32 to vector<128x128xi32>
    %44 = arith.addi %42, %43 : vector<128x128xi32>
    %cst_13 = arith.constant 0.000000e+00 : f32
    %45 = vector.broadcast %cst_13 : f32 to vector<128x128xf32>
    %cst_14 = arith.constant 1.000000e+00 : f32
    %46 = vector.broadcast %cst_14 : f32 to vector<1x128xf32>
    %47 = arith.subf %46, %29 : vector<1x128xf32>
    %cst_15 = arith.constant 1.000000e+00 : f32
    %48 = vector.broadcast %cst_15 : f32 to vector<1x128xf32>
    %49 = arith.subf %48, %30 : vector<1x128xf32>
    %50 = arith.mulf %47, %49 : vector<1x128xf32>
    %cst_16 = arith.constant 1.000000e+00 : f32
    %51 = vector.broadcast %cst_16 : f32 to vector<1x128xf32>
    %52 = arith.subf %51, %31 : vector<1x128xf32>
    %53 = arith.mulf %50, %52 : vector<1x128xf32>
    %c0_i32_17 = arith.constant 0 : i32
    %54 = vector.broadcast %c0_i32_17 : i32 to vector<1x128xi32>
    %55 = arith.cmpi sge, %32, %54 : vector<1x128xi32>
    %c16_i32 = arith.constant 16 : i32
    %56 = vector.broadcast %c16_i32 : i32 to vector<1x128xi32>
    %57 = arith.cmpi slt, %32, %56 : vector<1x128xi32>
    %58 = arith.andi %55, %57 : vector<1x128xi1>
    %c0_i32_18 = arith.constant 0 : i32
    %59 = vector.broadcast %c0_i32_18 : i32 to vector<1x128xi32>
    %60 = arith.cmpi sge, %33, %59 : vector<1x128xi32>
    %61 = arith.andi %58, %60 : vector<1x128xi1>
    %c16_i32_19 = arith.constant 16 : i32
    %62 = vector.broadcast %c16_i32_19 : i32 to vector<1x128xi32>
    %63 = arith.cmpi slt, %33, %62 : vector<1x128xi32>
    %64 = arith.andi %61, %63 : vector<1x128xi1>
    %c0_i32_20 = arith.constant 0 : i32
    %65 = vector.broadcast %c0_i32_20 : i32 to vector<1x128xi32>
    %66 = arith.cmpi sge, %34, %65 : vector<1x128xi32>
    %67 = arith.andi %64, %66 : vector<1x128xi1>
    %c2_i32 = arith.constant 2 : i32
    %68 = vector.broadcast %c2_i32 : i32 to vector<1x128xi32>
    %69 = arith.cmpi slt, %34, %68 : vector<1x128xi32>
    %70 = arith.andi %67, %69 : vector<1x128xi1>
    %cst_21 = arith.constant 0.000000e+00 : f32
    %71 = vector.broadcast %cst_21 : f32 to vector<1x128xf32>
    %72 = arith.select %70, %53, %71 : vector<1x128xi1>, vector<1x128xf32>
    %c256_i32 = arith.constant 256 : i32
    %73 = vector.broadcast %c256_i32 : i32 to vector<1x128xi32>
    %74 = arith.muli %34, %73 : vector<1x128xi32>
    %c16_i32_22 = arith.constant 16 : i32
    %75 = vector.broadcast %c16_i32_22 : i32 to vector<1x128xi32>
    %76 = arith.muli %33, %75 : vector<1x128xi32>
    %77 = arith.addi %74, %76 : vector<1x128xi32>
    %78 = arith.addi %77, %32 : vector<1x128xi32>
    %79 = vector.broadcast %78 : vector<1x128xi32> to vector<128x128xi32>
    %80 = arith.cmpi eq, %44, %79 : vector<128x128xi32>
    %cst_23 = arith.constant 0.000000e+00 : f32
    %81 = vector.shape_cast %72 : vector<1x128xf32> to vector<1x128xf32>
    %82 = vector.broadcast %81 : vector<1x128xf32> to vector<128x128xf32>
    %83 = vector.broadcast %cst_23 : f32 to vector<128x128xf32>
    %84 = arith.select %80, %82, %83 : vector<128x128xi1>, vector<128x128xf32>
    %85 = arith.addf %45, %84 : vector<128x128xf32>
    %cst_24 = arith.constant 1.000000e+00 : f32
    %86 = vector.broadcast %cst_24 : f32 to vector<1x128xf32>
    %87 = arith.subf %86, %29 : vector<1x128xf32>
    %cst_25 = arith.constant 1.000000e+00 : f32
    %88 = vector.broadcast %cst_25 : f32 to vector<1x128xf32>
    %89 = arith.subf %88, %30 : vector<1x128xf32>
    %90 = arith.mulf %87, %89 : vector<1x128xf32>
    %91 = arith.mulf %90, %31 : vector<1x128xf32>
    %c0_i32_26 = arith.constant 0 : i32
    %92 = vector.broadcast %c0_i32_26 : i32 to vector<1x128xi32>
    %93 = arith.cmpi sge, %32, %92 : vector<1x128xi32>
    %c16_i32_27 = arith.constant 16 : i32
    %94 = vector.broadcast %c16_i32_27 : i32 to vector<1x128xi32>
    %95 = arith.cmpi slt, %32, %94 : vector<1x128xi32>
    %96 = arith.andi %93, %95 : vector<1x128xi1>
    %c0_i32_28 = arith.constant 0 : i32
    %97 = vector.broadcast %c0_i32_28 : i32 to vector<1x128xi32>
    %98 = arith.cmpi sge, %33, %97 : vector<1x128xi32>
    %99 = arith.andi %96, %98 : vector<1x128xi1>
    %c16_i32_29 = arith.constant 16 : i32
    %100 = vector.broadcast %c16_i32_29 : i32 to vector<1x128xi32>
    %101 = arith.cmpi slt, %33, %100 : vector<1x128xi32>
    %102 = arith.andi %99, %101 : vector<1x128xi1>
    %c0_i32_30 = arith.constant 0 : i32
    %103 = vector.broadcast %c0_i32_30 : i32 to vector<1x128xi32>
    %104 = arith.cmpi sge, %40, %103 : vector<1x128xi32>
    %105 = arith.andi %102, %104 : vector<1x128xi1>
    %c2_i32_31 = arith.constant 2 : i32
    %106 = vector.broadcast %c2_i32_31 : i32 to vector<1x128xi32>
    %107 = arith.cmpi slt, %40, %106 : vector<1x128xi32>
    %108 = arith.andi %105, %107 : vector<1x128xi1>
    %cst_32 = arith.constant 0.000000e+00 : f32
    %109 = vector.broadcast %cst_32 : f32 to vector<1x128xf32>
    %110 = arith.select %108, %91, %109 : vector<1x128xi1>, vector<1x128xf32>
    %c256_i32_33 = arith.constant 256 : i32
    %111 = vector.broadcast %c256_i32_33 : i32 to vector<1x128xi32>
    %112 = arith.muli %40, %111 : vector<1x128xi32>
    %c16_i32_34 = arith.constant 16 : i32
    %113 = vector.broadcast %c16_i32_34 : i32 to vector<1x128xi32>
    %114 = arith.muli %33, %113 : vector<1x128xi32>
    %115 = arith.addi %112, %114 : vector<1x128xi32>
    %116 = arith.addi %115, %32 : vector<1x128xi32>
    %117 = vector.broadcast %116 : vector<1x128xi32> to vector<128x128xi32>
    %118 = arith.cmpi eq, %44, %117 : vector<128x128xi32>
    %cst_35 = arith.constant 0.000000e+00 : f32
    %119 = vector.shape_cast %110 : vector<1x128xf32> to vector<1x128xf32>
    %120 = vector.broadcast %119 : vector<1x128xf32> to vector<128x128xf32>
    %121 = vector.broadcast %cst_35 : f32 to vector<128x128xf32>
    %122 = arith.select %118, %120, %121 : vector<128x128xi1>, vector<128x128xf32>
    %123 = arith.addf %85, %122 : vector<128x128xf32>
    %cst_36 = arith.constant 1.000000e+00 : f32
    %124 = vector.broadcast %cst_36 : f32 to vector<1x128xf32>
    %125 = arith.subf %124, %29 : vector<1x128xf32>
    %126 = arith.mulf %125, %30 : vector<1x128xf32>
    %cst_37 = arith.constant 1.000000e+00 : f32
    %127 = vector.broadcast %cst_37 : f32 to vector<1x128xf32>
    %128 = arith.subf %127, %31 : vector<1x128xf32>
    %129 = arith.mulf %126, %128 : vector<1x128xf32>
    %c0_i32_38 = arith.constant 0 : i32
    %130 = vector.broadcast %c0_i32_38 : i32 to vector<1x128xi32>
    %131 = arith.cmpi sge, %32, %130 : vector<1x128xi32>
    %c16_i32_39 = arith.constant 16 : i32
    %132 = vector.broadcast %c16_i32_39 : i32 to vector<1x128xi32>
    %133 = arith.cmpi slt, %32, %132 : vector<1x128xi32>
    %134 = arith.andi %131, %133 : vector<1x128xi1>
    %c0_i32_40 = arith.constant 0 : i32
    %135 = vector.broadcast %c0_i32_40 : i32 to vector<1x128xi32>
    %136 = arith.cmpi sge, %38, %135 : vector<1x128xi32>
    %137 = arith.andi %134, %136 : vector<1x128xi1>
    %c16_i32_41 = arith.constant 16 : i32
    %138 = vector.broadcast %c16_i32_41 : i32 to vector<1x128xi32>
    %139 = arith.cmpi slt, %38, %138 : vector<1x128xi32>
    %140 = arith.andi %137, %139 : vector<1x128xi1>
    %c0_i32_42 = arith.constant 0 : i32
    %141 = vector.broadcast %c0_i32_42 : i32 to vector<1x128xi32>
    %142 = arith.cmpi sge, %34, %141 : vector<1x128xi32>
    %143 = arith.andi %140, %142 : vector<1x128xi1>
    %c2_i32_43 = arith.constant 2 : i32
    %144 = vector.broadcast %c2_i32_43 : i32 to vector<1x128xi32>
    %145 = arith.cmpi slt, %34, %144 : vector<1x128xi32>
    %146 = arith.andi %143, %145 : vector<1x128xi1>
    %cst_44 = arith.constant 0.000000e+00 : f32
    %147 = vector.broadcast %cst_44 : f32 to vector<1x128xf32>
    %148 = arith.select %146, %129, %147 : vector<1x128xi1>, vector<1x128xf32>
    %c256_i32_45 = arith.constant 256 : i32
    %149 = vector.broadcast %c256_i32_45 : i32 to vector<1x128xi32>
    %150 = arith.muli %34, %149 : vector<1x128xi32>
    %c16_i32_46 = arith.constant 16 : i32
    %151 = vector.broadcast %c16_i32_46 : i32 to vector<1x128xi32>
    %152 = arith.muli %38, %151 : vector<1x128xi32>
    %153 = arith.addi %150, %152 : vector<1x128xi32>
    %154 = arith.addi %153, %32 : vector<1x128xi32>
    %155 = vector.broadcast %154 : vector<1x128xi32> to vector<128x128xi32>
    %156 = arith.cmpi eq, %44, %155 : vector<128x128xi32>
    %cst_47 = arith.constant 0.000000e+00 : f32
    %157 = vector.shape_cast %148 : vector<1x128xf32> to vector<1x128xf32>
    %158 = vector.broadcast %157 : vector<1x128xf32> to vector<128x128xf32>
    %159 = vector.broadcast %cst_47 : f32 to vector<128x128xf32>
    %160 = arith.select %156, %158, %159 : vector<128x128xi1>, vector<128x128xf32>
    %161 = arith.addf %123, %160 : vector<128x128xf32>
    %cst_48 = arith.constant 1.000000e+00 : f32
    %162 = vector.broadcast %cst_48 : f32 to vector<1x128xf32>
    %163 = arith.subf %162, %29 : vector<1x128xf32>
    %164 = arith.mulf %163, %30 : vector<1x128xf32>
    %165 = arith.mulf %164, %31 : vector<1x128xf32>
    %c0_i32_49 = arith.constant 0 : i32
    %166 = vector.broadcast %c0_i32_49 : i32 to vector<1x128xi32>
    %167 = arith.cmpi sge, %32, %166 : vector<1x128xi32>
    %c16_i32_50 = arith.constant 16 : i32
    %168 = vector.broadcast %c16_i32_50 : i32 to vector<1x128xi32>
    %169 = arith.cmpi slt, %32, %168 : vector<1x128xi32>
    %170 = arith.andi %167, %169 : vector<1x128xi1>
    %c0_i32_51 = arith.constant 0 : i32
    %171 = vector.broadcast %c0_i32_51 : i32 to vector<1x128xi32>
    %172 = arith.cmpi sge, %38, %171 : vector<1x128xi32>
    %173 = arith.andi %170, %172 : vector<1x128xi1>
    %c16_i32_52 = arith.constant 16 : i32
    %174 = vector.broadcast %c16_i32_52 : i32 to vector<1x128xi32>
    %175 = arith.cmpi slt, %38, %174 : vector<1x128xi32>
    %176 = arith.andi %173, %175 : vector<1x128xi1>
    %c0_i32_53 = arith.constant 0 : i32
    %177 = vector.broadcast %c0_i32_53 : i32 to vector<1x128xi32>
    %178 = arith.cmpi sge, %40, %177 : vector<1x128xi32>
    %179 = arith.andi %176, %178 : vector<1x128xi1>
    %c2_i32_54 = arith.constant 2 : i32
    %180 = vector.broadcast %c2_i32_54 : i32 to vector<1x128xi32>
    %181 = arith.cmpi slt, %40, %180 : vector<1x128xi32>
    %182 = arith.andi %179, %181 : vector<1x128xi1>
    %cst_55 = arith.constant 0.000000e+00 : f32
    %183 = vector.broadcast %cst_55 : f32 to vector<1x128xf32>
    %184 = arith.select %182, %165, %183 : vector<1x128xi1>, vector<1x128xf32>
    %c256_i32_56 = arith.constant 256 : i32
    %185 = vector.broadcast %c256_i32_56 : i32 to vector<1x128xi32>
    %186 = arith.muli %40, %185 : vector<1x128xi32>
    %c16_i32_57 = arith.constant 16 : i32
    %187 = vector.broadcast %c16_i32_57 : i32 to vector<1x128xi32>
    %188 = arith.muli %38, %187 : vector<1x128xi32>
    %189 = arith.addi %186, %188 : vector<1x128xi32>
    %190 = arith.addi %189, %32 : vector<1x128xi32>
    %191 = vector.broadcast %190 : vector<1x128xi32> to vector<128x128xi32>
    %192 = arith.cmpi eq, %44, %191 : vector<128x128xi32>
    %cst_58 = arith.constant 0.000000e+00 : f32
    %193 = vector.shape_cast %184 : vector<1x128xf32> to vector<1x128xf32>
    %194 = vector.broadcast %193 : vector<1x128xf32> to vector<128x128xf32>
    %195 = vector.broadcast %cst_58 : f32 to vector<128x128xf32>
    %196 = arith.select %192, %194, %195 : vector<128x128xi1>, vector<128x128xf32>
    %197 = arith.addf %161, %196 : vector<128x128xf32>
    %cst_59 = arith.constant 1.000000e+00 : f32
    %198 = vector.broadcast %cst_59 : f32 to vector<1x128xf32>
    %199 = arith.subf %198, %30 : vector<1x128xf32>
    %200 = arith.mulf %29, %199 : vector<1x128xf32>
    %cst_60 = arith.constant 1.000000e+00 : f32
    %201 = vector.broadcast %cst_60 : f32 to vector<1x128xf32>
    %202 = arith.subf %201, %31 : vector<1x128xf32>
    %203 = arith.mulf %200, %202 : vector<1x128xf32>
    %c0_i32_61 = arith.constant 0 : i32
    %204 = vector.broadcast %c0_i32_61 : i32 to vector<1x128xi32>
    %205 = arith.cmpi sge, %36, %204 : vector<1x128xi32>
    %c16_i32_62 = arith.constant 16 : i32
    %206 = vector.broadcast %c16_i32_62 : i32 to vector<1x128xi32>
    %207 = arith.cmpi slt, %36, %206 : vector<1x128xi32>
    %208 = arith.andi %205, %207 : vector<1x128xi1>
    %c0_i32_63 = arith.constant 0 : i32
    %209 = vector.broadcast %c0_i32_63 : i32 to vector<1x128xi32>
    %210 = arith.cmpi sge, %33, %209 : vector<1x128xi32>
    %211 = arith.andi %208, %210 : vector<1x128xi1>
    %c16_i32_64 = arith.constant 16 : i32
    %212 = vector.broadcast %c16_i32_64 : i32 to vector<1x128xi32>
    %213 = arith.cmpi slt, %33, %212 : vector<1x128xi32>
    %214 = arith.andi %211, %213 : vector<1x128xi1>
    %c0_i32_65 = arith.constant 0 : i32
    %215 = vector.broadcast %c0_i32_65 : i32 to vector<1x128xi32>
    %216 = arith.cmpi sge, %34, %215 : vector<1x128xi32>
    %217 = arith.andi %214, %216 : vector<1x128xi1>
    %c2_i32_66 = arith.constant 2 : i32
    %218 = vector.broadcast %c2_i32_66 : i32 to vector<1x128xi32>
    %219 = arith.cmpi slt, %34, %218 : vector<1x128xi32>
    %220 = arith.andi %217, %219 : vector<1x128xi1>
    %cst_67 = arith.constant 0.000000e+00 : f32
    %221 = vector.broadcast %cst_67 : f32 to vector<1x128xf32>
    %222 = arith.select %220, %203, %221 : vector<1x128xi1>, vector<1x128xf32>
    %c256_i32_68 = arith.constant 256 : i32
    %223 = vector.broadcast %c256_i32_68 : i32 to vector<1x128xi32>
    %224 = arith.muli %34, %223 : vector<1x128xi32>
    %c16_i32_69 = arith.constant 16 : i32
    %225 = vector.broadcast %c16_i32_69 : i32 to vector<1x128xi32>
    %226 = arith.muli %33, %225 : vector<1x128xi32>
    %227 = arith.addi %224, %226 : vector<1x128xi32>
    %228 = arith.addi %227, %36 : vector<1x128xi32>
    %229 = vector.broadcast %228 : vector<1x128xi32> to vector<128x128xi32>
    %230 = arith.cmpi eq, %44, %229 : vector<128x128xi32>
    %cst_70 = arith.constant 0.000000e+00 : f32
    %231 = vector.shape_cast %222 : vector<1x128xf32> to vector<1x128xf32>
    %232 = vector.broadcast %231 : vector<1x128xf32> to vector<128x128xf32>
    %233 = vector.broadcast %cst_70 : f32 to vector<128x128xf32>
    %234 = arith.select %230, %232, %233 : vector<128x128xi1>, vector<128x128xf32>
    %235 = arith.addf %197, %234 : vector<128x128xf32>
    %cst_71 = arith.constant 1.000000e+00 : f32
    %236 = vector.broadcast %cst_71 : f32 to vector<1x128xf32>
    %237 = arith.subf %236, %30 : vector<1x128xf32>
    %238 = arith.mulf %29, %237 : vector<1x128xf32>
    %239 = arith.mulf %238, %31 : vector<1x128xf32>
    %c0_i32_72 = arith.constant 0 : i32
    %240 = vector.broadcast %c0_i32_72 : i32 to vector<1x128xi32>
    %241 = arith.cmpi sge, %36, %240 : vector<1x128xi32>
    %c16_i32_73 = arith.constant 16 : i32
    %242 = vector.broadcast %c16_i32_73 : i32 to vector<1x128xi32>
    %243 = arith.cmpi slt, %36, %242 : vector<1x128xi32>
    %244 = arith.andi %241, %243 : vector<1x128xi1>
    %c0_i32_74 = arith.constant 0 : i32
    %245 = vector.broadcast %c0_i32_74 : i32 to vector<1x128xi32>
    %246 = arith.cmpi sge, %33, %245 : vector<1x128xi32>
    %247 = arith.andi %244, %246 : vector<1x128xi1>
    %c16_i32_75 = arith.constant 16 : i32
    %248 = vector.broadcast %c16_i32_75 : i32 to vector<1x128xi32>
    %249 = arith.cmpi slt, %33, %248 : vector<1x128xi32>
    %250 = arith.andi %247, %249 : vector<1x128xi1>
    %c0_i32_76 = arith.constant 0 : i32
    %251 = vector.broadcast %c0_i32_76 : i32 to vector<1x128xi32>
    %252 = arith.cmpi sge, %40, %251 : vector<1x128xi32>
    %253 = arith.andi %250, %252 : vector<1x128xi1>
    %c2_i32_77 = arith.constant 2 : i32
    %254 = vector.broadcast %c2_i32_77 : i32 to vector<1x128xi32>
    %255 = arith.cmpi slt, %40, %254 : vector<1x128xi32>
    %256 = arith.andi %253, %255 : vector<1x128xi1>
    %cst_78 = arith.constant 0.000000e+00 : f32
    %257 = vector.broadcast %cst_78 : f32 to vector<1x128xf32>
    %258 = arith.select %256, %239, %257 : vector<1x128xi1>, vector<1x128xf32>
    %c256_i32_79 = arith.constant 256 : i32
    %259 = vector.broadcast %c256_i32_79 : i32 to vector<1x128xi32>
    %260 = arith.muli %40, %259 : vector<1x128xi32>
    %c16_i32_80 = arith.constant 16 : i32
    %261 = vector.broadcast %c16_i32_80 : i32 to vector<1x128xi32>
    %262 = arith.muli %33, %261 : vector<1x128xi32>
    %263 = arith.addi %260, %262 : vector<1x128xi32>
    %264 = arith.addi %263, %36 : vector<1x128xi32>
    %265 = vector.broadcast %264 : vector<1x128xi32> to vector<128x128xi32>
    %266 = arith.cmpi eq, %44, %265 : vector<128x128xi32>
    %cst_81 = arith.constant 0.000000e+00 : f32
    %267 = vector.shape_cast %258 : vector<1x128xf32> to vector<1x128xf32>
    %268 = vector.broadcast %267 : vector<1x128xf32> to vector<128x128xf32>
    %269 = vector.broadcast %cst_81 : f32 to vector<128x128xf32>
    %270 = arith.select %266, %268, %269 : vector<128x128xi1>, vector<128x128xf32>
    %271 = arith.addf %235, %270 : vector<128x128xf32>
    %272 = arith.mulf %29, %30 : vector<1x128xf32>
    %cst_82 = arith.constant 1.000000e+00 : f32
    %273 = vector.broadcast %cst_82 : f32 to vector<1x128xf32>
    %274 = arith.subf %273, %31 : vector<1x128xf32>
    %275 = arith.mulf %272, %274 : vector<1x128xf32>
    %c0_i32_83 = arith.constant 0 : i32
    %276 = vector.broadcast %c0_i32_83 : i32 to vector<1x128xi32>
    %277 = arith.cmpi sge, %36, %276 : vector<1x128xi32>
    %c16_i32_84 = arith.constant 16 : i32
    %278 = vector.broadcast %c16_i32_84 : i32 to vector<1x128xi32>
    %279 = arith.cmpi slt, %36, %278 : vector<1x128xi32>
    %280 = arith.andi %277, %279 : vector<1x128xi1>
    %c0_i32_85 = arith.constant 0 : i32
    %281 = vector.broadcast %c0_i32_85 : i32 to vector<1x128xi32>
    %282 = arith.cmpi sge, %38, %281 : vector<1x128xi32>
    %283 = arith.andi %280, %282 : vector<1x128xi1>
    %c16_i32_86 = arith.constant 16 : i32
    %284 = vector.broadcast %c16_i32_86 : i32 to vector<1x128xi32>
    %285 = arith.cmpi slt, %38, %284 : vector<1x128xi32>
    %286 = arith.andi %283, %285 : vector<1x128xi1>
    %c0_i32_87 = arith.constant 0 : i32
    %287 = vector.broadcast %c0_i32_87 : i32 to vector<1x128xi32>
    %288 = arith.cmpi sge, %34, %287 : vector<1x128xi32>
    %289 = arith.andi %286, %288 : vector<1x128xi1>
    %c2_i32_88 = arith.constant 2 : i32
    %290 = vector.broadcast %c2_i32_88 : i32 to vector<1x128xi32>
    %291 = arith.cmpi slt, %34, %290 : vector<1x128xi32>
    %292 = arith.andi %289, %291 : vector<1x128xi1>
    %cst_89 = arith.constant 0.000000e+00 : f32
    %293 = vector.broadcast %cst_89 : f32 to vector<1x128xf32>
    %294 = arith.select %292, %275, %293 : vector<1x128xi1>, vector<1x128xf32>
    %c256_i32_90 = arith.constant 256 : i32
    %295 = vector.broadcast %c256_i32_90 : i32 to vector<1x128xi32>
    %296 = arith.muli %34, %295 : vector<1x128xi32>
    %c16_i32_91 = arith.constant 16 : i32
    %297 = vector.broadcast %c16_i32_91 : i32 to vector<1x128xi32>
    %298 = arith.muli %38, %297 : vector<1x128xi32>
    %299 = arith.addi %296, %298 : vector<1x128xi32>
    %300 = arith.addi %299, %36 : vector<1x128xi32>
    %301 = vector.broadcast %300 : vector<1x128xi32> to vector<128x128xi32>
    %302 = arith.cmpi eq, %44, %301 : vector<128x128xi32>
    %cst_92 = arith.constant 0.000000e+00 : f32
    %303 = vector.shape_cast %294 : vector<1x128xf32> to vector<1x128xf32>
    %304 = vector.broadcast %303 : vector<1x128xf32> to vector<128x128xf32>
    %305 = vector.broadcast %cst_92 : f32 to vector<128x128xf32>
    %306 = arith.select %302, %304, %305 : vector<128x128xi1>, vector<128x128xf32>
    %307 = arith.addf %271, %306 : vector<128x128xf32>
    %308 = arith.mulf %29, %30 : vector<1x128xf32>
    %309 = arith.mulf %308, %31 : vector<1x128xf32>
    %c0_i32_93 = arith.constant 0 : i32
    %310 = vector.broadcast %c0_i32_93 : i32 to vector<1x128xi32>
    %311 = arith.cmpi sge, %36, %310 : vector<1x128xi32>
    %c16_i32_94 = arith.constant 16 : i32
    %312 = vector.broadcast %c16_i32_94 : i32 to vector<1x128xi32>
    %313 = arith.cmpi slt, %36, %312 : vector<1x128xi32>
    %314 = arith.andi %311, %313 : vector<1x128xi1>
    %c0_i32_95 = arith.constant 0 : i32
    %315 = vector.broadcast %c0_i32_95 : i32 to vector<1x128xi32>
    %316 = arith.cmpi sge, %38, %315 : vector<1x128xi32>
    %317 = arith.andi %314, %316 : vector<1x128xi1>
    %c16_i32_96 = arith.constant 16 : i32
    %318 = vector.broadcast %c16_i32_96 : i32 to vector<1x128xi32>
    %319 = arith.cmpi slt, %38, %318 : vector<1x128xi32>
    %320 = arith.andi %317, %319 : vector<1x128xi1>
    %c0_i32_97 = arith.constant 0 : i32
    %321 = vector.broadcast %c0_i32_97 : i32 to vector<1x128xi32>
    %322 = arith.cmpi sge, %40, %321 : vector<1x128xi32>
    %323 = arith.andi %320, %322 : vector<1x128xi1>
    %c2_i32_98 = arith.constant 2 : i32
    %324 = vector.broadcast %c2_i32_98 : i32 to vector<1x128xi32>
    %325 = arith.cmpi slt, %40, %324 : vector<1x128xi32>
    %326 = arith.andi %323, %325 : vector<1x128xi1>
    %cst_99 = arith.constant 0.000000e+00 : f32
    %327 = vector.broadcast %cst_99 : f32 to vector<1x128xf32>
    %328 = arith.select %326, %309, %327 : vector<1x128xi1>, vector<1x128xf32>
    %c256_i32_100 = arith.constant 256 : i32
    %329 = vector.broadcast %c256_i32_100 : i32 to vector<1x128xi32>
    %330 = arith.muli %40, %329 : vector<1x128xi32>
    %c16_i32_101 = arith.constant 16 : i32
    %331 = vector.broadcast %c16_i32_101 : i32 to vector<1x128xi32>
    %332 = arith.muli %38, %331 : vector<1x128xi32>
    %333 = arith.addi %330, %332 : vector<1x128xi32>
    %334 = arith.addi %333, %36 : vector<1x128xi32>
    %335 = vector.broadcast %334 : vector<1x128xi32> to vector<128x128xi32>
    %336 = arith.cmpi eq, %44, %335 : vector<128x128xi32>
    %cst_102 = arith.constant 0.000000e+00 : f32
    %337 = vector.shape_cast %328 : vector<1x128xf32> to vector<1x128xf32>
    %338 = vector.broadcast %337 : vector<1x128xf32> to vector<128x128xf32>
    %339 = vector.broadcast %cst_102 : f32 to vector<128x128xf32>
    %340 = arith.select %336, %338, %339 : vector<128x128xi1>, vector<128x128xf32>
    %341 = arith.addf %307, %340 : vector<128x128xf32>
    %c0_103 = arith.constant 0 : index
    %c0_104 = arith.constant 0 : index
    %342 = vector.load %arg5[%c0_103, %c0_104] : memref<32x128xf32, #tpu.memory_space<vmem>>, vector<32x128xf32>
    %c0_105 = arith.constant 0 : index
    %c0_106 = arith.constant 0 : index
    %c0_107 = arith.constant 0 : index
    %343 = vector.load %arg3[%c0_105, %c0_106, %c0_107] : memref<1x32x128xf32, #tpu.memory_space<vmem>>, vector<1x32x128xf32>
    %344 = vector.shape_cast %343 : vector<1x32x128xf32> to vector<32x128xf32>
    %cst_108 = arith.constant dense<0.000000e+00> : vector<32x128xf32>
    %345 = tpu.matmul %344, %341, %cst_108 {dimension_numbers = #tpu.dot_dimension_numbers<[1], [0], [0], [1], [0, 0, 1, 1], [], []>} : vector<32x128xf32>, vector<128x128xf32>, vector<32x128xf32> -> vector<32x128xf32>
    %346 = arith.addf %342, %345 : vector<32x128xf32>
    %c0_109 = arith.constant 0 : index
    %c0_110 = arith.constant 0 : index
    %347 = vector.load %arg5[%c0_109, %c0_110] : memref<32x128xf32, #tpu.memory_space<vmem>>, vector<32x128xf32>
    tpu.vector_store %arg5[%c0_109, %c0_110], %346 {strides = array<i32>} : memref<32x128xf32, #tpu.memory_space<vmem>>, vector<32x128xf32>,
    %c3_i32 = arith.constant 3 : i32
    %348 = arith.cmpi eq, %arg1, %c3_i32 : i32
    %349 = arith.extui %348 : i1 to i32
    %c0_i32_111 = arith.constant 0 : i32
    %350 = arith.cmpi ne, %349, %c0_i32_111 : i32
    scf.if %350 {
      %c0_112 = arith.constant 0 : index
      %c0_113 = arith.constant 0 : index
      %351 = vector.load %arg5[%c0_112, %c0_113] : memref<32x128xf32, #tpu.memory_space<vmem>>, vector<32x128xf32>
      %c0_114 = arith.constant 0 : index
      %c0_115 = arith.constant 0 : index
      %c0_116 = arith.constant 0 : index
      %352 = vector.load %arg4[%c0_114, %c0_115, %c0_116] : memref<1x32x128xf32, #tpu.memory_space<vmem>>, vector<1x32x128xf32>
      %353 = vector.shape_cast %352 : vector<1x32x128xf32> to vector<32x128xf32>
      %354 = vector.shape_cast %351 : vector<32x128xf32> to vector<1x32x128xf32>
      tpu.vector_store %arg4[%c0_114, %c0_115, %c0_116], %354 {strides = array<i32>} : memref<1x32x128xf32, #tpu.memory_space<vmem>>, vector<1x32x128xf32>,
    } else {
    }
    return
  }
  func.func @transform_0(%arg0: i32, %arg1: i32) -> (i32, i32, i32) {
    %c0_i32 = arith.constant 0 : i32
    %c0_i32_0 = arith.constant 0 : i32
    %c0_i32_1 = arith.constant 0 : i32
    return %arg0, %c0_i32, %c0_i32_0 : i32, i32, i32
  }
  func.func @transform_1(%arg0: i32, %arg1: i32) -> (i32, i32, i32) {
    %c0_i32 = arith.constant 0 : i32
    %c0_i32_0 = arith.constant 0 : i32
    return %arg0, %c0_i32, %arg1 : i32, i32, i32
  }
  func.func @transform_2(%arg0: i32, %arg1: i32) -> (i32, i32, i32) {
    %c0_i32 = arith.constant 0 : i32
    %c0_i32_0 = arith.constant 0 : i32
    %c0_i32_1 = arith.constant 0 : i32
    return %arg0, %c0_i32, %c0_i32_0 : i32, i32, i32
  }
}

module attributes {stable_mosaic.version = 11 : i64} {
  func.func @_pw_conv_t_kernel(%arg0: i32, %arg1: memref<64x128xf32, #tpu.memory_space<vmem>>, %arg2: memref<64x64xf32, #tpu.memory_space<vmem>>, %arg3: memref<64x1xf32, #tpu.memory_space<vmem>>, %arg4: memref<64x128xf32, #tpu.memory_space<vmem>>) attributes {dimension_semantics = [#tpu.dimension_semantics<arbitrary>], iteration_bounds = array<i64: 1>, scalar_prefetch = 0 : i64, scratch_operands = 0 : i64, tpu.core_type = #tpu.core_type<tc>, window_params = [{pipeline_mode = #tpu.pipeline_mode<synchronous>, transform_indices = @transform_0, window_bounds = array<i64: 64, 128>}, {pipeline_mode = #tpu.pipeline_mode<synchronous>, transform_indices = @transform_1, window_bounds = array<i64: 64, 64>}, {pipeline_mode = #tpu.pipeline_mode<synchronous>, transform_indices = @transform_2, window_bounds = array<i64: 64, 1>}, {pipeline_mode = #tpu.pipeline_mode<synchronous>, transform_indices = @transform_3, window_bounds = array<i64: 64, 128>}]} {
    %c0 = arith.constant 0 : index
    %c0_0 = arith.constant 0 : index
    %0 = vector.load %arg2[%c0, %c0_0] : memref<64x64xf32, #tpu.memory_space<vmem>>, vector<64x64xf32>
    %c0_1 = arith.constant 0 : index
    %c0_2 = arith.constant 0 : index
    %1 = vector.load %arg1[%c0_1, %c0_2] : memref<64x128xf32, #tpu.memory_space<vmem>>, vector<64x128xf32>
    %cst = arith.constant dense<0.000000e+00> : vector<64x128xf32>
    %2 = tpu.matmul %0, %1, %cst {dimension_numbers = #tpu.dot_dimension_numbers<[1], [0], [0], [1], [0, 0, 1, 1], [], []>} : vector<64x64xf32>, vector<64x128xf32>, vector<64x128xf32> -> vector<64x128xf32>
    %c0_3 = arith.constant 0 : index
    %c0_4 = arith.constant 0 : index
    %3 = vector.load %arg3[%c0_3, %c0_4] : memref<64x1xf32, #tpu.memory_space<vmem>>, vector<64x1xf32>
    %4 = vector.broadcast %3 : vector<64x1xf32> to vector<64x128xf32>
    %5 = arith.addf %2, %4 : vector<64x128xf32>
    %c0_5 = arith.constant 0 : index
    %c0_6 = arith.constant 0 : index
    %6 = vector.load %arg4[%c0_5, %c0_6] : memref<64x128xf32, #tpu.memory_space<vmem>>, vector<64x128xf32>
    tpu.vector_store %arg4[%c0_5, %c0_6], %5 {strides = array<i32>} : memref<64x128xf32, #tpu.memory_space<vmem>>, vector<64x128xf32>,
    return
  }
  func.func @transform_0(%arg0: i32) -> (i32, i32) {
    %c0_i32 = arith.constant 0 : i32
    %c0_i32_0 = arith.constant 0 : i32
    %c0_i32_1 = arith.constant 0 : i32
    return %c0_i32, %c0_i32_0 : i32, i32
  }
  func.func @transform_1(%arg0: i32) -> (i32, i32) {
    %c0_i32 = arith.constant 0 : i32
    %c0_i32_0 = arith.constant 0 : i32
    %c0_i32_1 = arith.constant 0 : i32
    return %c0_i32, %c0_i32_0 : i32, i32
  }
  func.func @transform_2(%arg0: i32) -> (i32, i32) {
    %c0_i32 = arith.constant 0 : i32
    %c0_i32_0 = arith.constant 0 : i32
    %c0_i32_1 = arith.constant 0 : i32
    return %c0_i32, %c0_i32_0 : i32, i32
  }
  func.func @transform_3(%arg0: i32) -> (i32, i32) {
    %c0_i32 = arith.constant 0 : i32
    %c0_i32_0 = arith.constant 0 : i32
    %c0_i32_1 = arith.constant 0 : i32
    return %c0_i32, %c0_i32_0 : i32, i32
  }
}

</mosaic_0001>

<llo_original>
// kernel: subclass_camera_forward.3
$region0: #{subclass_camera_forward.3}
  #allocation0 [shape = 'u32[]', space=smem, size = 0x4, offset = 0x4, fixed_abs, tag = 'smem constant byte address 0x4 - core index']
  #allocation1 [shape = 'u32[144,128]{1,0:T(1,128)}', space=vmem, size = 0x12000, scoped, tag = 'internal scratch']
  %s0 = inlined_call_operand.vmem [shape: f32[3,1024], index: 0, kind: input, shape index: {}]
  %s1 = inlined_call_operand.vmem [shape: f32[32,3], index: 1, kind: input, shape index: {}]
  %s2 = inlined_call_operand.vmem [shape: f32[32,1], index: 2, kind: input, shape index: {}]
  %s3 = inlined_call_operand.vmem [shape: f32[32,32], index: 3, kind: input, shape index: {}]
  %s4 = inlined_call_operand.vmem [shape: f32[32,1], index: 4, kind: input, shape index: {}]
  %s5 = inlined_call_operand.vmem [shape: f32[32,32], index: 5, kind: input, shape index: {}]
  %s6 = inlined_call_operand.vmem [shape: f32[32,1], index: 6, kind: input, shape index: {}]
  %s7 = inlined_call_operand.vmem [shape: f32[32,1024], index: 7, kind: output, shape index: {}]
  %s8 = sld [smem:[#allocation0]]
  $region80: #{subclass_camera_forward.3} parent=0
    _
  %s10 = ssub.s32 1, %s8
  %s11 = scalar_select 0, %s10, %s8
  $region1: #{subclass_camera_forward.3} parent=0
    #allocation2 [shape = 'u8[131072]{0}', space=vmem, size = 0x20000, scoped, tag = 'output window, operand 0']
    loop: start=0, step=1, limit=4
    $region2: #{subclass_camera_forward.3} parent=1 // loop_pre_header
      _
    $region3: #{subclass_camera_forward.3} parent=1 // loop_header
      %s13 = sphi 0, %s17
      %p14 = scmp.ge.s32.totalorder %s13, 4
      %s23 = sphi 0, %s25
      %s26 = sphi 0, %s23
      %s27 = sphi 0, %s26
      %s43 = sphi 0, %s27
      %s47 = sphi 0, %s47
      %s49 = sphi 0, %s47
      %s50 = sphi 0, %s49
      %s64 = sphi 0, %s50
      %s68 = sphi 0, %s68
      %s70 = sphi 0, %s68
      %s71 = sphi 0, %s70
      %s85 = sphi 0, %s71
      %s89 = sphi 0, %s89
      %s91 = sphi 0, %s89
      %s92 = sphi 0, %s91
      %s106 = sphi 0, %s92
      %s110 = sphi 0, %s110
      %s112 = sphi 0, %s110
      %s113 = sphi 0, %s112
      %s127 = sphi 0, %s113
      %s131 = sphi 0, %s131
      %s133 = sphi 0, %s131
      %s134 = sphi 0, %s133
      %s148 = sphi 0, %s134
      %s152 = sphi 0, %s152
      %s154 = sphi 0, %s152
      %s155 = sphi 0, %s154
      %s169 = sphi 0, %s155
      %s175 = sphi 0, %s177
      %s178 = sphi 0, %s175
      %s179 = sphi 0, %s178
      %s195 = sphi 0, %s179
    $region4: #{subclass_camera_forward.3} parent=1 // loop_header_branch
      %16 = sbr.rel (%p14) target = $region8
    $region5: #{subclass_camera_forward.3} parent=1 // loop_body
      %s18 = ssub.s32 %s13, 1
      %s19 = ssub.s32 %s13, 2
      %s20 = sadd.s32 %s13, 1
      %s21 = ssub.s32 %s13, %s20
      %p22 = scmp.eq.s32.totalorder %s21, 0
      %s24 = sadd.s32 %s23, 1
      %s25 = scalar_select %p22, %s23, %s24
      %p28 = pneg %p22
      %p29 = scmp.eq.s32.totalorder %s13, 1
      %p30 = por %p28, %p29
      %p31 = scmp.ne.s32.totalorder %s23, %s26
      %p32 = scmp.eq.s32.totalorder %s13, 0
      %p33 = por %p31, %p32
      %p34 = scmp.ne.s32.totalorder %s23, %s26
      %p35 = scmp.eq.s32.totalorder %s18, 1
      %p36 = por %p34, %p35
      %p37 = scmp.ne.s32.totalorder %s26, %s27
      %p38 = scmp.eq.s32.totalorder %s18, 0
      %p39 = por %p37, %p38
      %p40 = scmp.ne.s32.totalorder %s26, %s27
      %p41 = scmp.eq.s32.totalorder %s19, 1
      %p42 = por %p40, %p41
      %p44 = scmp.ne.s32.totalorder %s27, %s43
      %p45 = scmp.eq.s32.totalorder %s19, 0
      %p46 = por %p44, %p45
      %s48 = sadd.s32 %s47, 1
      %p51 = scmp.eq.s32.totalorder %s13, 1
      %p52 = scmp.ne.s32.totalorder %s47, %s49
      %p53 = scmp.eq.s32.totalorder %s13, 0
      %p54 = por %p52, %p53
      %p55 = scmp.ne.s32.totalorder %s47, %s49
      %p56 = scmp.eq.s32.totalorder %s18, 1
      %p57 = por %p55, %p56
      %p58 = scmp.ne.s32.totalorder %s49, %s50
      %p59 = scmp.eq.s32.totalorder %s18, 0
      %p60 = por %p58, %p59
      %p61 = scmp.ne.s32.totalorder %s49, %s50
      %p62 = scmp.eq.s32.totalorder %s19, 1
      %p63 = por %p61, %p62
      %p65 = scmp.ne.s32.totalorder %s50, %s64
      %p66 = scmp.eq.s32.totalorder %s19, 0
      %p67 = por %p65, %p66
      %s69 = sadd.s32 %s68, 1
      %p72 = scmp.eq.s32.totalorder %s13, 1
      %p73 = scmp.ne.s32.totalorder %s68, %s70
      %p74 = scmp.eq.s32.totalorder %s13, 0
      %p75 = por %p73, %p74
      %p76 = scmp.ne.s32.totalorder %s68, %s70
      %p77 = scmp.eq.s32.totalorder %s18, 1
      %p78 = por %p76, %p77
      %p79 = scmp.ne.s32.totalorder %s70, %s71
      %p80 = scmp.eq.s32.totalorder %s18, 0
      %p81 = por %p79, %p80
      %p82 = scmp.ne.s32.totalorder %s70, %s71
      %p83 = scmp.eq.s32.totalorder %s19, 1
      %p84 = por %p82, %p83
      %p86 = scmp.ne.s32.totalorder %s71, %s85
      %p87 = scmp.eq.s32.totalorder %s19, 0
      %p88 = por %p86, %p87
      %s90 = sadd.s32 %s89, 1
      %p93 = scmp.eq.s32.totalorder %s13, 1
      %p94 = scmp.ne.s32.totalorder %s89, %s91
      %p95 = scmp.eq.s32.totalorder %s13, 0
      %p96 = por %p94, %p95
      %p97 = scmp.ne.s32.totalorder %s89, %s91
      %p98 = scmp.eq.s32.totalorder %s18, 1
      %p99 = por %p97, %p98
      %p100 = scmp.ne.s32.totalorder %s91, %s92
      %p101 = scmp.eq.s32.totalorder %s18, 0
      %p102 = por %p100, %p101
      %p103 = scmp.ne.s32.totalorder %s91, %s92
      %p104 = scmp.eq.s32.totalorder %s19, 1
      %p105 = por %p103, %p104
      %p107 = scmp.ne.s32.totalorder %s92, %s106
      %p108 = scmp.eq.s32.totalorder %s19, 0
      %p109 = por %p107, %p108
      %s111 = sadd.s32 %s110, 1
      %p114 = scmp.eq.s32.totalorder %s13, 1
      %p115 = scmp.ne.s32.totalorder %s110, %s112
      %p116 = scmp.eq.s32.totalorder %s13, 0
      %p117 = por %p115, %p116
      %p118 = scmp.ne.s32.totalorder %s110, %s112
      %p119 = scmp.eq.s32.totalorder %s18, 1
      %p120 = por %p118, %p119
      %p121 = scmp.ne.s32.totalorder %s112, %s113
      %p122 = scmp.eq.s32.totalorder %s18, 0
      %p123 = por %p121, %p122
      %p124 = scmp.ne.s32.totalorder %s112, %s113
      %p125 = scmp.eq.s32.totalorder %s19, 1
      %p126 = por %p124, %p125
      %p128 = scmp.ne.s32.totalorder %s113, %s127
      %p129 = scmp.eq.s32.totalorder %s19, 0
      %p130 = por %p128, %p129
      %s132 = sadd.s32 %s131, 1
      %p135 = scmp.eq.s32.totalorder %s13, 1
      %p136 = scmp.ne.s32.totalorder %s131, %s133
      %p137 = scmp.eq.s32.totalorder %s13, 0
      %p138 = por %p136, %p137
      %p139 = scmp.ne.s32.totalorder %s131, %s133
      %p140 = scmp.eq.s32.totalorder %s18, 1
      %p141 = por %p139, %p140
      %p142 = scmp.ne.s32.totalorder %s133, %s134
      %p143 = scmp.eq.s32.totalorder %s18, 0
      %p144 = por %p142, %p143
      %p145 = scmp.ne.s32.totalorder %s133, %s134
      %p146 = scmp.eq.s32.totalorder %s19, 1
      %p147 = por %p145, %p146
      %p149 = scmp.ne.s32.totalorder %s134, %s148
      %p150 = scmp.eq.s32.totalorder %s19, 0
      %p151 = por %p149, %p150
      %s153 = sadd.s32 %s152, 1
      %p156 = scmp.eq.s32.totalorder %s13, 1
      %p157 = scmp.ne.s32.totalorder %s152, %s154
      %p158 = scmp.eq.s32.totalorder %s13, 0
      %p159 = por %p157, %p158
      %p160 = scmp.ne.s32.totalorder %s152, %s154
      %p161 = scmp.eq.s32.totalorder %s18, 1
      %p162 = por %p160, %p161
      %p163 = scmp.ne.s32.totalorder %s154, %s155
      %p164 = scmp.eq.s32.totalorder %s18, 0
      %p165 = por %p163, %p164
      %p166 = scmp.ne.s32.totalorder %s154, %s155
      %p167 = scmp.eq.s32.totalorder %s19, 1
      %p168 = por %p166, %p167
      %p170 = scmp.ne.s32.totalorder %s155, %s169
      %p171 = scmp.eq.s32.totalorder %s19, 0
      %p172 = por %p170, %p171
      %s173 = ssub.s32 %s13, %s20
      %p174 = scmp.eq.s32.totalorder %s173, 0
      %s176 = sadd.s32 %s175, 1
      %s177 = scalar_select %p174, %s175, %s176
      %p180 = pneg %p174
      %p181 = scmp.eq.s32.totalorder %s13, 1
      %p182 = por %p180, %p181
      %p183 = scmp.ne.s32.totalorder %s175, %s178
      %p184 = scmp.eq.s32.totalorder %s13, 0
      %p185 = por %p183, %p184
      %p186 = scmp.ne.s32.totalorder %s175, %s178
      %p187 = scmp.eq.s32.totalorder %s18, 1
      %p188 = por %p186, %p187
      %p189 = scmp.ne.s32.totalorder %s178, %s179
      %p190 = scmp.eq.s32.totalorder %s18, 0
      %p191 = por %p189, %p190
      %p192 = scmp.ne.s32.totalorder %s178, %s179
      %p193 = scmp.eq.s32.totalorder %s19, 1
      %p194 = por %p192, %p193
      %p196 = scmp.ne.s32.totalorder %s179, %s195
      %p197 = scmp.eq.s32.totalorder %s19, 0
      %p198 = por %p196, %p197
      %p199 = scmp.le.s32.totalorder 1, %s13
      %p200 = scmp.lt.s32.totalorder %s13, 3
      %p201 = pnand %p199, %p200
      %p202 = pneg %p201
      // Predicated region
      $region9: #{subclass_camera_forward.3} parent=5 // pred_check
        _
      $region10: #{subclass_camera_forward.3} parent=5 // pred_check_branch
        %204 = sbr.rel (%p201) target = $region12
      $region11: #{subclass_camera_forward.3} parent=5 // pred_region
        %s205 = ssub.s32 %s13, 1
        // Predicated region
        $region13: #{subclass_camera_forward.3} parent=11 // pred_check
          %p206 = pneg %p60
        $region14: #{subclass_camera_forward.3} parent=11 // pred_check_branch
          %208 = sbr.rel (%p206) target = $region16
        $region15: #{subclass_camera_forward.3} parent=11 // pred_region
          _
        $region16: #{subclass_camera_forward.3} parent=11 // pred_fallthru
          _
        // Predicated region
        $region17: #{subclass_camera_forward.3} parent=11 // pred_check
          %p209 = pneg %p81
        $region18: #{subclass_camera_forward.3} parent=11 // pred_check_branch
          %211 = sbr.rel (%p209) target = $region20
        $region19: #{subclass_camera_forward.3} parent=11 // pred_region
          _
        $region20: #{subclass_camera_forward.3} parent=11 // pred_fallthru
          _
        // Predicated region
        $region21: #{subclass_camera_forward.3} parent=11 // pred_check
          %p212 = pneg %p102
        $region22: #{subclass_camera_forward.3} parent=11 // pred_check_branch
          %214 = sbr.rel (%p212) target = $region24
        $region23: #{subclass_camera_forward.3} parent=11 // pred_region
          _
        $region24: #{subclass_camera_forward.3} parent=11 // pred_fallthru
          _
        // Predicated region
        $region25: #{subclass_camera_forward.3} parent=11 // pred_check
          %p215 = pneg %p123
        $region26: #{subclass_camera_forward.3} parent=11 // pred_check_branch
          %217 = sbr.rel (%p215) target = $region28
        $region27: #{subclass_camera_forward.3} parent=11 // pred_region
          _
        $region28: #{subclass_camera_forward.3} parent=11 // pred_fallthru
          _
        // Predicated region
        $region29: #{subclass_camera_forward.3} parent=11 // pred_check
          %p218 = pneg %p144
        $region30: #{subclass_camera_forward.3} parent=11 // pred_check_branch
          %220 = sbr.rel (%p218) target = $region32
        $region31: #{subclass_camera_forward.3} parent=11 // pred_region
          _
        $region32: #{subclass_camera_forward.3} parent=11 // pred_fallthru
          _
        // Predicated region
        $region33: #{subclass_camera_forward.3} parent=11 // pred_check
          %p221 = pneg %p165
        $region34: #{subclass_camera_forward.3} parent=11 // pred_check_branch
          %223 = sbr.rel (%p221) target = $region36
        $region35: #{subclass_camera_forward.3} parent=11 // pred_region
          _
        $region36: #{subclass_camera_forward.3} parent=11 // pred_fallthru
          _
      $region12: #{subclass_camera_forward.3} parent=5 // pred_fallthru
        _
      %p224 = scmp.lt.s32.totalorder %s13, 2
      // Predicated region
      $region37: #{subclass_camera_forward.3} parent=5 // pred_check
        %p225 = pneg %p224
      $region38: #{subclass_camera_forward.3} parent=5 // pred_check_branch
        %227 = sbr.rel (%p225) target = $region40
      $region39: #{subclass_camera_forward.3} parent=5 // pred_region
        // Predicated region
        $region41: #{subclass_camera_forward.3} parent=39 // pred_check
          %p228 = pneg %p33
        $region42: #{subclass_camera_forward.3} parent=39 // pred_check_branch
          %230 = sbr.rel (%p228) target = $region44
        $region43: #{subclass_camera_forward.3} parent=39 // pred_region
          %s231 = smul.u32 4, %s13
          %p232 = scmp.lt.s32.totalorder %s231, 7
          %s233 = scalar_select %p232, %s231, 7
          %s234 = smul.addr %s233, 4
          %s235 = scalar_lea.vmem %s0, %s234
          %s236 = smul.u32 4, %s13
        $region44: #{subclass_camera_forward.3} parent=39 // pred_fallthru
          _
      $region40: #{subclass_camera_forward.3} parent=5 // pred_fallthru
        _
      %p237 = scmp.le.s32.totalorder 1, %s13
      %p238 = scmp.lt.s32.totalorder %s13, 3
      %p239 = pnand %p237, %p238
      %p240 = pneg %p239
      // Predicated region
      $region45: #{subclass_camera_forward.3} parent=5 // pred_check
        _
      $region46: #{subclass_camera_forward.3} parent=5 // pred_check_branch
        %242 = sbr.rel (%p239) target = $region48
      $region47: #{subclass_camera_forward.3} parent=5 // pred_region
        %s243 = ssub.s32 %s13, 1
        %s244 = smul.u32 4, %s18
        %p245 = scmp.lt.s32.totalorder %s244, 7
        %s246 = scalar_select %p245, %s244, 7
        %s247 = smul.addr %s246, 4
        %s248 = scalar_lea.vmem %s0, %s247
        %p249 = pneg %p39
        %p250 = pneg %p36
        %p251 = pneg %p60
        %p252 = pneg %p57
        %p253 = pneg %p81
        %p254 = pneg %p78
        %p255 = pneg %p102
        %p256 = pneg %p99
        %p257 = pneg %p123
        %p258 = pneg %p120
        %p259 = pneg %p144
        %p260 = pneg %p141
        %p261 = pneg %p165
        %p262 = pneg %p162
        %p263 = pneg %p191
        %p264 = pneg %p188
        %s265 = sand.u32 %s178, 1
        %s266 = sand.u32 %s178, 1
        %s267 = smul.addr %s266, 128
        %s268 = scalar_lea.vmem [#allocation2], %s267
        %s269 = smul.u32 4, %s18
        %p270 = scmp.lt.s32.totalorder %s269, 7
        %s271 = scalar_select %p270, %s269, 7
        %s272 = smul.addr %s271, 4
        %s273 = scalar_lea.vmem %s0, %s272
        %s274 = smul.u32 4, %s18
        %s275 = smul.u32 4, %s18
        %v276 = vld [vmem:[%s273] sm:$0x77]
        %v277 = vld [vmem:[%s273 + $0x8] sm:$0x77]
        %v278 = vld [vmem:[%s1] sm:$0xff]
        %v279 = vld [vmem:[%s1 + $0x8] sm:$0xff]
        %v280 = vld [vmem:[%s1 + $0x10] sm:$0xff]
        %v281 = vld [vmem:[%s1 + $0x18] sm:$0xff]
        %v282 = vld [vmem:[%s2] sm:$0xff]
        %v283 = vld [vmem:[%s2 + $0x8] sm:$0xff]
        %v284 = vld [vmem:[%s2 + $0x10] sm:$0xff]
        %v285 = vld [vmem:[%s2 + $0x18] sm:$0xff]
        %287 = vset.pattern.permute.xlu0 0
        %288 = vperm.xlu0 %287, %v278
        %v289 = vpop.permute.xlu0 %288
        %292 = vset.pattern.permute.xlu0 0
        %293 = vperm.xlu0 %292, %v279
        %v294 = vpop.permute.xlu0 %293
        %297 = vset.pattern.permute.xlu0 0
        %298 = vperm.xlu0 %297, %v280
        %v299 = vpop.permute.xlu0 %298
        %302 = vset.pattern.permute.xlu0 0
        %303 = vperm.xlu0 %302, %v281
        %v304 = vpop.permute.xlu0 %303
        %v308 = vlaneseq
        %v309 = vshrl.u32 %v308, 7
        %v310 = vsub.s32 0, %v309
        %v311 = vrot.slane %v276, %v310
        %v312 = vlaneseq
        %v313 = vshrl.u32 %v312, 7
        %v314 = vsub.s32 4, %v313
        %v315 = vrot.slane %v276, %v314
        %v316 = vlaneseq
        %v317 = vshrl.u32 %v316, 7
        %v318 = vsub.s32 0, %v317
        %v319 = vrot.slane %v277, %v318
        %v320 = vlaneseq
        %v321 = vshrl.u32 %v320, 7
        %v322 = vsub.s32 4, %v321
        %v323 = vrot.slane %v277, %v322
        %v328 = vlaneseq
        %v329 = vshrl.u32 %v328, 7
        %v330 = vsub.s32 0, %v329
        %v331 = vrot.slane %v311, %v330
        %v332 = vlaneseq
        %v333 = vshrl.u32 %v332, 7
        %v334 = vsub.s32 0, %v333
        %v335 = vrot.slane %v315, %v334
        %v336 = vlaneseq
        %v337 = vshrl.u32 %v336, 7
        %v338 = vsub.s32 0, %v337
        %v339 = vrot.slane %v319, %v338
        %v340 = vlaneseq
        %v341 = vshrl.u32 %v340, 7
        %v342 = vsub.s32 0, %v341
        %v343 = vrot.slane %v323, %v342
        %v344 = vmul.f32 %v289, %v331
        %v345 = vmul.f32 %v289, %v335
        %v346 = vmul.f32 %v289, %v339
        %v347 = vmul.f32 %v289, %v343
        %v348 = vmul.f32 %v294, %v331
        %v349 = vmul.f32 %v294, %v335
        %v350 = vmul.f32 %v294, %v339
        %v351 = vmul.f32 %v294, %v343
        %v352 = vmul.f32 %v299, %v331
        %v353 = vmul.f32 %v299, %v335
        %v354 = vmul.f32 %v299, %v339
        %v355 = vmul.f32 %v299, %v343
        %v356 = vmul.f32 %v304, %v331
        %v357 = vmul.f32 %v304, %v335
        %v358 = vmul.f32 %v304, %v339
        %v359 = vmul.f32 %v304, %v343
        %361 = vset.pattern.permute.xlu0 0
        %362 = vperm.xlu0 %361, %v282
        %v363 = vpop.permute.xlu0 %362
        %366 = vset.pattern.permute.xlu0 0
        %367 = vperm.xlu0 %366, %v283
        %v368 = vpop.permute.xlu0 %367
        %371 = vset.pattern.permute.xlu0 0
        %372 = vperm.xlu0 %371, %v284
        %v373 = vpop.permute.xlu0 %372
        %376 = vset.pattern.permute.xlu0 0
        %377 = vperm.xlu0 %376, %v285
        %v378 = vpop.permute.xlu0 %377
        %v380 = vadd.f32 %v363, %v344
        %v381 = vadd.f32 %v363, %v345
        %v382 = vadd.f32 %v363, %v346
        %v383 = vadd.f32 %v363, %v347
        %v384 = vadd.f32 %v368, %v348
        %v385 = vadd.f32 %v368, %v349
        %v386 = vadd.f32 %v368, %v350
        %v387 = vadd.f32 %v368, %v351
        %v388 = vadd.f32 %v373, %v352
        %v389 = vadd.f32 %v373, %v353
        %v390 = vadd.f32 %v373, %v354
        %v391 = vadd.f32 %v373, %v355
        %v392 = vadd.f32 %v378, %v356
        %v393 = vadd.f32 %v378, %v357
        %v394 = vadd.f32 %v378, %v358
        %v395 = vadd.f32 %v378, %v359
        %396 = vset.pattern.permute.xlu0 1
        %397 = vperm.xlu0 %396, %v278
        %v398 = vpop.permute.xlu0 %397
        %400 = vset.pattern.permute.xlu0 1
        %401 = vperm.xlu0 %400, %v279
        %v402 = vpop.permute.xlu0 %401
        %404 = vset.pattern.permute.xlu0 1
        %405 = vperm.xlu0 %404, %v280
        %v406 = vpop.permute.xlu0 %405
        %408 = vset.pattern.permute.xlu0 1
        %409 = vperm.xlu0 %408, %v281
        %v410 = vpop.permute.xlu0 %409
        %v412 = vlaneseq
        %v413 = vshrl.u32 %v412, 7
        %v414 = vsub.s32 1, %v413
        %v415 = vrot.slane %v276, %v414
        %v416 = vlaneseq
        %v417 = vshrl.u32 %v416, 7
        %v418 = vsub.s32 5, %v417
        %v419 = vrot.slane %v276, %v418
        %v420 = vlaneseq
        %v421 = vshrl.u32 %v420, 7
        %v422 = vsub.s32 1, %v421
        %v423 = vrot.slane %v277, %v422
        %v424 = vlaneseq
        %v425 = vshrl.u32 %v424, 7
        %v426 = vsub.s32 5, %v425
        %v427 = vrot.slane %v277, %v426
        %v432 = vlaneseq
        %v433 = vshrl.u32 %v432, 7
        %v434 = vsub.s32 1, %v433
        %v435 = vrot.slane %v415, %v434
        %v436 = vlaneseq
        %v437 = vshrl.u32 %v436, 7
        %v438 = vsub.s32 1, %v437
        %v439 = vrot.slane %v419, %v438
        %v440 = vlaneseq
        %v441 = vshrl.u32 %v440, 7
        %v442 = vsub.s32 1, %v441
        %v443 = vrot.slane %v423, %v442
        %v444 = vlaneseq
        %v445 = vshrl.u32 %v444, 7
        %v446 = vsub.s32 1, %v445
        %v447 = vrot.slane %v427, %v446
        %v448 = vmul.f32 %v398, %v435
        %v449 = vmul.f32 %v398, %v439
        %v450 = vmul.f32 %v398, %v443
        %v451 = vmul.f32 %v398, %v447
        %v452 = vmul.f32 %v402, %v435
        %v453 = vmul.f32 %v402, %v439
        %v454 = vmul.f32 %v402, %v443
        %v455 = vmul.f32 %v402, %v447
        %v456 = vmul.f32 %v406, %v435
        %v457 = vmul.f32 %v406, %v439
        %v458 = vmul.f32 %v406, %v443
        %v459 = vmul.f32 %v406, %v447
        %v460 = vmul.f32 %v410, %v435
        %v461 = vmul.f32 %v410, %v439
        %v462 = vmul.f32 %v410, %v443
        %v463 = vmul.f32 %v410, %v447
        %v464 = vadd.f32 %v380, %v448
        %v465 = vadd.f32 %v381, %v449
        %v466 = vadd.f32 %v382, %v450
        %v467 = vadd.f32 %v383, %v451
        %v468 = vadd.f32 %v384, %v452
        %v469 = vadd.f32 %v385, %v453
        %v470 = vadd.f32 %v386, %v454
        %v471 = vadd.f32 %v387, %v455
        %v472 = vadd.f32 %v388, %v456
        %v473 = vadd.f32 %v389, %v457
        %v474 = vadd.f32 %v390, %v458
        %v475 = vadd.f32 %v391, %v459
        %v476 = vadd.f32 %v392, %v460
        %v477 = vadd.f32 %v393, %v461
        %v478 = vadd.f32 %v394, %v462
        %v479 = vadd.f32 %v395, %v463
        %480 = vset.pattern.permute.xlu0 2
        %481 = vperm.xlu0 %480, %v278
        %v482 = vpop.permute.xlu0 %481
        %484 = vset.pattern.permute.xlu0 2
        %485 = vperm.xlu0 %484, %v279
        %v486 = vpop.permute.xlu0 %485
        %488 = vset.pattern.permute.xlu0 2
        %489 = vperm.xlu0 %488, %v280
        %v490 = vpop.permute.xlu0 %489
        %492 = vset.pattern.permute.xlu0 2
        %493 = vperm.xlu0 %492, %v281
        %v494 = vpop.permute.xlu0 %493
        %v496 = vlaneseq
        %v497 = vshrl.u32 %v496, 7
        %v498 = vsub.s32 2, %v497
        %v499 = vrot.slane %v276, %v498
        %v500 = vlaneseq
        %v501 = vshrl.u32 %v500, 7
        %v502 = vsub.s32 6, %v501
        %v503 = vrot.slane %v276, %v502
        %v504 = vlaneseq
        %v505 = vshrl.u32 %v504, 7
        %v506 = vsub.s32 2, %v505
        %v507 = vrot.slane %v277, %v506
        %v508 = vlaneseq
        %v509 = vshrl.u32 %v508, 7
        %v510 = vsub.s32 6, %v509
        %v511 = vrot.slane %v277, %v510
        %v516 = vlaneseq
        %v517 = vshrl.u32 %v516, 7
        %v518 = vsub.s32 2, %v517
        %v519 = vrot.slane %v499, %v518
        %v520 = vlaneseq
        %v521 = vshrl.u32 %v520, 7
        %v522 = vsub.s32 2, %v521
        %v523 = vrot.slane %v503, %v522
        %v524 = vlaneseq
        %v525 = vshrl.u32 %v524, 7
        %v526 = vsub.s32 2, %v525
        %v527 = vrot.slane %v507, %v526
        %v528 = vlaneseq
        %v529 = vshrl.u32 %v528, 7
        %v530 = vsub.s32 2, %v529
        %v531 = vrot.slane %v511, %v530
        %v532 = vmul.f32 %v482, %v519
        %v533 = vmul.f32 %v482, %v523
        %v534 = vmul.f32 %v482, %v527
        %v535 = vmul.f32 %v482, %v531
        %v536 = vmul.f32 %v486, %v519
        %v537 = vmul.f32 %v486, %v523
        %v538 = vmul.f32 %v486, %v527
        %v539 = vmul.f32 %v486, %v531
        %v540 = vmul.f32 %v490, %v519
        %v541 = vmul.f32 %v490, %v523
        %v542 = vmul.f32 %v490, %v527
        %v543 = vmul.f32 %v490, %v531
        %v544 = vmul.f32 %v494, %v519
        %v545 = vmul.f32 %v494, %v523
        %v546 = vmul.f32 %v494, %v527
        %v547 = vmul.f32 %v494, %v531
        %v548 = vadd.f32 %v464, %v532
        %v549 = vadd.f32 %v465, %v533
        %v550 = vadd.f32 %v466, %v534
        %v551 = vadd.f32 %v467, %v535
        %v552 = vadd.f32 %v468, %v536
        %v553 = vadd.f32 %v469, %v537
        %v554 = vadd.f32 %v470, %v538
        %v555 = vadd.f32 %v471, %v539
        %v556 = vadd.f32 %v472, %v540
        %v557 = vadd.f32 %v473, %v541
        %v558 = vadd.f32 %v474, %v542
        %v559 = vadd.f32 %v475, %v543
        %v560 = vadd.f32 %v476, %v544
        %v561 = vadd.f32 %v477, %v545
        %v562 = vadd.f32 %v478, %v546
        %v563 = vadd.f32 %v479, %v547
        %v564 = vmax.f32 %v548, 0.0
        %v565 = vmax.f32 %v549, 0.0
        %v566 = vmax.f32 %v550, 0.0
        %v567 = vmax.f32 %v551, 0.0
        %v568 = vmax.f32 %v552, 0.0
        %v569 = vmax.f32 %v553, 0.0
        %v570 = vmax.f32 %v554, 0.0
        %v571 = vmax.f32 %v555, 0.0
        %v572 = vmax.f32 %v556, 0.0
        %v573 = vmax.f32 %v557, 0.0
        %v574 = vmax.f32 %v558, 0.0
        %v575 = vmax.f32 %v559, 0.0
        %v576 = vmax.f32 %v560, 0.0
        %v577 = vmax.f32 %v561, 0.0
        %v578 = vmax.f32 %v562, 0.0
        %v579 = vmax.f32 %v563, 0.0
        %v580 = vld [vmem:[%s3] sm:$0xff]
        %v581 = vld [vmem:[%s3 + $0x8] sm:$0xff]
        %v582 = vld [vmem:[%s3 + $0x10] sm:$0xff]
        %v583 = vld [vmem:[%s3 + $0x18] sm:$0xff]
        %v584 = vld [vmem:[%s4] sm:$0xff]
        %v585 = vld [vmem:[%s4 + $0x8] sm:$0xff]
        %v586 = vld [vmem:[%s4 + $0x10] sm:$0xff]
        %v587 = vld [vmem:[%s4 + $0x18] sm:$0xff]
        %589 = vset.pattern.permute.xlu0 0
        %590 = vperm.xlu0 %589, %v584
        %v591 = vpop.permute.xlu0 %590
        %594 = vset.pattern.permute.xlu0 0
        %595 = vperm.xlu0 %594, %v585
        %v596 = vpop.permute.xlu0 %595
        %599 = vset.pattern.permute.xlu0 0
        %600 = vperm.xlu0 %599, %v586
        %v601 = vpop.permute.xlu0 %600
        %604 = vset.pattern.permute.xlu0 0
        %605 = vperm.xlu0 %604, %v587
        %v606 = vpop.permute.xlu0 %605
        %vm608 = vcmask 261120
        %v610 = vsel %vm608, %v580, 0
        %v613 = vsel %vm608, %v581, 0
        %v616 = vsel %vm608, %v582, 0
        %v619 = vsel %vm608, %v583, 0
        %621 = vmatprep.subr.mxu0 %v565
        %622 = vmatpush1.msra.mxu0 %v564
        %623 = vmatprep.subr.mxu0 %v569
        %624 = vmatpush1.msra.mxu0 %v568
        %625 = vmatprep.subr.mxu0 %v573
        %626 = vmatpush1.msra.mxu0 %v572
        %627 = vmatprep.subr.mxu0 %v577
        %628 = vmatpush1.msra.mxu0 %v576
        %629 = vmatprep.subr.mxu0 0.0
        %630 = vmatpush1.msra.mxu0 0.0
        %631 = vmatprep.subr.mxu0 0.0
        %632 = vmatpush1.msra.mxu0 0.0
        %633 = vmatprep.subr.mxu0 0.0
        %634 = vmatpush1.msra.mxu0 0.0
        %635 = vmatprep.subr.mxu0 0.0
        %636 = vmatpush1.msra.mxu0 0.0
        %637 = vmatprep.subr.mxu0 0.0
        %638 = vmatpush1.msra.mxu0 0.0
        %639 = vmatprep.subr.mxu0 0.0
        %640 = vmatpush1.msra.mxu0 0.0
        %641 = vmatprep.subr.mxu0 0.0
        %642 = vmatpush1.msra.mxu0 0.0
        %643 = vmatprep.subr.mxu0 0.0
        %644 = vmatpush1.msra.mxu0 0.0
        %645 = vmatprep.subr.mxu0 0.0
        %646 = vmatpush1.msra.mxu0 0.0
        %647 = vmatprep.subr.mxu0 0.0
        %648 = vmatpush1.msra.mxu0 0.0
        %649 = vmatprep.subr.mxu0 0.0
        %650 = vmatpush1.msra.mxu0 0.0
        %651 = vmatprep.subr.mxu0 0.0
        %652 = vmatpush1.msra.mxu0 0.0
        %653 = vmatprep.subr.mxu0 0.0
        %654 = vmatpush1.msra.mxu0 0.0
        %655 = vmatprep.subr.mxu0 0.0
        %656 = vmatpush1.msra.mxu0 0.0
        %657 = vmatprep.subr.mxu0 0.0
        %658 = vmatpush1.msra.mxu0 0.0
        %659 = vmatprep.subr.mxu0 0.0
        %660 = vmatpush1.msra.mxu0 0.0
        %661 = vmatprep.subr.mxu0 0.0
        %662 = vmatpush1.msra.mxu0 0.0
        %663 = vmatprep.subr.mxu0 0.0
        %664 = vmatpush1.msra.mxu0 0.0
        %665 = vmatprep.subr.mxu0 0.0
        %666 = vmatpush1.msra.mxu0 0.0
        %667 = vmatprep.subr.mxu0 0.0
        %668 = vmatpush1.msra.mxu0 0.0
        %669 = vmatprep.subr.mxu0 0.0
        %670 = vmatpush1.msra.mxu0 0.0
        %671 = vmatprep.subr.mxu0 0.0
        %672 = vmatpush1.msra.mxu0 0.0
        %673 = vmatprep.subr.mxu0 0.0
        %674 = vmatpush1.msra.mxu0 0.0
        %675 = vmatprep.subr.mxu0 0.0
        %676 = vmatpush1.msra.mxu0 0.0
        %677 = vmatprep.subr.mxu0 0.0
        %678 = vmatpush1.msra.mxu0 0.0
        %679 = vmatprep.subr.mxu0 0.0
        %680 = vmatpush1.msra.mxu0 0.0
        %681 = vmatprep.subr.mxu0 0.0
        %682 = vmatpush1.msra.mxu0 0.0
        %683 = vmatprep.subr.mxu0 0.0
        %684 = vmatpush1.msra.mxu0 0.0
        %685 = vmatprep.mubr.f32.mxu0 0.0
        %686 = vmatmul.mubr.f32.gmra.mrb[0].mxu0 %v610
        %v687 = vpop.f32.mrb[0].mxu0
        %v688 = vadd.f32 %v591, %v687
        %v689 = vpop.f32.mrb[0].mxu0
        %v690 = vadd.f32 %v591, %v689
        %691 = vmatprep.mubr.f32.mxu0 0.0
        %692 = vmatmul.mubr.f32.gmra.mrb[0].mxu0 %v613
        %v693 = vpop.f32.mrb[0].mxu0
        %v694 = vadd.f32 %v596, %v693
        %v695 = vpop.f32.mrb[0].mxu0
        %v696 = vadd.f32 %v596, %v695
        %697 = vmatprep.mubr.f32.mxu0 0.0
        %698 = vmatmul.mubr.f32.gmra.mrb[0].mxu0 %v616
        %v699 = vpop.f32.mrb[0].mxu0
        %v700 = vadd.f32 %v601, %v699
        %v701 = vpop.f32.mrb[0].mxu0
        %v702 = vadd.f32 %v601, %v701
        %703 = vmatprep.mubr.f32.mxu0 0.0
        %704 = vmatmul.mubr.f32.gmra.mrb[0].mxu0 %v619
        %v705 = vpop.f32.mrb[0].mxu0
        %v706 = vadd.f32 %v606, %v705
        %v707 = vpop.f32.mrb[0].mxu0
        %v708 = vadd.f32 %v606, %v707
        %709 = vdwg.mxu0
        %710 = vmatprep.subr.mxu0 %v567
        %711 = vmatpush1.msra.mxu0 %v566
        %712 = vmatprep.subr.mxu0 %v571
        %713 = vmatpush1.msra.mxu0 %v570
        %714 = vmatprep.subr.mxu0 %v575
        %715 = vmatpush1.msra.mxu0 %v574
        %716 = vmatprep.subr.mxu0 %v579
        %717 = vmatpush1.msra.mxu0 %v578
        %718 = vmatprep.subr.mxu0 0.0
        %719 = vmatpush1.msra.mxu0 0.0
        %720 = vmatprep.subr.mxu0 0.0
        %721 = vmatpush1.msra.mxu0 0.0
        %722 = vmatprep.subr.mxu0 0.0
        %723 = vmatpush1.msra.mxu0 0.0
        %724 = vmatprep.subr.mxu0 0.0
        %725 = vmatpush1.msra.mxu0 0.0
        %726 = vmatprep.subr.mxu0 0.0
        %727 = vmatpush1.msra.mxu0 0.0
        %728 = vmatprep.subr.mxu0 0.0
        %729 = vmatpush1.msra.mxu0 0.0
        %730 = vmatprep.subr.mxu0 0.0
        %731 = vmatpush1.msra.mxu0 0.0
        %732 = vmatprep.subr.mxu0 0.0
        %733 = vmatpush1.msra.mxu0 0.0
        %734 = vmatprep.subr.mxu0 0.0
        %735 = vmatpush1.msra.mxu0 0.0
        %736 = vmatprep.subr.mxu0 0.0
        %737 = vmatpush1.msra.mxu0 0.0
        %738 = vmatprep.subr.mxu0 0.0
        %739 = vmatpush1.msra.mxu0 0.0
        %740 = vmatprep.subr.mxu0 0.0
        %741 = vmatpush1.msra.mxu0 0.0
        %742 = vmatprep.subr.mxu0 0.0
        %743 = vmatpush1.msra.mxu0 0.0
        %744 = vmatprep.subr.mxu0 0.0
        %745 = vmatpush1.msra.mxu0 0.0
        %746 = vmatprep.subr.mxu0 0.0
        %747 = vmatpush1.msra.mxu0 0.0
        %748 = vmatprep.subr.mxu0 0.0
        %749 = vmatpush1.msra.mxu0 0.0
        %750 = vmatprep.subr.mxu0 0.0
        %751 = vmatpush1.msra.mxu0 0.0
        %752 = vmatprep.subr.mxu0 0.0
        %753 = vmatpush1.msra.mxu0 0.0
        %754 = vmatprep.subr.mxu0 0.0
        %755 = vmatpush1.msra.mxu0 0.0
        %756 = vmatprep.subr.mxu0 0.0
        %757 = vmatpush1.msra.mxu0 0.0
        %758 = vmatprep.subr.mxu0 0.0
        %759 = vmatpush1.msra.mxu0 0.0
        %760 = vmatprep.subr.mxu0 0.0
        %761 = vmatpush1.msra.mxu0 0.0
        %762 = vmatprep.subr.mxu0 0.0
        %763 = vmatpush1.msra.mxu0 0.0
        %764 = vmatprep.subr.mxu0 0.0
        %765 = vmatpush1.msra.mxu0 0.0
        %766 = vmatprep.subr.mxu0 0.0
        %767 = vmatpush1.msra.mxu0 0.0
        %768 = vmatprep.subr.mxu0 0.0
        %769 = vmatpush1.msra.mxu0 0.0
        %770 = vmatprep.subr.mxu0 0.0
        %771 = vmatpush1.msra.mxu0 0.0
        %772 = vmatprep.subr.mxu0 0.0
        %773 = vmatpush1.msra.mxu0 0.0
        %774 = vmatprep.mubr.f32.mxu0 0.0
        %775 = vmatmul.mubr.f32.gmra.mrb[0].mxu0 %v610
        %v776 = vpop.f32.mrb[0].mxu0
        %v777 = vadd.f32 %v591, %v776
        %v778 = vpop.f32.mrb[0].mxu0
        %v779 = vadd.f32 %v591, %v778
        %780 = vmatprep.mubr.f32.mxu0 0.0
        %781 = vmatmul.mubr.f32.gmra.mrb[0].mxu0 %v613
        %v782 = vpop.f32.mrb[0].mxu0
        %v783 = vadd.f32 %v596, %v782
        %v784 = vpop.f32.mrb[0].mxu0
        %v785 = vadd.f32 %v596, %v784
        %786 = vmatprep.mubr.f32.mxu0 0.0
        %787 = vmatmul.mubr.f32.gmra.mrb[0].mxu0 %v616
        %v788 = vpop.f32.mrb[0].mxu0
        %v789 = vadd.f32 %v601, %v788
        %v790 = vpop.f32.mrb[0].mxu0
        %v791 = vadd.f32 %v601, %v790
        %792 = vmatprep.mubr.f32.mxu0 0.0
        %793 = vmatmul.mubr.f32.gmra.mrb[0].mxu0 %v619
        %v794 = vpop.f32.mrb[0].mxu0
        %v795 = vadd.f32 %v606, %v794
        %v796 = vpop.f32.mrb[0].mxu0
        %v797 = vadd.f32 %v606, %v796
        %798 = vdwg.mxu0
        %v799 = vld [vmem:[%s5] sm:$0xff]
        %v800 = vld [vmem:[%s5 + $0x8] sm:$0xff]
        %v801 = vld [vmem:[%s5 + $0x10] sm:$0xff]
        %v802 = vld [vmem:[%s5 + $0x18] sm:$0xff]
        %v803 = vld [vmem:[%s6] sm:$0xff]
        %v804 = vld [vmem:[%s6 + $0x8] sm:$0xff]
        %v805 = vld [vmem:[%s6 + $0x10] sm:$0xff]
        %v806 = vld [vmem:[%s6 + $0x18] sm:$0xff]
        %808 = vset.pattern.permute.xlu0 0
        %809 = vperm.xlu0 %808, %v803
        %v810 = vpop.permute.xlu0 %809
        %813 = vset.pattern.permute.xlu0 0
        %814 = vperm.xlu0 %813, %v804
        %v815 = vpop.permute.xlu0 %814
        %818 = vset.pattern.permute.xlu0 0
        %819 = vperm.xlu0 %818, %v805
        %v820 = vpop.permute.xlu0 %819
        %823 = vset.pattern.permute.xlu0 0
        %824 = vperm.xlu0 %823, %v806
        %v825 = vpop.permute.xlu0 %824
        %v828 = vsel %vm608, %v799, 0
        %v831 = vsel %vm608, %v800, 0
        %v834 = vsel %vm608, %v801, 0
        %v837 = vsel %vm608, %v802, 0
        %839 = vmatprep.subr.mxu0 %v690
        %840 = vmatpush1.msra.mxu0 %v688
        %841 = vmatprep.subr.mxu0 %v696
        %842 = vmatpush1.msra.mxu0 %v694
        %843 = vmatprep.subr.mxu0 %v702
        %844 = vmatpush1.msra.mxu0 %v700
        %845 = vmatprep.subr.mxu0 %v708
        %846 = vmatpush1.msra.mxu0 %v706
        %847 = vmatprep.subr.mxu0 0.0
        %848 = vmatpush1.msra.mxu0 0.0
        %849 = vmatprep.subr.mxu0 0.0
        %850 = vmatpush1.msra.mxu0 0.0
        %851 = vmatprep.subr.mxu0 0.0
        %852 = vmatpush1.msra.mxu0 0.0
        %853 = vmatprep.subr.mxu0 0.0
        %854 = vmatpush1.msra.mxu0 0.0
        %855 = vmatprep.subr.mxu0 0.0
        %856 = vmatpush1.msra.mxu0 0.0
        %857 = vmatprep.subr.mxu0 0.0
        %858 = vmatpush1.msra.mxu0 0.0
        %859 = vmatprep.subr.mxu0 0.0
        %860 = vmatpush1.msra.mxu0 0.0
        %861 = vmatprep.subr.mxu0 0.0
        %862 = vmatpush1.msra.mxu0 0.0
        %863 = vmatprep.subr.mxu0 0.0
        %864 = vmatpush1.msra.mxu0 0.0
        %865 = vmatprep.subr.mxu0 0.0
        %866 = vmatpush1.msra.mxu0 0.0
        %867 = vmatprep.subr.mxu0 0.0
        %868 = vmatpush1.msra.mxu0 0.0
        %869 = vmatprep.subr.mxu0 0.0
        %870 = vmatpush1.msra.mxu0 0.0
        %871 = vmatprep.subr.mxu0 0.0
        %872 = vmatpush1.msra.mxu0 0.0
        %873 = vmatprep.subr.mxu0 0.0
        %874 = vmatpush1.msra.mxu0 0.0
        %875 = vmatprep.subr.mxu0 0.0
        %876 = vmatpush1.msra.mxu0 0.0
        %877 = vmatprep.subr.mxu0 0.0
        %878 = vmatpush1.msra.mxu0 0.0
        %879 = vmatprep.subr.mxu0 0.0
        %880 = vmatpush1.msra.mxu0 0.0
        %881 = vmatprep.subr.mxu0 0.0
        %882 = vmatpush1.msra.mxu0 0.0
        %883 = vmatprep.subr.mxu0 0.0
        %884 = vmatpush1.msra.mxu0 0.0
        %885 = vmatprep.subr.mxu0 0.0
        %886 = vmatpush1.msra.mxu0 0.0
        %887 = vmatprep.subr.mxu0 0.0
        %888 = vmatpush1.msra.mxu0 0.0
        %889 = vmatprep.subr.mxu0 0.0
        %890 = vmatpush1.msra.mxu0 0.0
        %891 = vmatprep.subr.mxu0 0.0
        %892 = vmatpush1.msra.mxu0 0.0
        %893 = vmatprep.subr.mxu0 0.0
        %894 = vmatpush1.msra.mxu0 0.0
        %895 = vmatprep.subr.mxu0 0.0
        %896 = vmatpush1.msra.mxu0 0.0
        %897 = vmatprep.subr.mxu0 0.0
        %898 = vmatpush1.msra.mxu0 0.0
        %899 = vmatprep.subr.mxu0 0.0
        %900 = vmatpush1.msra.mxu0 0.0
        %901 = vmatprep.subr.mxu0 0.0
        %902 = vmatpush1.msra.mxu0 0.0
        %903 = vmatprep.mubr.f32.mxu0 0.0
        %904 = vmatmul.mubr.f32.gmra.mrb[0].mxu0 %v828
        %v905 = vpop.f32.mrb[0].mxu0
        %v906 = vadd.f32 %v810, %v905
        %v907 = vpop.f32.mrb[0].mxu0
        %v908 = vadd.f32 %v810, %v907
        %909 = vmatprep.mubr.f32.mxu0 0.0
        %910 = vmatmul.mubr.f32.gmra.mrb[0].mxu0 %v831
        %v911 = vpop.f32.mrb[0].mxu0
        %v912 = vadd.f32 %v815, %v911
        %v913 = vpop.f32.mrb[0].mxu0
        %v914 = vadd.f32 %v815, %v913
        %915 = vmatprep.mubr.f32.mxu0 0.0
        %916 = vmatmul.mubr.f32.gmra.mrb[0].mxu0 %v834
        %v917 = vpop.f32.mrb[0].mxu0
        %v918 = vadd.f32 %v820, %v917
        %v919 = vpop.f32.mrb[0].mxu0
        %v920 = vadd.f32 %v820, %v919
        %921 = vmatprep.mubr.f32.mxu0 0.0
        %922 = vmatmul.mubr.f32.gmra.mrb[0].mxu0 %v837
        %v923 = vpop.f32.mrb[0].mxu0
        %v924 = vadd.f32 %v825, %v923
        %v925 = vpop.f32.mrb[0].mxu0
        %v926 = vadd.f32 %v825, %v925
        %927 = vdwg.mxu0
        %928 = vmatprep.subr.mxu0 %v779
        %929 = vmatpush1.msra.mxu0 %v777
        %930 = vmatprep.subr.mxu0 %v785
        %931 = vmatpush1.msra.mxu0 %v783
        %932 = vmatprep.subr.mxu0 %v791
        %933 = vmatpush1.msra.mxu0 %v789
        %934 = vmatprep.subr.mxu0 %v797
        %935 = vmatpush1.msra.mxu0 %v795
        %936 = vmatprep.subr.mxu0 0.0
        %937 = vmatpush1.msra.mxu0 0.0
        %938 = vmatprep.subr.mxu0 0.0
        %939 = vmatpush1.msra.mxu0 0.0
        %940 = vmatprep.subr.mxu0 0.0
        %941 = vmatpush1.msra.mxu0 0.0
        %942 = vmatprep.subr.mxu0 0.0
        %943 = vmatpush1.msra.mxu0 0.0
        %944 = vmatprep.subr.mxu0 0.0
        %945 = vmatpush1.msra.mxu0 0.0
        %946 = vmatprep.subr.mxu0 0.0
        %947 = vmatpush1.msra.mxu0 0.0
        %948 = vmatprep.subr.mxu0 0.0
        %949 = vmatpush1.msra.mxu0 0.0
        %950 = vmatprep.subr.mxu0 0.0
        %951 = vmatpush1.msra.mxu0 0.0
        %952 = vmatprep.subr.mxu0 0.0
        %953 = vmatpush1.msra.mxu0 0.0
        %954 = vmatprep.subr.mxu0 0.0
        %955 = vmatpush1.msra.mxu0 0.0
        %956 = vmatprep.subr.mxu0 0.0
        %957 = vmatpush1.msra.mxu0 0.0
        %958 = vmatprep.subr.mxu0 0.0
        %959 = vmatpush1.msra.mxu0 0.0
        %960 = vmatprep.subr.mxu0 0.0
        %961 = vmatpush1.msra.mxu0 0.0
        %962 = vmatprep.subr.mxu0 0.0
        %963 = vmatpush1.msra.mxu0 0.0
        %964 = vmatprep.subr.mxu0 0.0
        %965 = vmatpush1.msra.mxu0 0.0
        %966 = vmatprep.subr.mxu0 0.0
        %967 = vmatpush1.msra.mxu0 0.0
        %968 = vmatprep.subr.mxu0 0.0
        %969 = vmatpush1.msra.mxu0 0.0
        %970 = vmatprep.subr.mxu0 0.0
        %971 = vmatpush1.msra.mxu0 0.0
        %972 = vmatprep.subr.mxu0 0.0
        %973 = vmatpush1.msra.mxu0 0.0
        %974 = vmatprep.subr.mxu0 0.0
        %975 = vmatpush1.msra.mxu0 0.0
        %976 = vmatprep.subr.mxu0 0.0
        %977 = vmatpush1.msra.mxu0 0.0
        %978 = vmatprep.subr.mxu0 0.0
        %979 = vmatpush1.msra.mxu0 0.0
        %980 = vmatprep.subr.mxu0 0.0
        %981 = vmatpush1.msra.mxu0 0.0
        %982 = vmatprep.subr.mxu0 0.0
        %983 = vmatpush1.msra.mxu0 0.0
        %984 = vmatprep.subr.mxu0 0.0
        %985 = vmatpush1.msra.mxu0 0.0
        %986 = vmatprep.subr.mxu0 0.0
        %987 = vmatpush1.msra.mxu0 0.0
        %988 = vmatprep.subr.mxu0 0.0
        %989 = vmatpush1.msra.mxu0 0.0
        %990 = vmatprep.subr.mxu0 0.0
        %991 = vmatpush1.msra.mxu0 0.0
        %992 = vmatprep.mubr.f32.mxu0 0.0
        %993 = vmatmul.mubr.f32.gmra.mrb[0].mxu0 %v828
        %v994 = vpop.f32.mrb[0].mxu0
        %v995 = vadd.f32 %v810, %v994
        %v996 = vpop.f32.mrb[0].mxu0
        %v997 = vadd.f32 %v810, %v996
        %998 = vmatprep.mubr.f32.mxu0 0.0
        %999 = vmatmul.mubr.f32.gmra.mrb[0].mxu0 %v831
        %v1000 = vpop.f32.mrb[0].mxu0
        %v1001 = vadd.f32 %v815, %v1000
        %v1002 = vpop.f32.mrb[0].mxu0
        %v1003 = vadd.f32 %v815, %v1002
        %1004 = vmatprep.mubr.f32.mxu0 0.0
        %1005 = vmatmul.mubr.f32.gmra.mrb[0].mxu0 %v834
        %v1006 = vpop.f32.mrb[0].mxu0
        %v1007 = vadd.f32 %v820, %v1006
        %v1008 = vpop.f32.mrb[0].mxu0
        %v1009 = vadd.f32 %v820, %v1008
        %1010 = vmatprep.mubr.f32.mxu0 0.0
        %1011 = vmatmul.mubr.f32.gmra.mrb[0].mxu0 %v837
        %v1012 = vpop.f32.mrb[0].mxu0
        %v1013 = vadd.f32 %v825, %v1012
        %v1014 = vpop.f32.mrb[0].mxu0
        %v1015 = vadd.f32 %v825, %v1014
        %1016 = vdwg.mxu0
        %1017 = vst [vmem:[%s268] sm:$0xff] %v906
        %1018 = vst [vmem:[%s268 + $0x8] sm:$0xff] %v908
        %1019 = vst [vmem:[%s268 + $0x10] sm:$0xff] %v995
        %1020 = vst [vmem:[%s268 + $0x18] sm:$0xff] %v997
        %1021 = vst [vmem:[%s268 + $0x20] sm:$0xff] %v912
        %1022 = vst [vmem:[%s268 + $0x28] sm:$0xff] %v914
        %1023 = vst [vmem:[%s268 + $0x30] sm:$0xff] %v1001
        %1024 = vst [vmem:[%s268 + $0x38] sm:$0xff] %v1003
        %1025 = vst [vmem:[%s268 + $0x40] sm:$0xff] %v918
        %1026 = vst [vmem:[%s268 + $0x48] sm:$0xff] %v920
        %1027 = vst [vmem:[%s268 + $0x50] sm:$0xff] %v1007
        %1028 = vst [vmem:[%s268 + $0x58] sm:$0xff] %v1009
        %1029 = vst [vmem:[%s268 + $0x60] sm:$0xff] %v924
        %1030 = vst [vmem:[%s268 + $0x68] sm:$0xff] %v926
        %1031 = vst [vmem:[%s268 + $0x70] sm:$0xff] %v1013
        %1032 = vst [vmem:[%s268 + $0x78] sm:$0xff] %v1015
        %s1033 = sand.u32 %s178, 1
        %s1034 = sand.u32 %s178, 1
        %s1035 = smul.addr %s1034, 128
        %s1036 = scalar_lea.vmem [#allocation2], %s1035
        // Predicated region
        $region49: #{subclass_camera_forward.3} parent=47 // pred_check
          %p1037 = pneg %p188
        $region50: #{subclass_camera_forward.3} parent=47 // pred_check_branch
          %1039 = sbr.rel (%p1037) target = $region52
        $region51: #{subclass_camera_forward.3} parent=47 // pred_region
          %s1040 = smul.u32 4, %s18
          %s1041 = smul.addr %s1040, 8
          %s1042 = scalar_lea.vmem %s7, %s1041
          // Predicated region
          $region53: #{subclass_camera_forward.3} parent=51 // pred_check
            _
          $region54: #{subclass_camera_forward.3} parent=51 // pred_check_branch
            %1044 = sbr.rel (0) target = $region56
          $region55: #{subclass_camera_forward.3} parent=51 // pred_region
            // Predicated region
            $region57: #{subclass_camera_forward.3} parent=55 // pred_check
              _
            $region58: #{subclass_camera_forward.3} parent=55 // pred_check_branch
              %1046 = sbr.rel (0) target = $region60
            $region59: #{subclass_camera_forward.3} parent=55 // pred_region
              loop: start=0, step=1, limit=1
              $region61: #{subclass_camera_forward.3} parent=59 // loop_pre_header
                _
              $region62: #{subclass_camera_forward.3} parent=59 // loop_header
                %s1048 = sphi 0, %s1052
                %p1049 = scmp.ge.s32.totalorder %s1048, 1
                %s1053 = sphi %s1036, %s1036
                %s1054 = sphi %s1042, %s1042
              $region63: #{subclass_camera_forward.3} parent=59 // loop_header_branch
                %1051 = sbr.rel (%p1049) target = $region67
              $region64: #{subclass_camera_forward.3} parent=59 // loop_body
                %v1055 = vld [vmem:[%s1053] sm:$0xff]
                %1056 = vst [vmem:[%s1054] sm:$0xff] %v1055
                %v1057 = vld [vmem:[%s1053 + $0x8] sm:$0xff]
                %1058 = vst [vmem:[%s1054 + $0x8] sm:$0xff] %v1057
                %v1059 = vld [vmem:[%s1053 + $0x10] sm:$0xff]
                %1060 = vst [vmem:[%s1054 + $0x10] sm:$0xff] %v1059
                %v1061 = vld [vmem:[%s1053 + $0x18] sm:$0xff]
                %1062 = vst [vmem:[%s1054 + $0x18] sm:$0xff] %v1061
                %v1063 = vld [vmem:[%s1053 + $0x20] sm:$0xff]
                %1064 = vst [vmem:[%s1054 + $0x40] sm:$0xff] %v1063
                %v1065 = vld [vmem:[%s1053 + $0x28] sm:$0xff]
                %1066 = vst [vmem:[%s1054 + $0x48] sm:$0xff] %v1065
                %v1067 = vld [vmem:[%s1053 + $0x30] sm:$0xff]
                %1068 = vst [vmem:[%s1054 + $0x50] sm:$0xff] %v1067
                %v1069 = vld [vmem:[%s1053 + $0x38] sm:$0xff]
                %1070 = vst [vmem:[%s1054 + $0x58] sm:$0xff] %v1069
                %v1071 = vld [vmem:[%s1053 + $0x40] sm:$0xff]
                %1072 = vst [vmem:[%s1054 + $0x80] sm:$0xff] %v1071
                %v1073 = vld [vmem:[%s1053 + $0x48] sm:$0xff]
                %1074 = vst [vmem:[%s1054 + $0x88] sm:$0xff] %v1073
                %v1075 = vld [vmem:[%s1053 + $0x50] sm:$0xff]
                %1076 = vst [vmem:[%s1054 + $0x90] sm:$0xff] %v1075
                %v1077 = vld [vmem:[%s1053 + $0x58] sm:$0xff]
                %1078 = vst [vmem:[%s1054 + $0x98] sm:$0xff] %v1077
                %v1079 = vld [vmem:[%s1053 + $0x60] sm:$0xff]
                %1080 = vst [vmem:[%s1054 + $0xc0] sm:$0xff] %v1079
                %v1081 = vld [vmem:[%s1053 + $0x68] sm:$0xff]
                %1082 = vst [vmem:[%s1054 + $0xc8] sm:$0xff] %v1081
                %v1083 = vld [vmem:[%s1053 + $0x70] sm:$0xff]
                %1084 = vst [vmem:[%s1054 + $0xd0] sm:$0xff] %v1083
                %v1085 = vld [vmem:[%s1053 + $0x78] sm:$0xff]
                %1086 = vst [vmem:[%s1054 + $0xd8] sm:$0xff] %v1085
              $region65: #{subclass_camera_forward.3} parent=59 // loop_footer
                %s1052 = sadd.s32 1, %s1048
              $region66: #{subclass_camera_forward.3} parent=59 // loop_footer_branch
                %1047 = sbr.rel target = $region62
              $region67: #{subclass_camera_forward.3} parent=59 // loop_exit
                _
            $region60: #{subclass_camera_forward.3} parent=55 // pred_fallthru
              _
            // Predicated region
            $region68: #{subclass_camera_forward.3} parent=55 // pred_check
              _
            $region69: #{subclass_camera_forward.3} parent=55 // pred_check_branch
              %1088 = sbr.rel target = $region71
            $region70: #{subclass_camera_forward.3} parent=55 // pred_region
              _
            $region71: #{subclass_camera_forward.3} parent=55 // pred_fallthru
              _
          $region56: #{subclass_camera_forward.3} parent=51 // pred_fallthru
            _
          %1089 = vnop
        $region52: #{subclass_camera_forward.3} parent=47 // pred_fallthru
          _
      $region48: #{subclass_camera_forward.3} parent=5 // pred_fallthru
        _
      %p1090 = scmp.le.s32.totalorder 2, %s13
      // Predicated region
      $region72: #{subclass_camera_forward.3} parent=5 // pred_check
        %p1091 = pneg %p1090
      $region73: #{subclass_camera_forward.3} parent=5 // pred_check_branch
        %1093 = sbr.rel (%p1091) target = $region75
      $region74: #{subclass_camera_forward.3} parent=5 // pred_region
        %s1094 = ssub.s32 %s13, 2
        // Predicated region
        $region76: #{subclass_camera_forward.3} parent=74 // pred_check
          %p1095 = pneg %p194
        $region77: #{subclass_camera_forward.3} parent=74 // pred_check_branch
          %1097 = sbr.rel (%p1095) target = $region79
        $region78: #{subclass_camera_forward.3} parent=74 // pred_region
          %s1098 = sand.u32 %s179, 1
          %s1099 = sand.u32 %s179, 1
          %s1100 = smul.addr %s1099, 128
          %s1101 = scalar_lea.vmem [#allocation2], %s1100
        $region79: #{subclass_camera_forward.3} parent=74 // pred_fallthru
          _
      $region75: #{subclass_camera_forward.3} parent=5 // pred_fallthru
        _
    $region6: #{subclass_camera_forward.3} parent=1 // loop_footer
      %s17 = sadd.s32 1, %s13
    $region7: #{subclass_camera_forward.3} parent=1 // loop_footer_branch
      %12 = sbr.rel target = $region3
    $region8: #{subclass_camera_forward.3} parent=1 // loop_exit
      _

// kernel: subclass_camera_forward.4
$region0: #{subclass_camera_forward.4}
  #allocation0 [shape = 'u32[]', space=smem, size = 0x4, offset = 0x4, fixed_abs, tag = 'smem constant byte address 0x4 - core index']
  #allocation1 [shape = 'u32[144,128]{1,0:T(1,128)}', space=vmem, size = 0x12000, scoped, tag = 'internal scratch']
  #allocation2 [shape = 'f32[32,128]{1,0:T(8,128)}', space=vmem, size = 0x4000, scoped, tag = 'scratch operand']
  %s0 = inlined_call_operand.vmem [shape: f32[2,3,128], index: 0, kind: input, shape index: {}]
  %s1 = inlined_call_operand.vmem [shape: f32[2,32,512], index: 1, kind: input, shape index: {}]
  %s2 = inlined_call_operand.vmem [shape: f32[2,32,128], index: 2, kind: output, shape index: {}]
  %s3 = sld [smem:[#allocation0]]
  $region87: #{subclass_camera_forward.4} parent=0
    _
  %s5 = ssub.s32 1, %s3
  %s6 = scalar_select 0, %s5, %s3
  $region1: #{subclass_camera_forward.4} parent=0
    #allocation3 [shape = 'u8[32768]{0}', space=vmem, size = 0x8000, scoped, tag = 'input window, operand 1']
    loop: start=0, step=1, limit=10
    $region2: #{subclass_camera_forward.4} parent=1 // loop_pre_header
      _
    $region3: #{subclass_camera_forward.4} parent=1 // loop_header
      %s8 = sphi 0, %s12
      %p9 = scmp.ge.s32.totalorder %s8, 10
      %s15 = sphi 0, %s27
      %s16 = sphi 0, %s23
      %s17 = sphi 0, %s15
      %s18 = sphi 0, %s16
      %s19 = sphi 0, %s17
      %s20 = sphi 0, %s18
      %s30 = sphi 0, %s32
      %s33 = sphi 0, %s30
      %s34 = sphi 0, %s33
      %s50 = sphi 0, %s34
      %s58 = sphi 0, %s60
      %s61 = sphi 0, %s58
      %s62 = sphi 0, %s61
      %s78 = sphi 0, %s62
      %s84 = sphi 0, %s86
      %s87 = sphi 0, %s84
      %s88 = sphi 0, %s87
      %s104 = sphi 0, %s88
    $region4: #{subclass_camera_forward.4} parent=1 // loop_header_branch
      %11 = sbr.rel (%p9) target = $region8
    $region5: #{subclass_camera_forward.4} parent=1 // loop_body
      %s13 = ssub.s32 %s8, 1
      %s14 = ssub.s32 %s8, 2
      %s21 = sadd.s32 1, %s16
      %p22 = scmp.ge.s32.totalorder %s21, 4
      %s23 = scalar_select %p22, 0, %s21
      %s24 = sadd.s32 1, %s15
      %s25 = scalar_select %p22, %s24, %s15
      %p26 = scmp.ge.s32.totalorder %s25, 2
      %s27 = scalar_select %p26, 0, %s25
      %s28 = ssub.s32 %s15, %s27
      %p29 = scmp.eq.s32.totalorder %s28, 0
      %s31 = sadd.s32 %s30, 1
      %s32 = scalar_select %p29, %s30, %s31
      %p35 = pneg %p29
      %p36 = scmp.eq.s32.totalorder %s8, 7
      %p37 = por %p35, %p36
      %p38 = scmp.ne.s32.totalorder %s30, %s33
      %p39 = scmp.eq.s32.totalorder %s8, 0
      %p40 = por %p38, %p39
      %p41 = scmp.ne.s32.totalorder %s30, %s33
      %p42 = scmp.eq.s32.totalorder %s13, 7
      %p43 = por %p41, %p42
      %p44 = scmp.ne.s32.totalorder %s33, %s34
      %p45 = scmp.eq.s32.totalorder %s13, 0
      %p46 = por %p44, %p45
      %p47 = scmp.ne.s32.totalorder %s33, %s34
      %p48 = scmp.eq.s32.totalorder %s14, 7
      %p49 = por %p47, %p48
      %p51 = scmp.ne.s32.totalorder %s34, %s50
      %p52 = scmp.eq.s32.totalorder %s14, 0
      %p53 = por %p51, %p52
      %s54 = ssub.s32 %s15, %s27
      %s55 = ssub.s32 %s16, %s23
      %s56 = sor.u32 %s54, %s55
      %p57 = scmp.eq.s32.totalorder %s56, 0
      %s59 = sadd.s32 %s58, 1
      %s60 = scalar_select %p57, %s58, %s59
      %p63 = pneg %p57
      %p64 = scmp.eq.s32.totalorder %s8, 7
      %p65 = por %p63, %p64
      %p66 = scmp.ne.s32.totalorder %s58, %s61
      %p67 = scmp.eq.s32.totalorder %s8, 0
      %p68 = por %p66, %p67
      %p69 = scmp.ne.s32.totalorder %s58, %s61
      %p70 = scmp.eq.s32.totalorder %s13, 7
      %p71 = por %p69, %p70
      %p72 = scmp.ne.s32.totalorder %s61, %s62
      %p73 = scmp.eq.s32.totalorder %s13, 0
      %p74 = por %p72, %p73
      %p75 = scmp.ne.s32.totalorder %s61, %s62
      %p76 = scmp.eq.s32.totalorder %s14, 7
      %p77 = por %p75, %p76
      %p79 = scmp.ne.s32.totalorder %s62, %s78
      %p80 = scmp.eq.s32.totalorder %s14, 0
      %p81 = por %p79, %p80
      %s82 = ssub.s32 %s15, %s27
      %p83 = scmp.eq.s32.totalorder %s82, 0
      %s85 = sadd.s32 %s84, 1
      %s86 = scalar_select %p83, %s84, %s85
      %p89 = pneg %p83
      %p90 = scmp.eq.s32.totalorder %s8, 7
      %p91 = por %p89, %p90
      %p92 = scmp.ne.s32.totalorder %s84, %s87
      %p93 = scmp.eq.s32.totalorder %s8, 0
      %p94 = por %p92, %p93
      %p95 = scmp.ne.s32.totalorder %s84, %s87
      %p96 = scmp.eq.s32.totalorder %s13, 7
      %p97 = por %p95, %p96
      %p98 = scmp.ne.s32.totalorder %s87, %s88
      %p99 = scmp.eq.s32.totalorder %s13, 0
      %p100 = por %p98, %p99
      %p101 = scmp.ne.s32.totalorder %s87, %s88
      %p102 = scmp.eq.s32.totalorder %s14, 7
      %p103 = por %p101, %p102
      %p105 = scmp.ne.s32.totalorder %s88, %s104
      %p106 = scmp.eq.s32.totalorder %s14, 0
      %p107 = por %p105, %p106
      %p108 = scmp.le.s32.totalorder 1, %s8
      %p109 = scmp.lt.s32.totalorder %s8, 9
      %p110 = pnand %p108, %p109
      %p111 = pneg %p110
      // Predicated region
      $region9: #{subclass_camera_forward.4} parent=5 // pred_check
        _
      $region10: #{subclass_camera_forward.4} parent=5 // pred_check_branch
        %113 = sbr.rel (%p110) target = $region12
      $region11: #{subclass_camera_forward.4} parent=5 // pred_region
        %s114 = ssub.s32 %s8, 1
      $region12: #{subclass_camera_forward.4} parent=5 // pred_fallthru
        _
      %p115 = scmp.lt.s32.totalorder %s8, 8
      // Predicated region
      $region13: #{subclass_camera_forward.4} parent=5 // pred_check
        %p116 = pneg %p115
      $region14: #{subclass_camera_forward.4} parent=5 // pred_check_branch
        %118 = sbr.rel (%p116) target = $region16
      $region15: #{subclass_camera_forward.4} parent=5 // pred_region
        // Predicated region
        $region17: #{subclass_camera_forward.4} parent=15 // pred_check
          %p119 = pneg %p40
        $region18: #{subclass_camera_forward.4} parent=15 // pred_check_branch
          %121 = sbr.rel (%p119) target = $region20
        $region19: #{subclass_camera_forward.4} parent=15 // pred_region
          %p122 = scmp.lt.s32.totalorder %s15, 1
          %s123 = scalar_select %p122, %s15, 1
          %s124 = smul.addr %s123, 4
          %s125 = scalar_lea.vmem %s0, %s124
        $region20: #{subclass_camera_forward.4} parent=15 // pred_fallthru
          _
        // Predicated region
        $region21: #{subclass_camera_forward.4} parent=15 // pred_check
          %p126 = pneg %p68
        $region22: #{subclass_camera_forward.4} parent=15 // pred_check_branch
          %128 = sbr.rel (%p126) target = $region24
        $region23: #{subclass_camera_forward.4} parent=15 // pred_region
          %s129 = sand.u32 %s58, 1
          %s130 = sand.u32 %s58, 1
          %s131 = smul.addr %s130, 32
          %s132 = scalar_lea.vmem [#allocation3], %s131
          %s133 = smul.addr %s15, 16
          %s134 = sadd.s32 %s16, %s133
          %s135 = smul.addr %s134, 8
          %s136 = scalar_lea.vmem %s1, %s135
          // Predicated region
          $region25: #{subclass_camera_forward.4} parent=23 // pred_check
            _
          $region26: #{subclass_camera_forward.4} parent=23 // pred_check_branch
            %138 = sbr.rel (0) target = $region28
          $region27: #{subclass_camera_forward.4} parent=23 // pred_region
            // Predicated region
            $region29: #{subclass_camera_forward.4} parent=27 // pred_check
              _
            $region30: #{subclass_camera_forward.4} parent=27 // pred_check_branch
              %140 = sbr.rel (0) target = $region32
            $region31: #{subclass_camera_forward.4} parent=27 // pred_region
              // Predicated region
              $region44: #{subclass_camera_forward.4} parent=31 // pred_check
                _
              $region45: #{subclass_camera_forward.4} parent=31 // pred_check_branch
                %161 = sbr.rel (0) target = $region47
              $region46: #{subclass_camera_forward.4} parent=31 // pred_region
                loop: start=0, step=1, limit=1
                $region48: #{subclass_camera_forward.4} parent=46 // loop_pre_header
                  _
                $region49: #{subclass_camera_forward.4} parent=46 // loop_header
                  %s163 = sphi 0, %s167
                  %p164 = scmp.ge.s32.totalorder %s163, 1
                  %s168 = sphi %s136, %s136
                  %s169 = sphi %s132, %s132
                $region50: #{subclass_camera_forward.4} parent=46 // loop_header_branch
                  %166 = sbr.rel (%p164) target = $region54
                $region51: #{subclass_camera_forward.4} parent=46 // loop_body
                  %v170 = vld [vmem:[%s168] sm:$0xff]
                  %171 = vst [vmem:[%s169] sm:$0xff] %v170
                  %v172 = vld [vmem:[%s168 + $0x20] sm:$0xff]
                  %173 = vst [vmem:[%s169 + $0x8] sm:$0xff] %v172
                  %v174 = vld [vmem:[%s168 + $0x40] sm:$0xff]
                  %175 = vst [vmem:[%s169 + $0x10] sm:$0xff] %v174
                  %v176 = vld [vmem:[%s168 + $0x60] sm:$0xff]
                  %177 = vst [vmem:[%s169 + $0x18] sm:$0xff] %v176
                $region52: #{subclass_camera_forward.4} parent=46 // loop_footer
                  %s167 = sadd.s32 1, %s163
                $region53: #{subclass_camera_forward.4} parent=46 // loop_footer_branch
                  %162 = sbr.rel target = $region49
                $region54: #{subclass_camera_forward.4} parent=46 // loop_exit
                  _
              $region47: #{subclass_camera_forward.4} parent=31 // pred_fallthru
                _
              // Predicated region
              $region55: #{subclass_camera_forward.4} parent=31 // pred_check
                _
              $region56: #{subclass_camera_forward.4} parent=31 // pred_check_branch
                %179 = sbr.rel target = $region58
              $region57: #{subclass_camera_forward.4} parent=31 // pred_region
                _
              $region58: #{subclass_camera_forward.4} parent=31 // pred_fallthru
                _
            $region32: #{subclass_camera_forward.4} parent=27 // pred_fallthru
              _
            // Predicated region
            $region33: #{subclass_camera_forward.4} parent=27 // pred_check
              _
            $region34: #{subclass_camera_forward.4} parent=27 // pred_check_branch
              %142 = sbr.rel target = $region36
            $region35: #{subclass_camera_forward.4} parent=27 // pred_region
              loop: start=0, step=1, limit=1
              $region37: #{subclass_camera_forward.4} parent=35 // loop_pre_header
                _
              $region38: #{subclass_camera_forward.4} parent=35 // loop_header
                %s145 = sphi 0, %s149
                %p146 = scmp.ge.s32.totalorder %s145, 1
                %s150 = sphi %s136, %s136
                %s151 = sphi %s132, %s132
              $region39: #{subclass_camera_forward.4} parent=35 // loop_header_branch
                %148 = sbr.rel (%p146) target = $region43
              $region40: #{subclass_camera_forward.4} parent=35 // loop_body
                %v152 = vld [vmem:[%s150] sm:$0xff]
                %153 = vst [vmem:[%s151] sm:$0xff] %v152
                %v154 = vld [vmem:[%s150 + $0x20] sm:$0xff]
                %155 = vst [vmem:[%s151 + $0x8] sm:$0xff] %v154
                %v156 = vld [vmem:[%s150 + $0x40] sm:$0xff]
                %157 = vst [vmem:[%s151 + $0x10] sm:$0xff] %v156
                %v158 = vld [vmem:[%s150 + $0x60] sm:$0xff]
                %159 = vst [vmem:[%s151 + $0x18] sm:$0xff] %v158
              $region41: #{subclass_camera_forward.4} parent=35 // loop_footer
                %s149 = sadd.s32 1, %s145
              $region42: #{subclass_camera_forward.4} parent=35 // loop_footer_branch
                %144 = sbr.rel target = $region38
              $region43: #{subclass_camera_forward.4} parent=35 // loop_exit
                _
            $region36: #{subclass_camera_forward.4} parent=27 // pred_fallthru
              _
          $region28: #{subclass_camera_forward.4} parent=23 // pred_fallthru
            _
          %180 = vnop
        $region24: #{subclass_camera_forward.4} parent=15 // pred_fallthru
          _
      $region16: #{subclass_camera_forward.4} parent=5 // pred_fallthru
        _
      %p181 = scmp.le.s32.totalorder 1, %s8
      %p182 = scmp.lt.s32.totalorder %s8, 9
      %p183 = pnand %p181, %p182
      %p184 = pneg %p183
      // Predicated region
      $region59: #{subclass_camera_forward.4} parent=5 // pred_check
        _
      $region60: #{subclass_camera_forward.4} parent=5 // pred_check_branch
        %186 = sbr.rel (%p183) target = $region62
      $region61: #{subclass_camera_forward.4} parent=5 // pred_region
        %s187 = ssub.s32 %s8, 1
        %s188 = sand.u32 %s61, 1
        %s189 = sand.u32 %s61, 1
        %s190 = smul.addr %s189, 32
        %s191 = scalar_lea.vmem [#allocation3], %s190
        // Predicated region
        $region63: #{subclass_camera_forward.4} parent=61 // pred_check
          %p192 = pneg %p74
        $region64: #{subclass_camera_forward.4} parent=61 // pred_check_branch
          %194 = sbr.rel (%p192) target = $region66
        $region65: #{subclass_camera_forward.4} parent=61 // pred_region
          _
        $region66: #{subclass_camera_forward.4} parent=61 // pred_fallthru
          _
        %p195 = scmp.lt.s32.totalorder %s17, 1
        %s196 = scalar_select %p195, %s17, 1
        %s197 = smul.addr %s196, 4
        %s198 = scalar_lea.vmem %s0, %s197
        %p199 = pneg %p46
        %p200 = pneg %p43
        %s201 = sand.u32 %s61, 1
        %s202 = sand.u32 %s61, 1
        %s203 = smul.addr %s202, 32
        %s204 = scalar_lea.vmem [#allocation3], %s203
        %p205 = pneg %p74
        %p206 = pneg %p71
        %p207 = pneg %p100
        %p208 = pneg %p97
        %p209 = scmp.lt.s32.totalorder %s17, 1
        %s210 = scalar_select %p209, %s17, 1
        %s211 = smul.addr %s210, 4
        %s212 = smul.addr %s211, 8
        %s213 = scalar_lea.vmem %s2, %s212
        %p214 = scmp.lt.s32.totalorder %s17, 1
        %s215 = scalar_select %p214, %s17, 1
        %s216 = smul.addr %s215, 4
        %s217 = scalar_lea.vmem %s0, %s216
        %p218 = scmp.lt.s32.totalorder %s17, 1
        %s219 = scalar_select %p218, %s17, 1
        %s220 = smul.addr %s219, 4
        %s221 = smul.addr %s220, 8
        %s222 = scalar_lea.vmem %s2, %s221
        %p223 = scmp.eq.s32.totalorder %s18, 0
        // Predicated region
        $region67: #{subclass_camera_forward.4} parent=61 // pred_check
          %p224 = pneg %p223
        $region68: #{subclass_camera_forward.4} parent=61 // pred_check_branch
          %226 = sbr.rel (%p224) target = $region70
        $region69: #{subclass_camera_forward.4} parent=61 // pred_region
          %227 = vst [vmem:[#allocation2] sm:$0xff] 0.0
          %228 = vst [vmem:[#allocation2 + $0x8] sm:$0xff] 0.0
          %229 = vst [vmem:[#allocation2 + $0x10] sm:$0xff] 0.0
          %230 = vst [vmem:[#allocation2 + $0x18] sm:$0xff] 0.0
        $region70: #{subclass_camera_forward.4} parent=61 // pred_fallthru
          _
        %v231 = vld [vmem:[%s217] sm:$0x7]
        %v232 = vadd.f32 %v231, 1.0
        %v233 = vmul.f32 %v232, 0.5
        %v234 = vmul.f32 %v233, 15.0
        %v235 = vfloor.f32 %v234
        %v236 = vfloor.f32 %v233
        %v237 = vsub.f32 %v234, %v235
        %v238 = vsub.f32 %v233, %v236
        %v239 = vcvt.f32.s32.to.zero.pseudo %v235
        %v240 = vcvt.f32.s32.to.zero.pseudo %v236
        %v241 = vadd.s32 %v239, 1
        %v242 = vadd.s32 %v240, 1
        %s243 = smul.u32 %s18, 128
        %v244 = vlaneseq
        %v245 = vshrl.u32 %v244, 7
        %v246 = vadd.s32 %v245, 8
        %v247 = vadd.s32 %v245, 16
        %v248 = vadd.s32 %v245, 24
        %v249 = vadd.s32 %v245, 32
        %v250 = vadd.s32 %v245, 40
        %v251 = vadd.s32 %v245, 48
        %v252 = vadd.s32 %v245, 56
        %v253 = vadd.s32 %v245, 64
        %v254 = vadd.s32 %v245, 72
        %v255 = vadd.s32 %v245, 80
        %v256 = vadd.s32 %v245, 88
        %v257 = vadd.s32 %v245, 96
        %v258 = vadd.s32 %v245, 104
        %v259 = vadd.s32 %v245, 112
        %v260 = vadd.s32 %v245, 120
        %v261 = vstv %s243
        %v262 = vadd.s32 %v245, %v261
        %v263 = vadd.s32 %v246, %v261
        %v264 = vadd.s32 %v247, %v261
        %v265 = vadd.s32 %v248, %v261
        %v266 = vadd.s32 %v249, %v261
        %v267 = vadd.s32 %v250, %v261
        %v268 = vadd.s32 %v251, %v261
        %v269 = vadd.s32 %v252, %v261
        %v270 = vadd.s32 %v253, %v261
        %v271 = vadd.s32 %v254, %v261
        %v272 = vadd.s32 %v255, %v261
        %v273 = vadd.s32 %v256, %v261
        %v274 = vadd.s32 %v257, %v261
        %v275 = vadd.s32 %v258, %v261
        %v276 = vadd.s32 %v259, %v261
        %v277 = vadd.s32 %v260, %v261
        %v278 = vsub.f32 1.0, %v237
        %v280 = vrot.slane %v278, 1
        %v282 = vmul.f32 %v278, %v280
        %v283 = vsub.f32 1.0, %v238
        %v285 = vrot.slane %v283, 2
        %v287 = vmul.f32 %v282, %v285
        %vm288 = vcmp.ge.s32.totalorder %v239, 0
        %vm289 = vcmp.lt.s32.totalorder %v239, 16
        %vm290 = vmand %vm288, %vm289
        %v291 = vsel %vm288, 1, 0
        %v292 = vrot.slane %v291, 1
        %vm293 = vcmp.ne.s32.totalorder %v292, 0
        %vm294 = vmand %vm290, %vm293
        %v295 = vsel %vm289, 1, 0
        %v296 = vrot.slane %v295, 1
        %vm297 = vcmp.ne.s32.totalorder %v296, 0
        %vm298 = vmand %vm294, %vm297
        %vm299 = vcmp.ge.s32.totalorder %v240, 0
        %v300 = vsel %vm299, 1, 0
        %v301 = vrot.slane %v300, 2
        %vm302 = vcmp.ne.s32.totalorder %v301, 0
        %vm303 = vmand %vm298, %vm302
        %vm304 = vcmp.lt.s32.totalorder %v240, 2
        %v305 = vsel %vm304, 1, 0
        %v306 = vrot.slane %v305, 2
        %vm307 = vcmp.ne.s32.totalorder %v306, 0
        %vm308 = vmand %vm303, %vm307
        %v309 = vsel %vm308, %v287, 0.0
        %v310 = vmul.u32 %v240, 256
        %v311 = vmul.u32 %v239, 16
        %v312 = vrot.slane %v311, 7
        %v313 = vadd.s32 %v310, %v312
        %v314 = vrot.slane %v239, 6
        %v315 = vadd.s32 %v313, %v314
        %v316 = vlaneseq
        %v317 = vshrl.u32 %v316, 7
        %v318 = vsub.s32 2, %v317
        %v319 = vrot.slane %v315, %v318
        %vm320 = vcmp.eq.s32.totalorder %v262, %v319
        %vm321 = vcmp.eq.s32.totalorder %v263, %v319
        %vm322 = vcmp.eq.s32.totalorder %v264, %v319
        %vm323 = vcmp.eq.s32.totalorder %v265, %v319
        %vm324 = vcmp.eq.s32.totalorder %v266, %v319
        %vm325 = vcmp.eq.s32.totalorder %v267, %v319
        %vm326 = vcmp.eq.s32.totalorder %v268, %v319
        %vm327 = vcmp.eq.s32.totalorder %v269, %v319
        %vm328 = vcmp.eq.s32.totalorder %v270, %v319
        %vm329 = vcmp.eq.s32.totalorder %v271, %v319
        %vm330 = vcmp.eq.s32.totalorder %v272, %v319
        %vm331 = vcmp.eq.s32.totalorder %v273, %v319
        %vm332 = vcmp.eq.s32.totalorder %v274, %v319
        %vm333 = vcmp.eq.s32.totalorder %v275, %v319
        %vm334 = vcmp.eq.s32.totalorder %v276, %v319
        %vm335 = vcmp.eq.s32.totalorder %v277, %v319
        %v336 = vlaneseq
        %v337 = vshrl.u32 %v336, 7
        %v338 = vsub.s32 0, %v337
        %v339 = vrot.slane %v309, %v338
        %v340 = vsel %vm320, %v339, 0.0
        %v341 = vsel %vm321, %v339, 0.0
        %v342 = vsel %vm322, %v339, 0.0
        %v343 = vsel %vm323, %v339, 0.0
        %v344 = vsel %vm324, %v339, 0.0
        %v345 = vsel %vm325, %v339, 0.0
        %v346 = vsel %vm326, %v339, 0.0
        %v347 = vsel %vm327, %v339, 0.0
        %v348 = vsel %vm328, %v339, 0.0
        %v349 = vsel %vm329, %v339, 0.0
        %v350 = vsel %vm330, %v339, 0.0
        %v351 = vsel %vm331, %v339, 0.0
        %v352 = vsel %vm332, %v339, 0.0
        %v353 = vsel %vm333, %v339, 0.0
        %v354 = vsel %vm334, %v339, 0.0
        %v355 = vsel %vm335, %v339, 0.0
        %v356 = vadd.f32 %v340, 0.0
        %v357 = vadd.f32 %v341, 0.0
        %v358 = vadd.f32 %v342, 0.0
        %v359 = vadd.f32 %v343, 0.0
        %v360 = vadd.f32 %v344, 0.0
        %v361 = vadd.f32 %v345, 0.0
        %v362 = vadd.f32 %v346, 0.0
        %v363 = vadd.f32 %v347, 0.0
        %v364 = vadd.f32 %v348, 0.0
        %v365 = vadd.f32 %v349, 0.0
        %v366 = vadd.f32 %v350, 0.0
        %v367 = vadd.f32 %v351, 0.0
        %v368 = vadd.f32 %v352, 0.0
        %v369 = vadd.f32 %v353, 0.0
        %v370 = vadd.f32 %v354, 0.0
        %v371 = vadd.f32 %v355, 0.0
        %v373 = vrot.slane %v238, 2
        %v375 = vmul.f32 %v282, %v373
        %vm376 = vcmp.ge.s32.totalorder %v242, 0
        %v377 = vsel %vm376, 1, 0
        %v378 = vrot.slane %v377, 2
        %vm379 = vcmp.ne.s32.totalorder %v378, 0
        %vm380 = vmand %vm298, %vm379
        %vm381 = vcmp.lt.s32.totalorder %v242, 2
        %v382 = vsel %vm381, 1, 0
        %v383 = vrot.slane %v382, 2
        %vm384 = vcmp.ne.s32.totalorder %v383, 0
        %vm385 = vmand %vm380, %vm384
        %v386 = vsel %vm385, %v375, 0.0
        %v387 = vmul.u32 %v242, 256
        %v388 = vadd.s32 %v387, %v312
        %v389 = vadd.s32 %v388, %v314
        %v390 = vlaneseq
        %v391 = vshrl.u32 %v390, 7
        %v392 = vsub.s32 2, %v391
        %v393 = vrot.slane %v389, %v392
        %vm394 = vcmp.eq.s32.totalorder %v262, %v393
        %vm395 = vcmp.eq.s32.totalorder %v263, %v393
        %vm396 = vcmp.eq.s32.totalorder %v264, %v393
        %vm397 = vcmp.eq.s32.totalorder %v265, %v393
        %vm398 = vcmp.eq.s32.totalorder %v266, %v393
        %vm399 = vcmp.eq.s32.totalorder %v267, %v393
        %vm400 = vcmp.eq.s32.totalorder %v268, %v393
        %vm401 = vcmp.eq.s32.totalorder %v269, %v393
        %vm402 = vcmp.eq.s32.totalorder %v270, %v393
        %vm403 = vcmp.eq.s32.totalorder %v271, %v393
        %vm404 = vcmp.eq.s32.totalorder %v272, %v393
        %vm405 = vcmp.eq.s32.totalorder %v273, %v393
        %vm406 = vcmp.eq.s32.totalorder %v274, %v393
        %vm407 = vcmp.eq.s32.totalorder %v275, %v393
        %vm408 = vcmp.eq.s32.totalorder %v276, %v393
        %vm409 = vcmp.eq.s32.totalorder %v277, %v393
        %v410 = vlaneseq
        %v411 = vshrl.u32 %v410, 7
        %v412 = vsub.s32 0, %v411
        %v413 = vrot.slane %v386, %v412
        %v414 = vsel %vm394, %v413, 0.0
        %v415 = vsel %vm395, %v413, 0.0
        %v416 = vsel %vm396, %v413, 0.0
        %v417 = vsel %vm397, %v413, 0.0
        %v418 = vsel %vm398, %v413, 0.0
        %v419 = vsel %vm399, %v413, 0.0
        %v420 = vsel %vm400, %v413, 0.0
        %v421 = vsel %vm401, %v413, 0.0
        %v422 = vsel %vm402, %v413, 0.0
        %v423 = vsel %vm403, %v413, 0.0
        %v424 = vsel %vm404, %v413, 0.0
        %v425 = vsel %vm405, %v413, 0.0
        %v426 = vsel %vm406, %v413, 0.0
        %v427 = vsel %vm407, %v413, 0.0
        %v428 = vsel %vm408, %v413, 0.0
        %v429 = vsel %vm409, %v413, 0.0
        %v430 = vadd.f32 %v356, %v414
        %v431 = vadd.f32 %v357, %v415
        %v432 = vadd.f32 %v358, %v416
        %v433 = vadd.f32 %v359, %v417
        %v434 = vadd.f32 %v360, %v418
        %v435 = vadd.f32 %v361, %v419
        %v436 = vadd.f32 %v362, %v420
        %v437 = vadd.f32 %v363, %v421
        %v438 = vadd.f32 %v364, %v422
        %v439 = vadd.f32 %v365, %v423
        %v440 = vadd.f32 %v366, %v424
        %v441 = vadd.f32 %v367, %v425
        %v442 = vadd.f32 %v368, %v426
        %v443 = vadd.f32 %v369, %v427
        %v444 = vadd.f32 %v370, %v428
        %v445 = vadd.f32 %v371, %v429
        %v447 = vrot.slane %v237, 1
        %v449 = vmul.f32 %v278, %v447
        %v450 = vmul.f32 %v449, %v285
        %vm451 = vcmp.ge.s32.totalorder %v241, 0
        %v452 = vsel %vm451, 1, 0
        %v453 = vrot.slane %v452, 1
        %vm454 = vcmp.ne.s32.totalorder %v453, 0
        %vm455 = vmand %vm290, %vm454
        %vm456 = vcmp.lt.s32.totalorder %v241, 16
        %v457 = vsel %vm456, 1, 0
        %v458 = vrot.slane %v457, 1
        %vm459 = vcmp.ne.s32.totalorder %v458, 0
        %vm460 = vmand %vm455, %vm459
        %vm461 = vmand %vm460, %vm302
        %vm462 = vmand %vm461, %vm307
        %v463 = vsel %vm462, %v450, 0.0
        %v464 = vmul.u32 %v241, 16
        %v465 = vrot.slane %v464, 7
        %v466 = vadd.s32 %v310, %v465
        %v467 = vadd.s32 %v466, %v314
        %v468 = vlaneseq
        %v469 = vshrl.u32 %v468, 7
        %v470 = vsub.s32 2, %v469
        %v471 = vrot.slane %v467, %v470
        %vm472 = vcmp.eq.s32.totalorder %v262, %v471
        %vm473 = vcmp.eq.s32.totalorder %v263, %v471
        %vm474 = vcmp.eq.s32.totalorder %v264, %v471
        %vm475 = vcmp.eq.s32.totalorder %v265, %v471
        %vm476 = vcmp.eq.s32.totalorder %v266, %v471
        %vm477 = vcmp.eq.s32.totalorder %v267, %v471
        %vm478 = vcmp.eq.s32.totalorder %v268, %v471
        %vm479 = vcmp.eq.s32.totalorder %v269, %v471
        %vm480 = vcmp.eq.s32.totalorder %v270, %v471
        %vm481 = vcmp.eq.s32.totalorder %v271, %v471
        %vm482 = vcmp.eq.s32.totalorder %v272, %v471
        %vm483 = vcmp.eq.s32.totalorder %v273, %v471
        %vm484 = vcmp.eq.s32.totalorder %v274, %v471
        %vm485 = vcmp.eq.s32.totalorder %v275, %v471
        %vm486 = vcmp.eq.s32.totalorder %v276, %v471
        %vm487 = vcmp.eq.s32.totalorder %v277, %v471
        %v488 = vlaneseq
        %v489 = vshrl.u32 %v488, 7
        %v490 = vsub.s32 0, %v489
        %v491 = vrot.slane %v463, %v490
        %v492 = vsel %vm472, %v491, 0.0
        %v493 = vsel %vm473, %v491, 0.0
        %v494 = vsel %vm474, %v491, 0.0
        %v495 = vsel %vm475, %v491, 0.0
        %v496 = vsel %vm476, %v491, 0.0
        %v497 = vsel %vm477, %v491, 0.0
        %v498 = vsel %vm478, %v491, 0.0
        %v499 = vsel %vm479, %v491, 0.0
        %v500 = vsel %vm480, %v491, 0.0
        %v501 = vsel %vm481, %v491, 0.0
        %v502 = vsel %vm482, %v491, 0.0
        %v503 = vsel %vm483, %v491, 0.0
        %v504 = vsel %vm484, %v491, 0.0
        %v505 = vsel %vm485, %v491, 0.0
        %v506 = vsel %vm486, %v491, 0.0
        %v507 = vsel %vm487, %v491, 0.0
        %v508 = vadd.f32 %v430, %v492
        %v509 = vadd.f32 %v431, %v493
        %v510 = vadd.f32 %v432, %v494
        %v511 = vadd.f32 %v433, %v495
        %v512 = vadd.f32 %v434, %v496
        %v513 = vadd.f32 %v435, %v497
        %v514 = vadd.f32 %v436, %v498
        %v515 = vadd.f32 %v437, %v499
        %v516 = vadd.f32 %v438, %v500
        %v517 = vadd.f32 %v439, %v501
        %v518 = vadd.f32 %v440, %v502
        %v519 = vadd.f32 %v441, %v503
        %v520 = vadd.f32 %v442, %v504
        %v521 = vadd.f32 %v443, %v505
        %v522 = vadd.f32 %v444, %v506
        %v523 = vadd.f32 %v445, %v507
        %v524 = vmul.f32 %v449, %v373
        %vm525 = vmand %vm460, %vm379
        %vm526 = vmand %vm525, %vm384
        %v527 = vsel %vm526, %v524, 0.0
        %v528 = vadd.s32 %v387, %v465
        %v529 = vadd.s32 %v528, %v314
        %v530 = vlaneseq
        %v531 = vshrl.u32 %v530, 7
        %v532 = vsub.s32 2, %v531
        %v533 = vrot.slane %v529, %v532
        %vm534 = vcmp.eq.s32.totalorder %v262, %v533
        %vm535 = vcmp.eq.s32.totalorder %v263, %v533
        %vm536 = vcmp.eq.s32.totalorder %v264, %v533
        %vm537 = vcmp.eq.s32.totalorder %v265, %v533
        %vm538 = vcmp.eq.s32.totalorder %v266, %v533
        %vm539 = vcmp.eq.s32.totalorder %v267, %v533
        %vm540 = vcmp.eq.s32.totalorder %v268, %v533
        %vm541 = vcmp.eq.s32.totalorder %v269, %v533
        %vm542 = vcmp.eq.s32.totalorder %v270, %v533
        %vm543 = vcmp.eq.s32.totalorder %v271, %v533
        %vm544 = vcmp.eq.s32.totalorder %v272, %v533
        %vm545 = vcmp.eq.s32.totalorder %v273, %v533
        %vm546 = vcmp.eq.s32.totalorder %v274, %v533
        %vm547 = vcmp.eq.s32.totalorder %v275, %v533
        %vm548 = vcmp.eq.s32.totalorder %v276, %v533
        %vm549 = vcmp.eq.s32.totalorder %v277, %v533
        %v550 = vlaneseq
        %v551 = vshrl.u32 %v550, 7
        %v552 = vsub.s32 0, %v551
        %v553 = vrot.slane %v527, %v552
        %v554 = vsel %vm534, %v553, 0.0
        %v555 = vsel %vm535, %v553, 0.0
        %v556 = vsel %vm536, %v553, 0.0
        %v557 = vsel %vm537, %v553, 0.0
        %v558 = vsel %vm538, %v553, 0.0
        %v559 = vsel %vm539, %v553, 0.0
        %v560 = vsel %vm540, %v553, 0.0
        %v561 = vsel %vm541, %v553, 0.0
        %v562 = vsel %vm542, %v553, 0.0
        %v563 = vsel %vm543, %v553, 0.0
        %v564 = vsel %vm544, %v553, 0.0
        %v565 = vsel %vm545, %v553, 0.0
        %v566 = vsel %vm546, %v553, 0.0
        %v567 = vsel %vm547, %v553, 0.0
        %v568 = vsel %vm548, %v553, 0.0
        %v569 = vsel %vm549, %v553, 0.0
        %v570 = vadd.f32 %v508, %v554
        %v571 = vadd.f32 %v509, %v555
        %v572 = vadd.f32 %v510, %v556
        %v573 = vadd.f32 %v511, %v557
        %v574 = vadd.f32 %v512, %v558
        %v575 = vadd.f32 %v513, %v559
        %v576 = vadd.f32 %v514, %v560
        %v577 = vadd.f32 %v515, %v561
        %v578 = vadd.f32 %v516, %v562
        %v579 = vadd.f32 %v517, %v563
        %v580 = vadd.f32 %v518, %v564
        %v581 = vadd.f32 %v519, %v565
        %v582 = vadd.f32 %v520, %v566
        %v583 = vadd.f32 %v521, %v567
        %v584 = vadd.f32 %v522, %v568
        %v585 = vadd.f32 %v523, %v569
        %v586 = vmul.f32 %v237, %v280
        %v587 = vmul.f32 %v586, %v285
        %vm588 = vmand %vm451, %vm456
        %vm589 = vmand %vm588, %vm293
        %vm590 = vmand %vm589, %vm297
        %vm591 = vmand %vm590, %vm302
        %vm592 = vmand %vm591, %vm307
        %v593 = vsel %vm592, %v587, 0.0
        %v594 = vrot.slane %v241, 6
        %v595 = vadd.s32 %v313, %v594
        %v596 = vlaneseq
        %v597 = vshrl.u32 %v596, 7
        %v598 = vsub.s32 2, %v597
        %v599 = vrot.slane %v595, %v598
        %vm600 = vcmp.eq.s32.totalorder %v262, %v599
        %vm601 = vcmp.eq.s32.totalorder %v263, %v599
        %vm602 = vcmp.eq.s32.totalorder %v264, %v599
        %vm603 = vcmp.eq.s32.totalorder %v265, %v599
        %vm604 = vcmp.eq.s32.totalorder %v266, %v599
        %vm605 = vcmp.eq.s32.totalorder %v267, %v599
        %vm606 = vcmp.eq.s32.totalorder %v268, %v599
        %vm607 = vcmp.eq.s32.totalorder %v269, %v599
        %vm608 = vcmp.eq.s32.totalorder %v270, %v599
        %vm609 = vcmp.eq.s32.totalorder %v271, %v599
        %vm610 = vcmp.eq.s32.totalorder %v272, %v599
        %vm611 = vcmp.eq.s32.totalorder %v273, %v599
        %vm612 = vcmp.eq.s32.totalorder %v274, %v599
        %vm613 = vcmp.eq.s32.totalorder %v275, %v599
        %vm614 = vcmp.eq.s32.totalorder %v276, %v599
        %vm615 = vcmp.eq.s32.totalorder %v277, %v599
        %v616 = vlaneseq
        %v617 = vshrl.u32 %v616, 7
        %v618 = vsub.s32 0, %v617
        %v619 = vrot.slane %v593, %v618
        %v620 = vsel %vm600, %v619, 0.0
        %v621 = vsel %vm601, %v619, 0.0
        %v622 = vsel %vm602, %v619, 0.0
        %v623 = vsel %vm603, %v619, 0.0
        %v624 = vsel %vm604, %v619, 0.0
        %v625 = vsel %vm605, %v619, 0.0
        %v626 = vsel %vm606, %v619, 0.0
        %v627 = vsel %vm607, %v619, 0.0
        %v628 = vsel %vm608, %v619, 0.0
        %v629 = vsel %vm609, %v619, 0.0
        %v630 = vsel %vm610, %v619, 0.0
        %v631 = vsel %vm611, %v619, 0.0
        %v632 = vsel %vm612, %v619, 0.0
        %v633 = vsel %vm613, %v619, 0.0
        %v634 = vsel %vm614, %v619, 0.0
        %v635 = vsel %vm615, %v619, 0.0
        %v636 = vadd.f32 %v570, %v620
        %v637 = vadd.f32 %v571, %v621
        %v638 = vadd.f32 %v572, %v622
        %v639 = vadd.f32 %v573, %v623
        %v640 = vadd.f32 %v574, %v624
        %v641 = vadd.f32 %v575, %v625
        %v642 = vadd.f32 %v576, %v626
        %v643 = vadd.f32 %v577, %v627
        %v644 = vadd.f32 %v578, %v628
        %v645 = vadd.f32 %v579, %v629
        %v646 = vadd.f32 %v580, %v630
        %v647 = vadd.f32 %v581, %v631
        %v648 = vadd.f32 %v582, %v632
        %v649 = vadd.f32 %v583, %v633
        %v650 = vadd.f32 %v584, %v634
        %v651 = vadd.f32 %v585, %v635
        %v652 = vmul.f32 %v586, %v373
        %vm653 = vmand %vm590, %vm379
        %vm654 = vmand %vm653, %vm384
        %v655 = vsel %vm654, %v652, 0.0
        %v656 = vadd.s32 %v388, %v594
        %v657 = vlaneseq
        %v658 = vshrl.u32 %v657, 7
        %v659 = vsub.s32 2, %v658
        %v660 = vrot.slane %v656, %v659
        %vm661 = vcmp.eq.s32.totalorder %v262, %v660
        %vm662 = vcmp.eq.s32.totalorder %v263, %v660
        %vm663 = vcmp.eq.s32.totalorder %v264, %v660
        %vm664 = vcmp.eq.s32.totalorder %v265, %v660
        %vm665 = vcmp.eq.s32.totalorder %v266, %v660
        %vm666 = vcmp.eq.s32.totalorder %v267, %v660
        %vm667 = vcmp.eq.s32.totalorder %v268, %v660
        %vm668 = vcmp.eq.s32.totalorder %v269, %v660
        %vm669 = vcmp.eq.s32.totalorder %v270, %v660
        %vm670 = vcmp.eq.s32.totalorder %v271, %v660
        %vm671 = vcmp.eq.s32.totalorder %v272, %v660
        %vm672 = vcmp.eq.s32.totalorder %v273, %v660
        %vm673 = vcmp.eq.s32.totalorder %v274, %v660
        %vm674 = vcmp.eq.s32.totalorder %v275, %v660
        %vm675 = vcmp.eq.s32.totalorder %v276, %v660
        %vm676 = vcmp.eq.s32.totalorder %v277, %v660
        %v677 = vlaneseq
        %v678 = vshrl.u32 %v677, 7
        %v679 = vsub.s32 0, %v678
        %v680 = vrot.slane %v655, %v679
        %v681 = vsel %vm661, %v680, 0.0
        %v682 = vsel %vm662, %v680, 0.0
        %v683 = vsel %vm663, %v680, 0.0
        %v684 = vsel %vm664, %v680, 0.0
        %v685 = vsel %vm665, %v680, 0.0
        %v686 = vsel %vm666, %v680, 0.0
        %v687 = vsel %vm667, %v680, 0.0
        %v688 = vsel %vm668, %v680, 0.0
        %v689 = vsel %vm669, %v680, 0.0
        %v690 = vsel %vm670, %v680, 0.0
        %v691 = vsel %vm671, %v680, 0.0
        %v692 = vsel %vm672, %v680, 0.0
        %v693 = vsel %vm673, %v680, 0.0
        %v694 = vsel %vm674, %v680, 0.0
        %v695 = vsel %vm675, %v680, 0.0
        %v696 = vsel %vm676, %v680, 0.0
        %v697 = vadd.f32 %v636, %v681
        %v698 = vadd.f32 %v637, %v682
        %v699 = vadd.f32 %v638, %v683
        %v700 = vadd.f32 %v639, %v684
        %v701 = vadd.f32 %v640, %v685
        %v702 = vadd.f32 %v641, %v686
        %v703 = vadd.f32 %v642, %v687
        %v704 = vadd.f32 %v643, %v688
        %v705 = vadd.f32 %v644, %v689
        %v706 = vadd.f32 %v645, %v690
        %v707 = vadd.f32 %v646, %v691
        %v708 = vadd.f32 %v647, %v692
        %v709 = vadd.f32 %v648, %v693
        %v710 = vadd.f32 %v649, %v694
        %v711 = vadd.f32 %v650, %v695
        %v712 = vadd.f32 %v651, %v696
        %v713 = vmul.f32 %v237, %v447
        %v714 = vmul.f32 %v713, %v285
        %vm715 = vmand %vm588, %vm454
        %vm716 = vmand %vm715, %vm459
        %vm717 = vmand %vm716, %vm302
        %vm718 = vmand %vm717, %vm307
        %v719 = vsel %vm718, %v714, 0.0
        %v720 = vadd.s32 %v466, %v594
        %v721 = vlaneseq
        %v722 = vshrl.u32 %v721, 7
        %v723 = vsub.s32 2, %v722
        %v724 = vrot.slane %v720, %v723
        %vm725 = vcmp.eq.s32.totalorder %v262, %v724
        %vm726 = vcmp.eq.s32.totalorder %v263, %v724
        %vm727 = vcmp.eq.s32.totalorder %v264, %v724
        %vm728 = vcmp.eq.s32.totalorder %v265, %v724
        %vm729 = vcmp.eq.s32.totalorder %v266, %v724
        %vm730 = vcmp.eq.s32.totalorder %v267, %v724
        %vm731 = vcmp.eq.s32.totalorder %v268, %v724
        %vm732 = vcmp.eq.s32.totalorder %v269, %v724
        %vm733 = vcmp.eq.s32.totalorder %v270, %v724
        %vm734 = vcmp.eq.s32.totalorder %v271, %v724
        %vm735 = vcmp.eq.s32.totalorder %v272, %v724
        %vm736 = vcmp.eq.s32.totalorder %v273, %v724
        %vm737 = vcmp.eq.s32.totalorder %v274, %v724
        %vm738 = vcmp.eq.s32.totalorder %v275, %v724
        %vm739 = vcmp.eq.s32.totalorder %v276, %v724
        %vm740 = vcmp.eq.s32.totalorder %v277, %v724
        %v741 = vlaneseq
        %v742 = vshrl.u32 %v741, 7
        %v743 = vsub.s32 0, %v742
        %v744 = vrot.slane %v719, %v743
        %v745 = vsel %vm725, %v744, 0.0
        %v746 = vsel %vm726, %v744, 0.0
        %v747 = vsel %vm727, %v744, 0.0
        %v748 = vsel %vm728, %v744, 0.0
        %v749 = vsel %vm729, %v744, 0.0
        %v750 = vsel %vm730, %v744, 0.0
        %v751 = vsel %vm731, %v744, 0.0
        %v752 = vsel %vm732, %v744, 0.0
        %v753 = vsel %vm733, %v744, 0.0
        %v754 = vsel %vm734, %v744, 0.0
        %v755 = vsel %vm735, %v744, 0.0
        %v756 = vsel %vm736, %v744, 0.0
        %v757 = vsel %vm737, %v744, 0.0
        %v758 = vsel %vm738, %v744, 0.0
        %v759 = vsel %vm739, %v744, 0.0
        %v760 = vsel %vm740, %v744, 0.0
        %v761 = vadd.f32 %v697, %v745
        %v762 = vadd.f32 %v698, %v746
        %v763 = vadd.f32 %v699, %v747
        %v764 = vadd.f32 %v700, %v748
        %v765 = vadd.f32 %v701, %v749
        %v766 = vadd.f32 %v702, %v750
        %v767 = vadd.f32 %v703, %v751
        %v768 = vadd.f32 %v704, %v752
        %v769 = vadd.f32 %v705, %v753
        %v770 = vadd.f32 %v706, %v754
        %v771 = vadd.f32 %v707, %v755
        %v772 = vadd.f32 %v708, %v756
        %v773 = vadd.f32 %v709, %v757
        %v774 = vadd.f32 %v710, %v758
        %v775 = vadd.f32 %v711, %v759
        %v776 = vadd.f32 %v712, %v760
        %v777 = vmul.f32 %v713, %v373
        %vm778 = vmand %vm716, %vm379
        %vm779 = vmand %vm778, %vm384
        %v780 = vsel %vm779, %v777, 0.0
        %v781 = vadd.s32 %v528, %v594
        %v782 = vlaneseq
        %v783 = vshrl.u32 %v782, 7
        %v784 = vsub.s32 2, %v783
        %v785 = vrot.slane %v781, %v784
        %vm786 = vcmp.eq.s32.totalorder %v262, %v785
        %vm787 = vcmp.eq.s32.totalorder %v263, %v785
        %vm788 = vcmp.eq.s32.totalorder %v264, %v785
        %vm789 = vcmp.eq.s32.totalorder %v265, %v785
        %vm790 = vcmp.eq.s32.totalorder %v266, %v785
        %vm791 = vcmp.eq.s32.totalorder %v267, %v785
        %vm792 = vcmp.eq.s32.totalorder %v268, %v785
        %vm793 = vcmp.eq.s32.totalorder %v269, %v785
        %vm794 = vcmp.eq.s32.totalorder %v270, %v785
        %vm795 = vcmp.eq.s32.totalorder %v271, %v785
        %vm796 = vcmp.eq.s32.totalorder %v272, %v785
        %vm797 = vcmp.eq.s32.totalorder %v273, %v785
        %vm798 = vcmp.eq.s32.totalorder %v274, %v785
        %vm799 = vcmp.eq.s32.totalorder %v275, %v785
        %vm800 = vcmp.eq.s32.totalorder %v276, %v785
        %vm801 = vcmp.eq.s32.totalorder %v277, %v785
        %v802 = vlaneseq
        %v803 = vshrl.u32 %v802, 7
        %v804 = vsub.s32 0, %v803
        %v805 = vrot.slane %v780, %v804
        %v806 = vsel %vm786, %v805, 0.0
        %v807 = vsel %vm787, %v805, 0.0
        %v808 = vsel %vm788, %v805, 0.0
        %v809 = vsel %vm789, %v805, 0.0
        %v810 = vsel %vm790, %v805, 0.0
        %v811 = vsel %vm791, %v805, 0.0
        %v812 = vsel %vm792, %v805, 0.0
        %v813 = vsel %vm793, %v805, 0.0
        %v814 = vsel %vm794, %v805, 0.0
        %v815 = vsel %vm795, %v805, 0.0
        %v816 = vsel %vm796, %v805, 0.0
        %v817 = vsel %vm797, %v805, 0.0
        %v818 = vsel %vm798, %v805, 0.0
        %v819 = vsel %vm799, %v805, 0.0
        %v820 = vsel %vm800, %v805, 0.0
        %v821 = vsel %vm801, %v805, 0.0
        %v822 = vadd.f32 %v761, %v806
        %v823 = vadd.f32 %v762, %v807
        %v824 = vadd.f32 %v763, %v808
        %v825 = vadd.f32 %v764, %v809
        %v826 = vadd.f32 %v765, %v810
        %v827 = vadd.f32 %v766, %v811
        %v828 = vadd.f32 %v767, %v812
        %v829 = vadd.f32 %v768, %v813
        %v830 = vadd.f32 %v769, %v814
        %v831 = vadd.f32 %v770, %v815
        %v832 = vadd.f32 %v771, %v816
        %v833 = vadd.f32 %v772, %v817
        %v834 = vadd.f32 %v773, %v818
        %v835 = vadd.f32 %v774, %v819
        %v836 = vadd.f32 %v775, %v820
        %v837 = vadd.f32 %v776, %v821
        %v838 = vld [vmem:[#allocation2] sm:$0xff]
        %v839 = vld [vmem:[#allocation2 + $0x8] sm:$0xff]
        %v840 = vld [vmem:[#allocation2 + $0x10] sm:$0xff]
        %v841 = vld [vmem:[#allocation2 + $0x18] sm:$0xff]
        %v842 = vld [vmem:[%s191] sm:$0xff]
        %v843 = vld [vmem:[%s191 + $0x8] sm:$0xff]
        %v844 = vld [vmem:[%s191 + $0x10] sm:$0xff]
        %v845 = vld [vmem:[%s191 + $0x18] sm:$0xff]
        %846 = vmatprep.subr.mxu0 0.0
        %847 = vmatpush1.msra.mxu0 %v822
        %848 = vmatprep.subr.mxu0 0.0
        %849 = vmatpush1.msra.mxu0 %v823
        %850 = vmatprep.subr.mxu0 0.0
        %851 = vmatpush1.msra.mxu0 %v824
        %852 = vmatprep.subr.mxu0 0.0
        %853 = vmatpush1.msra.mxu0 %v825
        %854 = vmatprep.subr.mxu0 0.0
        %855 = vmatpush1.msra.mxu0 %v826
        %856 = vmatprep.subr.mxu0 0.0
        %857 = vmatpush1.msra.mxu0 %v827
        %858 = vmatprep.subr.mxu0 0.0
        %859 = vmatpush1.msra.mxu0 %v828
        %860 = vmatprep.subr.mxu0 0.0
        %861 = vmatpush1.msra.mxu0 %v829
        %862 = vmatprep.subr.mxu0 0.0
        %863 = vmatpush1.msra.mxu0 %v830
        %864 = vmatprep.subr.mxu0 0.0
        %865 = vmatpush1.msra.mxu0 %v831
        %866 = vmatprep.subr.mxu0 0.0
        %867 = vmatpush1.msra.mxu0 %v832
        %868 = vmatprep.subr.mxu0 0.0
        %869 = vmatpush1.msra.mxu0 %v833
        %870 = vmatprep.subr.mxu0 0.0
        %871 = vmatpush1.msra.mxu0 %v834
        %872 = vmatprep.subr.mxu0 0.0
        %873 = vmatpush1.msra.mxu0 %v835
        %874 = vmatprep.subr.mxu0 0.0
        %875 = vmatpush1.msra.mxu0 %v836
        %876 = vmatprep.subr.mxu0 0.0
        %877 = vmatpush1.msra.mxu0 %v837
        %878 = vmatprep.subr.mxu0 0.0
        %879 = vmatpush1.msra.mxu0 0.0
        %880 = vmatprep.subr.mxu0 0.0
        %881 = vmatpush1.msra.mxu0 0.0
        %882 = vmatprep.subr.mxu0 0.0
        %883 = vmatpush1.msra.mxu0 0.0
        %884 = vmatprep.subr.mxu0 0.0
        %885 = vmatpush1.msra.mxu0 0.0
        %886 = vmatprep.subr.mxu0 0.0
        %887 = vmatpush1.msra.mxu0 0.0
        %888 = vmatprep.subr.mxu0 0.0
        %889 = vmatpush1.msra.mxu0 0.0
        %890 = vmatprep.subr.mxu0 0.0
        %891 = vmatpush1.msra.mxu0 0.0
        %892 = vmatprep.subr.mxu0 0.0
        %893 = vmatpush1.msra.mxu0 0.0
        %894 = vmatprep.subr.mxu0 0.0
        %895 = vmatpush1.msra.mxu0 0.0
        %896 = vmatprep.subr.mxu0 0.0
        %897 = vmatpush1.msra.mxu0 0.0
        %898 = vmatprep.subr.mxu0 0.0
        %899 = vmatpush1.msra.mxu0 0.0
        %900 = vmatprep.subr.mxu0 0.0
        %901 = vmatpush1.msra.mxu0 0.0
        %902 = vmatprep.subr.mxu0 0.0
        %903 = vmatpush1.msra.mxu0 0.0
        %904 = vmatprep.subr.mxu0 0.0
        %905 = vmatpush1.msra.mxu0 0.0
        %906 = vmatprep.subr.mxu0 0.0
        %907 = vmatpush1.msra.mxu0 0.0
        %908 = vmatprep.subr.mxu0 0.0
        %909 = vmatpush1.msra.mxu0 0.0
        %910 = vmatprep.mubr.f32.mxu0 0.0
        %911 = vmatmul.mubr.f32.gmra.mrb[0].mxu0 %v842
        %v912 = vpop.f32.mrb[0].mxu0
        %v913 = vadd.f32 0.0, %v912
        %v914 = vpop.f32.mrb[0].mxu0
        %915 = vmatprep.mubr.f32.mxu0 0.0
        %916 = vmatmul.mubr.f32.gmra.mrb[0].mxu0 %v843
        %v917 = vpop.f32.mrb[0].mxu0
        %v918 = vadd.f32 0.0, %v917
        %v919 = vpop.f32.mrb[0].mxu0
        %920 = vmatprep.mubr.f32.mxu0 0.0
        %921 = vmatmul.mubr.f32.gmra.mrb[0].mxu0 %v844
        %v922 = vpop.f32.mrb[0].mxu0
        %v923 = vadd.f32 0.0, %v922
        %v924 = vpop.f32.mrb[0].mxu0
        %925 = vmatprep.mubr.f32.mxu0 0.0
        %926 = vmatmul.mubr.f32.gmra.mrb[0].mxu0 %v845
        %v927 = vpop.f32.mrb[0].mxu0
        %v928 = vadd.f32 0.0, %v927
        %v929 = vpop.f32.mrb[0].mxu0
        %930 = vdwg.mxu0
        %v931 = vadd.f32 %v838, %v913
        %v932 = vadd.f32 %v839, %v918
        %v933 = vadd.f32 %v840, %v923
        %v934 = vadd.f32 %v841, %v928
        %935 = vst [vmem:[#allocation2] sm:$0xff] %v931
        %936 = vst [vmem:[#allocation2 + $0x8] sm:$0xff] %v932
        %937 = vst [vmem:[#allocation2 + $0x10] sm:$0xff] %v933
        %938 = vst [vmem:[#allocation2 + $0x18] sm:$0xff] %v934
        %p939 = scmp.eq.s32.totalorder %s18, 3
        // Predicated region
        $region71: #{subclass_camera_forward.4} parent=61 // pred_check
          %p940 = pneg %p939
        $region72: #{subclass_camera_forward.4} parent=61 // pred_check_branch
          %942 = sbr.rel (%p940) target = $region74
        $region73: #{subclass_camera_forward.4} parent=61 // pred_region
          %v943 = vld [vmem:[#allocation2] sm:$0xff]
          %v944 = vld [vmem:[#allocation2 + $0x8] sm:$0xff]
          %v945 = vld [vmem:[#allocation2 + $0x10] sm:$0xff]
          %v946 = vld [vmem:[#allocation2 + $0x18] sm:$0xff]
          %947 = vst [vmem:[%s222] sm:$0xff] %v943
          %948 = vst [vmem:[%s222 + $0x8] sm:$0xff] %v944
          %949 = vst [vmem:[%s222 + $0x10] sm:$0xff] %v945
          %950 = vst [vmem:[%s222 + $0x18] sm:$0xff] %v946
        $region74: #{subclass_camera_forward.4} parent=61 // pred_fallthru
          _
        %p951 = scmp.lt.s32.totalorder %s17, 1
        %s952 = scalar_select %p951, %s17, 1
        %s953 = smul.addr %s952, 4
        %s954 = smul.addr %s953, 8
        %s955 = scalar_lea.vmem %s2, %s954
        // Predicated region
        $region75: #{subclass_camera_forward.4} parent=61 // pred_check
          %p956 = pneg %p97
        $region76: #{subclass_camera_forward.4} parent=61 // pred_check_branch
          %958 = sbr.rel (%p956) target = $region78
        $region77: #{subclass_camera_forward.4} parent=61 // pred_region
          _
        $region78: #{subclass_camera_forward.4} parent=61 // pred_fallthru
          _
      $region62: #{subclass_camera_forward.4} parent=5 // pred_fallthru
        _
      %p959 = scmp.le.s32.totalorder 2, %s8
      // Predicated region
      $region79: #{subclass_camera_forward.4} parent=5 // pred_check
        %p960 = pneg %p959
      $region80: #{subclass_camera_forward.4} parent=5 // pred_check_branch
        %962 = sbr.rel (%p960) target = $region82
      $region81: #{subclass_camera_forward.4} parent=5 // pred_region
        %s963 = ssub.s32 %s8, 2
        // Predicated region
        $region83: #{subclass_camera_forward.4} parent=81 // pred_check
          %p964 = pneg %p103
        $region84: #{subclass_camera_forward.4} parent=81 // pred_check_branch
          %966 = sbr.rel (%p964) target = $region86
        $region85: #{subclass_camera_forward.4} parent=81 // pred_region
          %p967 = scmp.lt.s32.totalorder %s19, 1
          %s968 = scalar_select %p967, %s19, 1
          %s969 = smul.addr %s968, 4
          %s970 = smul.addr %s969, 8
          %s971 = scalar_lea.vmem %s2, %s970
        $region86: #{subclass_camera_forward.4} parent=81 // pred_fallthru
          _
      $region82: #{subclass_camera_forward.4} parent=5 // pred_fallthru
        _
    $region6: #{subclass_camera_forward.4} parent=1 // loop_footer
      %s12 = sadd.s32 1, %s8
    $region7: #{subclass_camera_forward.4} parent=1 // loop_footer_branch
      %7 = sbr.rel target = $region3
    $region8: #{subclass_camera_forward.4} parent=1 // loop_exit
      _

// kernel: subclass_camera_forward.5
$region0: #{subclass_camera_forward.5}
  #allocation0 [shape = 'u32[]', space=smem, size = 0x4, offset = 0x4, fixed_abs, tag = 'smem constant byte address 0x4 - core index']
  #allocation1 [shape = 'u32[144,128]{1,0:T(1,128)}', space=vmem, size = 0x12000, scoped, tag = 'internal scratch']
  %s0 = inlined_call_operand.vmem [shape: f32[64,128], index: 0, kind: input, shape index: {}]
  %s1 = inlined_call_operand.vmem [shape: f32[64,64], index: 1, kind: input, shape index: {}]
  %s2 = inlined_call_operand.vmem [shape: f32[64,1], index: 2, kind: input, shape index: {}]
  %s3 = inlined_call_operand.vmem [shape: f32[64,128], index: 3, kind: output, shape index: {}]
  %s4 = sld [smem:[#allocation0]]
  $region22: #{subclass_camera_forward.5} parent=0
    _
  %s6 = ssub.s32 1, %s4
  %s7 = scalar_select 0, %s6, %s4
  // Predicated region
  $region2: #{subclass_camera_forward.5} parent=0 // pred_check
    _
  $region3: #{subclass_camera_forward.5} parent=0 // pred_check_branch
    %9 = sbr.rel (0) target = $region5
  $region4: #{subclass_camera_forward.5} parent=0 // pred_region
    _
  $region5: #{subclass_camera_forward.5} parent=0 // pred_fallthru
    _
  // Predicated region
  $region6: #{subclass_camera_forward.5} parent=0 // pred_check
    _
  $region7: #{subclass_camera_forward.5} parent=0 // pred_check_branch
    %11 = sbr.rel (0) target = $region9
  $region8: #{subclass_camera_forward.5} parent=0 // pred_region
    _
  $region9: #{subclass_camera_forward.5} parent=0 // pred_fallthru
    _
  // Predicated region
  $region10: #{subclass_camera_forward.5} parent=0 // pred_check
    _
  $region11: #{subclass_camera_forward.5} parent=0 // pred_check_branch
    %13 = sbr.rel (0) target = $region13
  $region12: #{subclass_camera_forward.5} parent=0 // pred_region
    _
  $region13: #{subclass_camera_forward.5} parent=0 // pred_fallthru
    _
  %v14 = vld [vmem:[%s1] sm:$0xff]
  %v15 = vld [vmem:[%s1 + $0x8] sm:$0xff]
  %v16 = vld [vmem:[%s1 + $0x10] sm:$0xff]
  %v17 = vld [vmem:[%s1 + $0x18] sm:$0xff]
  %v18 = vld [vmem:[%s1 + $0x20] sm:$0xff]
  %v19 = vld [vmem:[%s1 + $0x28] sm:$0xff]
  %v20 = vld [vmem:[%s1 + $0x30] sm:$0xff]
  %v21 = vld [vmem:[%s1 + $0x38] sm:$0xff]
  %v22 = vld [vmem:[%s0] sm:$0xff]
  %v23 = vld [vmem:[%s0 + $0x8] sm:$0xff]
  %v24 = vld [vmem:[%s0 + $0x10] sm:$0xff]
  %v25 = vld [vmem:[%s0 + $0x18] sm:$0xff]
  %v26 = vld [vmem:[%s0 + $0x20] sm:$0xff]
  %v27 = vld [vmem:[%s0 + $0x28] sm:$0xff]
  %v28 = vld [vmem:[%s0 + $0x30] sm:$0xff]
  %v29 = vld [vmem:[%s0 + $0x38] sm:$0xff]
  %v30 = vld [vmem:[%s2] sm:$0xff]
  %v31 = vld [vmem:[%s2 + $0x8] sm:$0xff]
  %v32 = vld [vmem:[%s2 + $0x10] sm:$0xff]
  %v33 = vld [vmem:[%s2 + $0x18] sm:$0xff]
  %v34 = vld [vmem:[%s2 + $0x20] sm:$0xff]
  %v35 = vld [vmem:[%s2 + $0x28] sm:$0xff]
  %v36 = vld [vmem:[%s2 + $0x30] sm:$0xff]
  %v37 = vld [vmem:[%s2 + $0x38] sm:$0xff]
  %39 = vset.pattern.permute.xlu0 0
  %40 = vperm.xlu0 %39, %v30
  %v41 = vpop.permute.xlu0 %40
  %44 = vset.pattern.permute.xlu0 0
  %45 = vperm.xlu0 %44, %v31
  %v46 = vpop.permute.xlu0 %45
  %49 = vset.pattern.permute.xlu0 0
  %50 = vperm.xlu0 %49, %v32
  %v51 = vpop.permute.xlu0 %50
  %54 = vset.pattern.permute.xlu0 0
  %55 = vperm.xlu0 %54, %v33
  %v56 = vpop.permute.xlu0 %55
  %59 = vset.pattern.permute.xlu0 0
  %60 = vperm.xlu0 %59, %v34
  %v61 = vpop.permute.xlu0 %60
  %64 = vset.pattern.permute.xlu0 0
  %65 = vperm.xlu0 %64, %v35
  %v66 = vpop.permute.xlu0 %65
  %69 = vset.pattern.permute.xlu0 0
  %70 = vperm.xlu0 %69, %v36
  %v71 = vpop.permute.xlu0 %70
  %74 = vset.pattern.permute.xlu0 0
  %75 = vperm.xlu0 %74, %v37
  %v76 = vpop.permute.xlu0 %75
  %vm78 = vcmask 523264
  %v80 = vsel %vm78, %v14, 0
  %v83 = vsel %vm78, %v15, 0
  %v86 = vsel %vm78, %v16, 0
  %v89 = vsel %vm78, %v17, 0
  %v92 = vsel %vm78, %v18, 0
  %v95 = vsel %vm78, %v19, 0
  %v98 = vsel %vm78, %v20, 0
  %v101 = vsel %vm78, %v21, 0
  %103 = vmatprep.subr.mxu0 0.0
  %104 = vmatpush1.msra.mxu0 %v22
  %105 = vmatprep.subr.mxu0 0.0
  %106 = vmatpush1.msra.mxu0 %v23
  %107 = vmatprep.subr.mxu0 0.0
  %108 = vmatpush1.msra.mxu0 %v24
  %109 = vmatprep.subr.mxu0 0.0
  %110 = vmatpush1.msra.mxu0 %v25
  %111 = vmatprep.subr.mxu0 0.0
  %112 = vmatpush1.msra.mxu0 %v26
  %113 = vmatprep.subr.mxu0 0.0
  %114 = vmatpush1.msra.mxu0 %v27
  %115 = vmatprep.subr.mxu0 0.0
  %116 = vmatpush1.msra.mxu0 %v28
  %117 = vmatprep.subr.mxu0 0.0
  %118 = vmatpush1.msra.mxu0 %v29
  %119 = vmatprep.subr.mxu0 0.0
  %120 = vmatpush1.msra.mxu0 0.0
  %121 = vmatprep.subr.mxu0 0.0
  %122 = vmatpush1.msra.mxu0 0.0
  %123 = vmatprep.subr.mxu0 0.0
  %124 = vmatpush1.msra.mxu0 0.0
  %125 = vmatprep.subr.mxu0 0.0
  %126 = vmatpush1.msra.mxu0 0.0
  %127 = vmatprep.subr.mxu0 0.0
  %128 = vmatpush1.msra.mxu0 0.0
  %129 = vmatprep.subr.mxu0 0.0
  %130 = vmatpush1.msra.mxu0 0.0
  %131 = vmatprep.subr.mxu0 0.0
  %132 = vmatpush1.msra.mxu0 0.0
  %133 = vmatprep.subr.mxu0 0.0
  %134 = vmatpush1.msra.mxu0 0.0
  %135 = vmatprep.subr.mxu0 0.0
  %136 = vmatpush1.msra.mxu0 0.0
  %137 = vmatprep.subr.mxu0 0.0
  %138 = vmatpush1.msra.mxu0 0.0
  %139 = vmatprep.subr.mxu0 0.0
  %140 = vmatpush1.msra.mxu0 0.0
  %141 = vmatprep.subr.mxu0 0.0
  %142 = vmatpush1.msra.mxu0 0.0
  %143 = vmatprep.subr.mxu0 0.0
  %144 = vmatpush1.msra.mxu0 0.0
  %145 = vmatprep.subr.mxu0 0.0
  %146 = vmatpush1.msra.mxu0 0.0
  %147 = vmatprep.subr.mxu0 0.0
  %148 = vmatpush1.msra.mxu0 0.0
  %149 = vmatprep.subr.mxu0 0.0
  %150 = vmatpush1.msra.mxu0 0.0
  %151 = vmatprep.subr.mxu0 0.0
  %152 = vmatpush1.msra.mxu0 0.0
  %153 = vmatprep.subr.mxu0 0.0
  %154 = vmatpush1.msra.mxu0 0.0
  %155 = vmatprep.subr.mxu0 0.0
  %156 = vmatpush1.msra.mxu0 0.0
  %157 = vmatprep.subr.mxu0 0.0
  %158 = vmatpush1.msra.mxu0 0.0
  %159 = vmatprep.subr.mxu0 0.0
  %160 = vmatpush1.msra.mxu0 0.0
  %161 = vmatprep.subr.mxu0 0.0
  %162 = vmatpush1.msra.mxu0 0.0
  %163 = vmatprep.subr.mxu0 0.0
  %164 = vmatpush1.msra.mxu0 0.0
  %165 = vmatprep.subr.mxu0 0.0
  %166 = vmatpush1.msra.mxu0 0.0
  %167 = vmatprep.mubr.f32.mxu0 0.0
  %168 = vmatmul.mubr.f32.gmra.mrb[0].mxu0 %v80
  %v169 = vpop.f32.mrb[0].mxu0
  %v170 = vadd.f32 %v41, %v169
  %v171 = vpop.f32.mrb[0].mxu0
  %172 = vmatprep.mubr.f32.mxu0 0.0
  %173 = vmatmul.mubr.f32.gmra.mrb[0].mxu0 %v83
  %v174 = vpop.f32.mrb[0].mxu0
  %v175 = vadd.f32 %v46, %v174
  %v176 = vpop.f32.mrb[0].mxu0
  %177 = vmatprep.mubr.f32.mxu0 0.0
  %178 = vmatmul.mubr.f32.gmra.mrb[0].mxu0 %v86
  %v179 = vpop.f32.mrb[0].mxu0
  %v180 = vadd.f32 %v51, %v179
  %v181 = vpop.f32.mrb[0].mxu0
  %182 = vmatprep.mubr.f32.mxu0 0.0
  %183 = vmatmul.mubr.f32.gmra.mrb[0].mxu0 %v89
  %v184 = vpop.f32.mrb[0].mxu0
  %v185 = vadd.f32 %v56, %v184
  %v186 = vpop.f32.mrb[0].mxu0
  %187 = vmatprep.mubr.f32.mxu0 0.0
  %188 = vmatmul.mubr.f32.gmra.mrb[0].mxu0 %v92
  %v189 = vpop.f32.mrb[0].mxu0
  %v190 = vadd.f32 %v61, %v189
  %v191 = vpop.f32.mrb[0].mxu0
  %192 = vmatprep.mubr.f32.mxu0 0.0
  %193 = vmatmul.mubr.f32.gmra.mrb[0].mxu0 %v95
  %v194 = vpop.f32.mrb[0].mxu0
  %v195 = vadd.f32 %v66, %v194
  %v196 = vpop.f32.mrb[0].mxu0
  %197 = vmatprep.mubr.f32.mxu0 0.0
  %198 = vmatmul.mubr.f32.gmra.mrb[0].mxu0 %v98
  %v199 = vpop.f32.mrb[0].mxu0
  %v200 = vadd.f32 %v71, %v199
  %v201 = vpop.f32.mrb[0].mxu0
  %202 = vmatprep.mubr.f32.mxu0 0.0
  %203 = vmatmul.mubr.f32.gmra.mrb[0].mxu0 %v101
  %v204 = vpop.f32.mrb[0].mxu0
  %v205 = vadd.f32 %v76, %v204
  %v206 = vpop.f32.mrb[0].mxu0
  %207 = vdwg.mxu0
  %208 = vst [vmem:[%s3] sm:$0xff] %v170
  %209 = vst [vmem:[%s3 + $0x8] sm:$0xff] %v175
  %210 = vst [vmem:[%s3 + $0x10] sm:$0xff] %v180
  %211 = vst [vmem:[%s3 + $0x18] sm:$0xff] %v185
  %212 = vst [vmem:[%s3 + $0x20] sm:$0xff] %v190
  %213 = vst [vmem:[%s3 + $0x28] sm:$0xff] %v195
  %214 = vst [vmem:[%s3 + $0x30] sm:$0xff] %v200
  %215 = vst [vmem:[%s3 + $0x38] sm:$0xff] %v205
  // Predicated region
  $region14: #{subclass_camera_forward.5} parent=0 // pred_check
    _
  $region15: #{subclass_camera_forward.5} parent=0 // pred_check_branch
    %217 = sbr.rel (0) target = $region17
  $region16: #{subclass_camera_forward.5} parent=0 // pred_region
    _
  $region17: #{subclass_camera_forward.5} parent=0 // pred_fallthru
    _
  // Predicated region
  $region18: #{subclass_camera_forward.5} parent=0 // pred_check
    _
  $region19: #{subclass_camera_forward.5} parent=0 // pred_check_branch
    %219 = sbr.rel (0) target = $region21
  $region20: #{subclass_camera_forward.5} parent=0 // pred_region
    _
  $region21: #{subclass_camera_forward.5} parent=0 // pred_fallthru
    _

</llo_original>
